<compile_context>
chip_gen: v6e
topology: v6e:2x2x1
jax: 0.10.0
libtpu: 0.0.40
codegen_flags: <defaults>
</compile_context>

<pallas_src>
import math

import jax
import jax.numpy as jnp
from jax import lax
from jax.experimental import pallas as pl
from jax.experimental.pallas import tpu as pltpu


# ----------------------------------------------------------------------------
# Model config (synthetic, deterministic)
# ----------------------------------------------------------------------------
ENCODER_BLOCKS = ((4, 8), (8, 16), (16, 32))
DECODER_BLOCKS = ((32, 32), (48, 16), (24, 8))
OUT_CHANNELS = 3
OUT_CHANNELS_PADDED = 8      # pad out-conv Cout 3 -> 8 (sublane granule), slice after
IN_CHANNELS_PADDED = 8       # pad input Cin 4 -> 8 with zero channels/weights
H0 = 16
W0 = 16

# Fixed operand order of the single fused pallas_call (after the activation x).
PARAM_ORDER = (
    "enc0_w1", "enc0_b1", "enc0_w2", "enc0_b2",
    "down0_w1", "down0_b1", "down0_w2", "down0_b2",
    "down1_w1", "down1_b1", "down1_w2", "down1_b2",
    "up0_w1x", "up0_w1h", "up0_b1", "up0_w2", "up0_b2",
    "up1_w1x", "up1_w1h", "up1_b1", "up1_w2", "up1_b2",
    "out_w", "out_b",
    "pool16", "pool8", "up4", "up8",
)


# ----------------------------------------------------------------------------
# In-kernel helpers (traced inside the single fused kernel body)
# ----------------------------------------------------------------------------
def _make_masks(H, W):
    """Boundary masks for the 9 conv taps at one resolution (built ONCE, reused
    by every conv / input at that resolution)."""
    HW = H * W
    pos = lax.broadcasted_iota(jnp.int32, (1, HW), 1)
    colp = pos % W                      # W is a power of two -> bitwise AND
    masks = {}
    for dy in (-1, 0, 1):
        for dx in (-1, 0, 1):
            m = None
            if dy == -1:
                m = pos >= W                      # row >= 1
            elif dy == 1:
                m = pos < HW - W                  # row <= H-2
            if dx == -1:
                cm = colp >= 1
                m = cm if m is None else jnp.logical_and(m, cm)
            elif dx == 1:
                cm = colp <= W - 2
                m = cm if m is None else jnp.logical_and(m, cm)
            masks[(dy, dx)] = m
    return masks


def _conv3x3(xs, w_refs, b_ref, masks, H, W, relu):
    """3x3 conv, padding=1 (nn.Conv2d cross-correlation), ONE MXU dot per input.

    xs:     list of f32 values (C_j, H*W)      -- >1 entry = virtual decoder concat
    w_refs: list of bf16 refs  (Cout, 9*C_j)   -- tap-major packed weights
    b_ref:  f32 ref (Cout, 1)
    Returns f32 (Cout, H*W).
    """
    HW = H * W
    acc = None
    for x, w_ref in zip(xs, w_refs):
        taps = []
        for dy in (-1, 0, 1):
            for dx in (-1, 0, 1):
                k = dy * W + dx                   # flattened offset of this tap
                # shifted[p] = x[p + k] -> jnp.roll convention: shift = -k
                s = x if k == 0 else pltpu.roll(x, shift=(-k) % HW, axis=1)
                m = masks[(dy, dx)]
                if m is not None:                 # zero-padding mask (also kills wrap)
                    s = jnp.where(m, s, 0.0)
                taps.append(s)
        # stack taps along the contraction axis -> (9*Cin, HW); one bf16 cast.
        stacked = jnp.concatenate(taps, axis=0).astype(jnp.bfloat16)
        d = jnp.dot(w_ref[...], stacked, preferred_element_type=jnp.float32)
        acc = d if acc is None else acc + d
    acc = acc + b_ref[...]
    if relu:
        acc = jnp.maximum(acc, 0.0)
    return acc


def _maxpool2(x, H, W, pmat_ref):
    """2x2 maxpool on channel-major flattened (C, H*W): 2 rolls + maxes, then an
    exact {0,1} selection matmul compacts the (even row, even col) positions."""
    HW = H * W
    m1 = jnp.maximum(x, pltpu.roll(x, shift=HW - 1, axis=1))    # max with right neighbor
    m2 = jnp.maximum(m1, pltpu.roll(m1, shift=HW - W, axis=1))  # max with row below
    return jnp.dot(m2.astype(jnp.bfloat16), pmat_ref[...],
                   preferred_element_type=jnp.float32)          # (C, HW/4)


def _upsample2(x, umat_ref):
    """Nearest-neighbor 2x upsample via an exact {0,1} expansion matmul."""
    return jnp.dot(x.astype(jnp.bfloat16), umat_ref[...],
                   preferred_element_type=jnp.float32)          # (C, 4*HW)


def unet_kernel(x_ref, *refs):
    prm = {name: refs[i] for i, name in enumerate(PARAM_ORDER)}
    o_ref = refs[len(PARAM_ORDER)]

    # Masks built once per resolution, reused by every conv at that resolution.
    masks16 = _make_masks(H0, W0)
    masks8 = _make_masks(H0 // 2, W0 // 2)
    masks4 = _make_masks(H0 // 4, W0 // 4)

    x = x_ref[...]                                              # (8, 256) f32

    # ---- Encoder: InitBlock (double conv) ----
    x = _conv3x3([x], [prm["enc0_w1"]], prm["enc0_b1"], masks16, H0, W0, True)
    x = _conv3x3([x], [prm["enc0_w2"]], prm["enc0_b2"], masks16, H0, W0, True)
    h0 = x                                                      # skip (8, 256)

    # ---- Encoder: DownsampleBlock 0 (pool + double conv) ----
    x = _maxpool2(x, H0, W0, prm["pool16"])                     # (8, 64)
    x = _conv3x3([x], [prm["down0_w1"]], prm["down0_b1"], masks8, H0 // 2, W0 // 2, True)
    x = _conv3x3([x], [prm["down0_w2"]], prm["down0_b2"], masks8, H0 // 2, W0 // 2, True)
    h1 = x                                                      # skip (16, 64)

    # ---- Encoder: DownsampleBlock 1 ----
    x = _maxpool2(x, H0 // 2, W0 // 2, prm["pool8"])            # (16, 16)
    x = _conv3x3([x], [prm["down1_w1"]], prm["down1_b1"], masks4, H0 // 4, W0 // 4, True)
    x = _conv3x3([x], [prm["down1_w2"]], prm["down1_b2"], masks4, H0 // 4, W0 // 4, True)
    # bottleneck (32, 16)

    # ---- Decoder: UpsampleBlock 0 (concat_hidden via split-K) ----
    x = _upsample2(x, prm["up4"])                               # (32, 64)
    # center_pad(h, x.shape[2:]) is the identity at these power-of-two sizes.
    x = _conv3x3([x, h1], [prm["up0_w1x"], prm["up0_w1h"]], prm["up0_b1"],
                 masks8, H0 // 2, W0 // 2, True)
    x = _conv3x3([x], [prm["up0_w2"]], prm["up0_b2"], masks8, H0 // 2, W0 // 2, True)

    # ---- Decoder: UpsampleBlock 1 ----
    x = _upsample2(x, prm["up8"])                               # (16, 256)
    x = _conv3x3([x, h0], [prm["up1_w1x"], prm["up1_w1h"]], prm["up1_b1"],
                 masks16, H0, W0, True)
    x = _conv3x3([x], [prm["up1_w2"]], prm["up1_b2"], masks16, H0, W0, True)

    # ---- Decoder out_block: 3x3 conv, no activation (Cout padded 3 -> 8) ----
    x = _conv3x3([x], [prm["out_w"]], prm["out_b"], masks16, H0, W0, False)
    o_ref[...] = x.astype(o_ref.dtype)                          # lane-dense (8, 256)


# ----------------------------------------------------------------------------
# Host-side parameter packing (deterministic synthetic init)
# ----------------------------------------------------------------------------
def _init_conv_hwio(key, cin, cout):
    kw, kb = jax.random.split(key)
    fan_in = 9 * cin
    w = jax.random.normal(kw, (3, 3, cin, cout), jnp.float32) / math.sqrt(fan_in)
    b = jax.random.normal(kb, (cout,), jnp.float32) * 0.01
    return w, b


def _pack_w(w_hwio):
    # HWIO (3,3,Cin,Cout) -> (Cout, 9*Cin) bf16, index [o, t*Cin + c] with t = ky*3+kx.
    kh, kw, cin, cout = w_hwio.shape
    return jnp.transpose(w_hwio, (3, 0, 1, 2)).reshape(cout, kh * kw * cin).astype(jnp.bfloat16)


def _pack_b(b):
    return b.reshape(-1, 1).astype(jnp.float32)


def _pool_matrix(H, W):
    # (H*W, (H/2)*(W/2)) selection: output position r*(W/2)+c picks flat input (2r)*W+2c.
    HW, HWo = H * W, (H // 2) * (W // 2)
    rows = jnp.arange(HWo)
    r, c = rows // (W // 2), rows % (W // 2)
    src = (2 * r) * W + 2 * c
    return jnp.zeros((HW, HWo), jnp.float32).at[src, rows].set(1.0).astype(jnp.bfloat16)


def _upsample_matrix(H, W):
    # (H*W, (2H)*(2W)) nearest expansion: output (R, C) sourced from input (R//2, C//2).
    HW, HWo = H * W, 4 * H * W
    cols = jnp.arange(HWo)
    R, C = cols // (2 * W), cols % (2 * W)
    src = (R // 2) * W + (C // 2)
    return jnp.zeros((HW, HWo), jnp.float32).at[src, cols].set(1.0).astype(jnp.bfloat16)


def init_params(key):
    params = {}
    keys = iter(jax.random.split(key, 16))

    # Encoder InitBlock: double conv (4 -> 8 -> 8); Cin padded 4 -> 8 with zero weights.
    cin, cout = ENCODER_BLOCKS[0]
    w, b = _init_conv_hwio(next(keys), cin, cout)
    w = jnp.pad(w, ((0, 0), (0, 0), (0, IN_CHANNELS_PADDED - cin), (0, 0)))
    params["enc0_w1"], params["enc0_b1"] = _pack_w(w), _pack_b(b)
    w, b = _init_conv_hwio(next(keys), cout, cout)
    params["enc0_w2"], params["enc0_b2"] = _pack_w(w), _pack_b(b)

    # Encoder DownsampleBlocks: (maxpool +) double conv.
    for i, (cin, cout) in enumerate(ENCODER_BLOCKS[1:]):
        w, b = _init_conv_hwio(next(keys), cin, cout)
        params[f"down{i}_w1"], params[f"down{i}_b1"] = _pack_w(w), _pack_b(b)
        w, b = _init_conv_hwio(next(keys), cout, cout)
        params[f"down{i}_w2"], params[f"down{i}_b2"] = _pack_w(w), _pack_b(b)

    # Decoder UpsampleBlocks: first conv split along Cin (torch.cat([x, h]) order)
    # so the concat is never materialized.
    skip_ch = [c_out for (_c, c_out) in ENCODER_BLOCKS[:-1]]        # [8, 16]
    for i, (cin, cout) in enumerate(DECODER_BLOCKS[1:]):
        ch = list(reversed(skip_ch))[i]
        cx = cin - ch
        w, b = _init_conv_hwio(next(keys), cin, cout)
        params[f"up{i}_w1x"] = _pack_w(w[:, :, :cx, :])             # x_upsampled part
        params[f"up{i}_w1h"] = _pack_w(w[:, :, cx:, :])             # skip part
        params[f"up{i}_b1"] = _pack_b(b)
        w, b = _init_conv_hwio(next(keys), cout, cout)
        params[f"up{i}_w2"], params[f"up{i}_b2"] = _pack_w(w), _pack_b(b)

    # Decoder out_block: Conv2d(8 -> 3, k=3, pad=1); Cout padded 3 -> 8 with zeros.
    w, b = _init_conv_hwio(next(keys), DECODER_BLOCKS[-1][-1], OUT_CHANNELS)
    w = jnp.pad(w, ((0, 0), (0, 0), (0, 0), (0, OUT_CHANNELS_PADDED - OUT_CHANNELS)))
    b = jnp.pad(b, (0, OUT_CHANNELS_PADDED - OUT_CHANNELS))
    params["out_w"], params["out_b"] = _pack_w(w), _pack_b(b)

    # Exact {0,1} resize operators (bf16) used by the in-kernel pool / upsample.
    params["pool16"] = _pool_matrix(H0, W0)
    params["pool8"] = _pool_matrix(H0 // 2, W0 // 2)
    params["up4"] = _upsample_matrix(H0 // 4, W0 // 4)
    params["up8"] = _upsample_matrix(H0 // 2, W0 // 2)
    return params


# ----------------------------------------------------------------------------
# Forward pass: boundary reshapes + ONE pallas_call
# ----------------------------------------------------------------------------
def unet_forward(x, params):
    # x: (B, 1, C_in, H, W) float32 (PyTorch layout)
    B = x.shape[0]
    H, W = x.shape[-2], x.shape[-1]
    assert (H, W) == (H0, W0), (H, W)
    x = jnp.squeeze(x, axis=1)                                   # (B, C, H, W)
    cin = x.shape[1]
    if cin < IN_CHANNELS_PADDED:                                 # zero channel padding
        x = jnp.pad(x, ((0, 0), (0, IN_CHANNELS_PADDED - cin), (0, 0), (0, 0)))
    x = x.reshape(B, IN_CHANNELS_PADDED, H * W).astype(jnp.float32)

    operands = [x] + [params[name] for name in PARAM_ORDER]
    in_specs = [pl.BlockSpec((None, IN_CHANNELS_PADDED, H * W), lambda b: (b, 0, 0))]
    for name in PARAM_ORDER:
        # all params are 2-D; constant index map -> DMA'd once, no re-fetch per step
        in_specs.append(pl.BlockSpec(params[name].shape, lambda b: (0, 0)))

    out = pl.pallas_call(
        unet_kernel,
        out_shape=jax.ShapeDtypeStruct((B, OUT_CHANNELS_PADDED, H * W), jnp.float32),
        grid=(B,),
        in_specs=in_specs,
        out_specs=pl.BlockSpec((None, OUT_CHANNELS_PADDED, H * W), lambda b: (b, 0, 0)),
        compiler_params=pltpu.CompilerParams(dimension_semantics=("parallel",)),
    )(*operands)

    out = out[:, :OUT_CHANNELS, :]                               # drop padded channels
    out = out.reshape(B, OUT_CHANNELS, H, W)
    return out[:, None]                                          # (B, 1, C_out, H, W)


# ----------------------------------------------------------------------------
if __name__ == "__main__":
    key = jax.random.PRNGKey(0)
    kx, kp = jax.random.split(key)

    B, C_in, H, W = 2, 4, 16, 16
    x = jax.random.normal(kx, (B, 1, C_in, H, W), jnp.float32)
    params = init_params(kp)

    y = jax.jit(unet_forward)(x, params)
    y = jax.block_until_ready(y)

    assert y.shape == (B, 1, OUT_CHANNELS, H, W), y.shape
    assert bool(jnp.all(jnp.isfinite(y)))
    print("KERNEL_OK")
</pallas_src>

<mosaic_0001>
module attributes {stable_mosaic.version = 11 : i64} {
  func.func @unet_kernel(%arg0: i32, %arg1: memref<1x8x256xf32, #tpu.memory_space<vmem>>, %arg2: memref<8x72xbf16, #tpu.memory_space<vmem>>, %arg3: memref<8x1xf32, #tpu.memory_space<vmem>>, %arg4: memref<8x72xbf16, #tpu.memory_space<vmem>>, %arg5: memref<8x1xf32, #tpu.memory_space<vmem>>, %arg6: memref<16x72xbf16, #tpu.memory_space<vmem>>, %arg7: memref<16x1xf32, #tpu.memory_space<vmem>>, %arg8: memref<16x144xbf16, #tpu.memory_space<vmem>>, %arg9: memref<16x1xf32, #tpu.memory_space<vmem>>, %arg10: memref<32x144xbf16, #tpu.memory_space<vmem>>, %arg11: memref<32x1xf32, #tpu.memory_space<vmem>>, %arg12: memref<32x288xbf16, #tpu.memory_space<vmem>>, %arg13: memref<32x1xf32, #tpu.memory_space<vmem>>, %arg14: memref<16x288xbf16, #tpu.memory_space<vmem>>, %arg15: memref<16x144xbf16, #tpu.memory_space<vmem>>, %arg16: memref<16x1xf32, #tpu.memory_space<vmem>>, %arg17: memref<16x144xbf16, #tpu.memory_space<vmem>>, %arg18: memref<16x1xf32, #tpu.memory_space<vmem>>, %arg19: memref<8x144xbf16, #tpu.memory_space<vmem>>, %arg20: memref<8x72xbf16, #tpu.memory_space<vmem>>, %arg21: memref<8x1xf32, #tpu.memory_space<vmem>>, %arg22: memref<8x72xbf16, #tpu.memory_space<vmem>>, %arg23: memref<8x1xf32, #tpu.memory_space<vmem>>, %arg24: memref<8x72xbf16, #tpu.memory_space<vmem>>, %arg25: memref<8x1xf32, #tpu.memory_space<vmem>>, %arg26: memref<256x64xbf16, #tpu.memory_space<vmem>>, %arg27: memref<64x16xbf16, #tpu.memory_space<vmem>>, %arg28: memref<16x64xbf16, #tpu.memory_space<vmem>>, %arg29: memref<64x256xbf16, #tpu.memory_space<vmem>>, %arg30: memref<1x8x256xf32, #tpu.memory_space<vmem>>) attributes {dimension_semantics = [#tpu.dimension_semantics<parallel>], iteration_bounds = array<i64: 2>, scalar_prefetch = 0 : i64, scratch_operands = 0 : i64, tpu.core_type = #tpu.core_type<tc>, window_params = [{transform_indices = @transform_0, window_bounds = array<i64: 1, 8, 256>}, {pipeline_mode = #tpu.pipeline_mode<synchronous>, transform_indices = @transform_1, window_bounds = array<i64: 8, 72>}, {pipeline_mode = #tpu.pipeline_mode<synchronous>, transform_indices = @transform_2, window_bounds = array<i64: 8, 1>}, {pipeline_mode = #tpu.pipeline_mode<synchronous>, transform_indices = @transform_3, window_bounds = array<i64: 8, 72>}, {pipeline_mode = #tpu.pipeline_mode<synchronous>, transform_indices = @transform_4, window_bounds = array<i64: 8, 1>}, {pipeline_mode = #tpu.pipeline_mode<synchronous>, transform_indices = @transform_5, window_bounds = array<i64: 16, 72>}, {pipeline_mode = #tpu.pipeline_mode<synchronous>, transform_indices = @transform_6, window_bounds = array<i64: 16, 1>}, {pipeline_mode = #tpu.pipeline_mode<synchronous>, transform_indices = @transform_7, window_bounds = array<i64: 16, 144>}, {pipeline_mode = #tpu.pipeline_mode<synchronous>, transform_indices = @transform_8, window_bounds = array<i64: 16, 1>}, {pipeline_mode = #tpu.pipeline_mode<synchronous>, transform_indices = @transform_9, window_bounds = array<i64: 32, 144>}, {pipeline_mode = #tpu.pipeline_mode<synchronous>, transform_indices = @transform_10, window_bounds = array<i64: 32, 1>}, {pipeline_mode = #tpu.pipeline_mode<synchronous>, transform_indices = @transform_11, window_bounds = array<i64: 32, 288>}, {pipeline_mode = #tpu.pipeline_mode<synchronous>, transform_indices = @transform_12, window_bounds = array<i64: 32, 1>}, {pipeline_mode = #tpu.pipeline_mode<synchronous>, transform_indices = @transform_13, window_bounds = array<i64: 16, 288>}, {pipeline_mode = #tpu.pipeline_mode<synchronous>, transform_indices = @transform_14, window_bounds = array<i64: 16, 144>}, {pipeline_mode = #tpu.pipeline_mode<synchronous>, transform_indices = @transform_15, window_bounds = array<i64: 16, 1>}, {pipeline_mode = #tpu.pipeline_mode<synchronous>, transform_indices = @transform_16, window_bounds = array<i64: 16, 144>}, {pipeline_mode = #tpu.pipeline_mode<synchronous>, transform_indices = @transform_17, window_bounds = array<i64: 16, 1>}, {pipeline_mode = #tpu.pipeline_mode<synchronous>, transform_indices = @transform_18, window_bounds = array<i64: 8, 144>}, {pipeline_mode = #tpu.pipeline_mode<synchronous>, transform_indices = @transform_19, window_bounds = array<i64: 8, 72>}, {pipeline_mode = #tpu.pipeline_mode<synchronous>, transform_indices = @transform_20, window_bounds = array<i64: 8, 1>}, {pipeline_mode = #tpu.pipeline_mode<synchronous>, transform_indices = @transform_21, window_bounds = array<i64: 8, 72>}, {pipeline_mode = #tpu.pipeline_mode<synchronous>, transform_indices = @transform_22, window_bounds = array<i64: 8, 1>}, {pipeline_mode = #tpu.pipeline_mode<synchronous>, transform_indices = @transform_23, window_bounds = array<i64: 8, 72>}, {pipeline_mode = #tpu.pipeline_mode<synchronous>, transform_indices = @transform_24, window_bounds = array<i64: 8, 1>}, {pipeline_mode = #tpu.pipeline_mode<synchronous>, transform_indices = @transform_25, window_bounds = array<i64: 256, 64>}, {pipeline_mode = #tpu.pipeline_mode<synchronous>, transform_indices = @transform_26, window_bounds = array<i64: 64, 16>}, {pipeline_mode = #tpu.pipeline_mode<synchronous>, transform_indices = @transform_27, window_bounds = array<i64: 16, 64>}, {pipeline_mode = #tpu.pipeline_mode<synchronous>, transform_indices = @transform_28, window_bounds = array<i64: 64, 256>}, {transform_indices = @transform_29, window_bounds = array<i64: 1, 8, 256>}]} {
    %0 = tpu.iota {dimensions = array<i32: 1>} : vector<1x256xi32>
    %c16_i32 = arith.constant 16 : i32
    %c0_i32 = arith.constant 0 : i32
    %1 = arith.cmpi eq, %c16_i32, %c0_i32 : i32
    %c1_i32 = arith.constant 1 : i32
    %2 = arith.select %1, %c1_i32, %c16_i32 : i32
    %3 = vector.broadcast %2 : i32 to vector<1x256xi32>
    %4 = arith.remsi %0, %3 : vector<1x256xi32>
    %c0_i32_0 = arith.constant 0 : i32
    %5 = vector.broadcast %c0_i32_0 : i32 to vector<1x256xi32>
    %6 = arith.cmpi ne, %4, %5 : vector<1x256xi32>
    %c0_i32_1 = arith.constant 0 : i32
    %7 = vector.broadcast %c0_i32_1 : i32 to vector<1x256xi32>
    %8 = arith.cmpi slt, %4, %7 : vector<1x256xi32>
    %c0_i32_2 = arith.constant 0 : i32
    %9 = arith.cmpi slt, %2, %c0_i32_2 : i32
    %10 = vector.broadcast %9 : i1 to vector<1x256xi1>
    %11 = vector.broadcast %10 : vector<1x256xi1> to vector<1x256xi1>
    %12 = arith.xori %8, %11 : vector<1x256xi1>
    %13 = arith.andi %12, %6 : vector<1x256xi1>
    %14 = vector.broadcast %2 : i32 to vector<1x256xi32>
    %15 = arith.addi %4, %14 : vector<1x256xi32>
    %16 = arith.select %13, %15, %4 : vector<1x256xi1>, vector<1x256xi32>
    %c16_i32_3 = arith.constant 16 : i32
    %17 = vector.broadcast %c16_i32_3 : i32 to vector<1x256xi32>
    %18 = arith.cmpi sge, %0, %17 : vector<1x256xi32>
    %c1_i32_4 = arith.constant 1 : i32
    %19 = vector.broadcast %c1_i32_4 : i32 to vector<1x256xi32>
    %20 = arith.cmpi sge, %16, %19 : vector<1x256xi32>
    %21 = arith.andi %18, %20 : vector<1x256xi1>
    %c16_i32_5 = arith.constant 16 : i32
    %22 = vector.broadcast %c16_i32_5 : i32 to vector<1x256xi32>
    %23 = arith.cmpi sge, %0, %22 : vector<1x256xi32>
    %c16_i32_6 = arith.constant 16 : i32
    %24 = vector.broadcast %c16_i32_6 : i32 to vector<1x256xi32>
    %25 = arith.cmpi sge, %0, %24 : vector<1x256xi32>
    %c14_i32 = arith.constant 14 : i32
    %26 = vector.broadcast %c14_i32 : i32 to vector<1x256xi32>
    %27 = arith.cmpi sle, %16, %26 : vector<1x256xi32>
    %28 = arith.andi %25, %27 : vector<1x256xi1>
    %c1_i32_7 = arith.constant 1 : i32
    %29 = vector.broadcast %c1_i32_7 : i32 to vector<1x256xi32>
    %30 = arith.cmpi sge, %16, %29 : vector<1x256xi32>
    %c14_i32_8 = arith.constant 14 : i32
    %31 = vector.broadcast %c14_i32_8 : i32 to vector<1x256xi32>
    %32 = arith.cmpi sle, %16, %31 : vector<1x256xi32>
    %c240_i32 = arith.constant 240 : i32
    %33 = vector.broadcast %c240_i32 : i32 to vector<1x256xi32>
    %34 = arith.cmpi slt, %0, %33 : vector<1x256xi32>
    %c1_i32_9 = arith.constant 1 : i32
    %35 = vector.broadcast %c1_i32_9 : i32 to vector<1x256xi32>
    %36 = arith.cmpi sge, %16, %35 : vector<1x256xi32>
    %37 = arith.andi %34, %36 : vector<1x256xi1>
    %c240_i32_10 = arith.constant 240 : i32
    %38 = vector.broadcast %c240_i32_10 : i32 to vector<1x256xi32>
    %39 = arith.cmpi slt, %0, %38 : vector<1x256xi32>
    %c240_i32_11 = arith.constant 240 : i32
    %40 = vector.broadcast %c240_i32_11 : i32 to vector<1x256xi32>
    %41 = arith.cmpi slt, %0, %40 : vector<1x256xi32>
    %c14_i32_12 = arith.constant 14 : i32
    %42 = vector.broadcast %c14_i32_12 : i32 to vector<1x256xi32>
    %43 = arith.cmpi sle, %16, %42 : vector<1x256xi32>
    %44 = arith.andi %41, %43 : vector<1x256xi1>
    %45 = tpu.iota {dimensions = array<i32: 1>} : vector<1x64xi32>
    %c8_i32 = arith.constant 8 : i32
    %c0_i32_13 = arith.constant 0 : i32
    %46 = arith.cmpi eq, %c8_i32, %c0_i32_13 : i32
    %c1_i32_14 = arith.constant 1 : i32
    %47 = arith.select %46, %c1_i32_14, %c8_i32 : i32
    %48 = vector.broadcast %47 : i32 to vector<1x64xi32>
    %49 = arith.remsi %45, %48 : vector<1x64xi32>
    %c0_i32_15 = arith.constant 0 : i32
    %50 = vector.broadcast %c0_i32_15 : i32 to vector<1x64xi32>
    %51 = arith.cmpi ne, %49, %50 : vector<1x64xi32>
    %c0_i32_16 = arith.constant 0 : i32
    %52 = vector.broadcast %c0_i32_16 : i32 to vector<1x64xi32>
    %53 = arith.cmpi slt, %49, %52 : vector<1x64xi32>
    %c0_i32_17 = arith.constant 0 : i32
    %54 = arith.cmpi slt, %47, %c0_i32_17 : i32
    %55 = vector.broadcast %54 : i1 to vector<1x64xi1>
    %56 = vector.broadcast %55 : vector<1x64xi1> to vector<1x64xi1>
    %57 = arith.xori %53, %56 : vector<1x64xi1>
    %58 = arith.andi %57, %51 : vector<1x64xi1>
    %59 = vector.broadcast %47 : i32 to vector<1x64xi32>
    %60 = arith.addi %49, %59 : vector<1x64xi32>
    %61 = arith.select %58, %60, %49 : vector<1x64xi1>, vector<1x64xi32>
    %c8_i32_18 = arith.constant 8 : i32
    %62 = vector.broadcast %c8_i32_18 : i32 to vector<1x64xi32>
    %63 = arith.cmpi sge, %45, %62 : vector<1x64xi32>
    %c1_i32_19 = arith.constant 1 : i32
    %64 = vector.broadcast %c1_i32_19 : i32 to vector<1x64xi32>
    %65 = arith.cmpi sge, %61, %64 : vector<1x64xi32>
    %66 = arith.andi %63, %65 : vector<1x64xi1>
    %c8_i32_20 = arith.constant 8 : i32
    %67 = vector.broadcast %c8_i32_20 : i32 to vector<1x64xi32>
    %68 = arith.cmpi sge, %45, %67 : vector<1x64xi32>
    %c8_i32_21 = arith.constant 8 : i32
    %69 = vector.broadcast %c8_i32_21 : i32 to vector<1x64xi32>
    %70 = arith.cmpi sge, %45, %69 : vector<1x64xi32>
    %c6_i32 = arith.constant 6 : i32
    %71 = vector.broadcast %c6_i32 : i32 to vector<1x64xi32>
    %72 = arith.cmpi sle, %61, %71 : vector<1x64xi32>
    %73 = arith.andi %70, %72 : vector<1x64xi1>
    %c1_i32_22 = arith.constant 1 : i32
    %74 = vector.broadcast %c1_i32_22 : i32 to vector<1x64xi32>
    %75 = arith.cmpi sge, %61, %74 : vector<1x64xi32>
    %c6_i32_23 = arith.constant 6 : i32
    %76 = vector.broadcast %c6_i32_23 : i32 to vector<1x64xi32>
    %77 = arith.cmpi sle, %61, %76 : vector<1x64xi32>
    %c56_i32 = arith.constant 56 : i32
    %78 = vector.broadcast %c56_i32 : i32 to vector<1x64xi32>
    %79 = arith.cmpi slt, %45, %78 : vector<1x64xi32>
    %c1_i32_24 = arith.constant 1 : i32
    %80 = vector.broadcast %c1_i32_24 : i32 to vector<1x64xi32>
    %81 = arith.cmpi sge, %61, %80 : vector<1x64xi32>
    %82 = arith.andi %79, %81 : vector<1x64xi1>
    %c56_i32_25 = arith.constant 56 : i32
    %83 = vector.broadcast %c56_i32_25 : i32 to vector<1x64xi32>
    %84 = arith.cmpi slt, %45, %83 : vector<1x64xi32>
    %c56_i32_26 = arith.constant 56 : i32
    %85 = vector.broadcast %c56_i32_26 : i32 to vector<1x64xi32>
    %86 = arith.cmpi slt, %45, %85 : vector<1x64xi32>
    %c6_i32_27 = arith.constant 6 : i32
    %87 = vector.broadcast %c6_i32_27 : i32 to vector<1x64xi32>
    %88 = arith.cmpi sle, %61, %87 : vector<1x64xi32>
    %89 = arith.andi %86, %88 : vector<1x64xi1>
    %90 = tpu.iota {dimensions = array<i32: 1>} : vector<1x16xi32>
    %c4_i32 = arith.constant 4 : i32
    %c0_i32_28 = arith.constant 0 : i32
    %91 = arith.cmpi eq, %c4_i32, %c0_i32_28 : i32
    %c1_i32_29 = arith.constant 1 : i32
    %92 = arith.select %91, %c1_i32_29, %c4_i32 : i32
    %93 = vector.broadcast %92 : i32 to vector<1x16xi32>
    %94 = arith.remsi %90, %93 : vector<1x16xi32>
    %c0_i32_30 = arith.constant 0 : i32
    %95 = vector.broadcast %c0_i32_30 : i32 to vector<1x16xi32>
    %96 = arith.cmpi ne, %94, %95 : vector<1x16xi32>
    %c0_i32_31 = arith.constant 0 : i32
    %97 = vector.broadcast %c0_i32_31 : i32 to vector<1x16xi32>
    %98 = arith.cmpi slt, %94, %97 : vector<1x16xi32>
    %c0_i32_32 = arith.constant 0 : i32
    %99 = arith.cmpi slt, %92, %c0_i32_32 : i32
    %100 = vector.broadcast %99 : i1 to vector<1x16xi1>
    %101 = vector.broadcast %100 : vector<1x16xi1> to vector<1x16xi1>
    %102 = arith.xori %98, %101 : vector<1x16xi1>
    %103 = arith.andi %102, %96 : vector<1x16xi1>
    %104 = vector.broadcast %92 : i32 to vector<1x16xi32>
    %105 = arith.addi %94, %104 : vector<1x16xi32>
    %106 = arith.select %103, %105, %94 : vector<1x16xi1>, vector<1x16xi32>
    %c4_i32_33 = arith.constant 4 : i32
    %107 = vector.broadcast %c4_i32_33 : i32 to vector<1x16xi32>
    %108 = arith.cmpi sge, %90, %107 : vector<1x16xi32>
    %c1_i32_34 = arith.constant 1 : i32
    %109 = vector.broadcast %c1_i32_34 : i32 to vector<1x16xi32>
    %110 = arith.cmpi sge, %106, %109 : vector<1x16xi32>
    %111 = arith.andi %108, %110 : vector<1x16xi1>
    %c4_i32_35 = arith.constant 4 : i32
    %112 = vector.broadcast %c4_i32_35 : i32 to vector<1x16xi32>
    %113 = arith.cmpi sge, %90, %112 : vector<1x16xi32>
    %c4_i32_36 = arith.constant 4 : i32
    %114 = vector.broadcast %c4_i32_36 : i32 to vector<1x16xi32>
    %115 = arith.cmpi sge, %90, %114 : vector<1x16xi32>
    %c2_i32 = arith.constant 2 : i32
    %116 = vector.broadcast %c2_i32 : i32 to vector<1x16xi32>
    %117 = arith.cmpi sle, %106, %116 : vector<1x16xi32>
    %118 = arith.andi %115, %117 : vector<1x16xi1>
    %c1_i32_37 = arith.constant 1 : i32
    %119 = vector.broadcast %c1_i32_37 : i32 to vector<1x16xi32>
    %120 = arith.cmpi sge, %106, %119 : vector<1x16xi32>
    %c2_i32_38 = arith.constant 2 : i32
    %121 = vector.broadcast %c2_i32_38 : i32 to vector<1x16xi32>
    %122 = arith.cmpi sle, %106, %121 : vector<1x16xi32>
    %c12_i32 = arith.constant 12 : i32
    %123 = vector.broadcast %c12_i32 : i32 to vector<1x16xi32>
    %124 = arith.cmpi slt, %90, %123 : vector<1x16xi32>
    %c1_i32_39 = arith.constant 1 : i32
    %125 = vector.broadcast %c1_i32_39 : i32 to vector<1x16xi32>
    %126 = arith.cmpi sge, %106, %125 : vector<1x16xi32>
    %127 = arith.andi %124, %126 : vector<1x16xi1>
    %c12_i32_40 = arith.constant 12 : i32
    %128 = vector.broadcast %c12_i32_40 : i32 to vector<1x16xi32>
    %129 = arith.cmpi slt, %90, %128 : vector<1x16xi32>
    %c12_i32_41 = arith.constant 12 : i32
    %130 = vector.broadcast %c12_i32_41 : i32 to vector<1x16xi32>
    %131 = arith.cmpi slt, %90, %130 : vector<1x16xi32>
    %c2_i32_42 = arith.constant 2 : i32
    %132 = vector.broadcast %c2_i32_42 : i32 to vector<1x16xi32>
    %133 = arith.cmpi sle, %106, %132 : vector<1x16xi32>
    %134 = arith.andi %131, %133 : vector<1x16xi1>
    %c0 = arith.constant 0 : index
    %c0_43 = arith.constant 0 : index
    %c0_44 = arith.constant 0 : index
    %135 = vector.load %arg1[%c0, %c0_43, %c0_44] : memref<1x8x256xf32, #tpu.memory_space<vmem>>, vector<1x8x256xf32>
    %136 = vector.shape_cast %135 : vector<1x8x256xf32> to vector<8x256xf32>
    %c17_i32 = arith.constant 17 : i32
    %137 = tpu.dynamic_rotate %136 by %c17_i32 dim 1 : vector<8x256xf32>, i32 -> vector<8x256xf32>
    %cst = arith.constant 0.000000e+00 : f32
    %138 = vector.shape_cast %21 : vector<1x256xi1> to vector<1x256xi1>
    %139 = vector.broadcast %138 : vector<1x256xi1> to vector<8x256xi1>
    %140 = vector.broadcast %cst : f32 to vector<8x256xf32>
    %141 = arith.select %139, %137, %140 : vector<8x256xi1>, vector<8x256xf32>
    %c16_i32_45 = arith.constant 16 : i32
    %142 = tpu.dynamic_rotate %136 by %c16_i32_45 dim 1 : vector<8x256xf32>, i32 -> vector<8x256xf32>
    %cst_46 = arith.constant 0.000000e+00 : f32
    %143 = vector.shape_cast %23 : vector<1x256xi1> to vector<1x256xi1>
    %144 = vector.broadcast %143 : vector<1x256xi1> to vector<8x256xi1>
    %145 = vector.broadcast %cst_46 : f32 to vector<8x256xf32>
    %146 = arith.select %144, %142, %145 : vector<8x256xi1>, vector<8x256xf32>
    %c15_i32 = arith.constant 15 : i32
    %147 = tpu.dynamic_rotate %136 by %c15_i32 dim 1 : vector<8x256xf32>, i32 -> vector<8x256xf32>
    %cst_47 = arith.constant 0.000000e+00 : f32
    %148 = vector.shape_cast %28 : vector<1x256xi1> to vector<1x256xi1>
    %149 = vector.broadcast %148 : vector<1x256xi1> to vector<8x256xi1>
    %150 = vector.broadcast %cst_47 : f32 to vector<8x256xf32>
    %151 = arith.select %149, %147, %150 : vector<8x256xi1>, vector<8x256xf32>
    %c1_i32_48 = arith.constant 1 : i32
    %152 = tpu.dynamic_rotate %136 by %c1_i32_48 dim 1 : vector<8x256xf32>, i32 -> vector<8x256xf32>
    %cst_49 = arith.constant 0.000000e+00 : f32
    %153 = vector.shape_cast %30 : vector<1x256xi1> to vector<1x256xi1>
    %154 = vector.broadcast %153 : vector<1x256xi1> to vector<8x256xi1>
    %155 = vector.broadcast %cst_49 : f32 to vector<8x256xf32>
    %156 = arith.select %154, %152, %155 : vector<8x256xi1>, vector<8x256xf32>
    %c255_i32 = arith.constant 255 : i32
    %157 = tpu.dynamic_rotate %136 by %c255_i32 dim 1 : vector<8x256xf32>, i32 -> vector<8x256xf32>
    %cst_50 = arith.constant 0.000000e+00 : f32
    %158 = vector.shape_cast %32 : vector<1x256xi1> to vector<1x256xi1>
    %159 = vector.broadcast %158 : vector<1x256xi1> to vector<8x256xi1>
    %160 = vector.broadcast %cst_50 : f32 to vector<8x256xf32>
    %161 = arith.select %159, %157, %160 : vector<8x256xi1>, vector<8x256xf32>
    %c241_i32 = arith.constant 241 : i32
    %162 = tpu.dynamic_rotate %136 by %c241_i32 dim 1 : vector<8x256xf32>, i32 -> vector<8x256xf32>
    %cst_51 = arith.constant 0.000000e+00 : f32
    %163 = vector.shape_cast %37 : vector<1x256xi1> to vector<1x256xi1>
    %164 = vector.broadcast %163 : vector<1x256xi1> to vector<8x256xi1>
    %165 = vector.broadcast %cst_51 : f32 to vector<8x256xf32>
    %166 = arith.select %164, %162, %165 : vector<8x256xi1>, vector<8x256xf32>
    %c240_i32_52 = arith.constant 240 : i32
    %167 = tpu.dynamic_rotate %136 by %c240_i32_52 dim 1 : vector<8x256xf32>, i32 -> vector<8x256xf32>
    %cst_53 = arith.constant 0.000000e+00 : f32
    %168 = vector.shape_cast %39 : vector<1x256xi1> to vector<1x256xi1>
    %169 = vector.broadcast %168 : vector<1x256xi1> to vector<8x256xi1>
    %170 = vector.broadcast %cst_53 : f32 to vector<8x256xf32>
    %171 = arith.select %169, %167, %170 : vector<8x256xi1>, vector<8x256xf32>
    %c239_i32 = arith.constant 239 : i32
    %172 = tpu.dynamic_rotate %136 by %c239_i32 dim 1 : vector<8x256xf32>, i32 -> vector<8x256xf32>
    %cst_54 = arith.constant 0.000000e+00 : f32
    %173 = vector.shape_cast %44 : vector<1x256xi1> to vector<1x256xi1>
    %174 = vector.broadcast %173 : vector<1x256xi1> to vector<8x256xi1>
    %175 = vector.broadcast %cst_54 : f32 to vector<8x256xf32>
    %176 = arith.select %174, %172, %175 : vector<8x256xi1>, vector<8x256xf32>
    %177 = tpu.concatenate %141, %146, %151, %156, %136, %161, %166, %171, %176 in 0 : vector<8x256xf32>, vector<8x256xf32>, vector<8x256xf32>, vector<8x256xf32>, vector<8x256xf32>, vector<8x256xf32>, vector<8x256xf32>, vector<8x256xf32>, vector<8x256xf32> -> vector<72x256xf32>
    %178 = arith.truncf %177 : vector<72x256xf32> to vector<72x256xbf16>
    %c0_55 = arith.constant 0 : index
    %c0_56 = arith.constant 0 : index
    %179 = vector.load %arg2[%c0_55, %c0_56] : memref<8x72xbf16, #tpu.memory_space<vmem>>, vector<8x72xbf16>
    %cst_57 = arith.constant dense<0.000000e+00> : vector<8x256xf32>
    %180 = tpu.matmul %179, %178, %cst_57 {dimension_numbers = #tpu.dot_dimension_numbers<[1], [0], [0], [1], [0, 0, 1, 1], [], []>} : vector<8x72xbf16>, vector<72x256xbf16>, vector<8x256xf32> -> vector<8x256xf32>
    %c0_58 = arith.constant 0 : index
    %c0_59 = arith.constant 0 : index
    %181 = vector.load %arg3[%c0_58, %c0_59] : memref<8x1xf32, #tpu.memory_space<vmem>>, vector<8x1xf32>
    %182 = vector.broadcast %181 : vector<8x1xf32> to vector<8x256xf32>
    %183 = arith.addf %180, %182 : vector<8x256xf32>
    %cst_60 = arith.constant 0.000000e+00 : f32
    %184 = vector.broadcast %cst_60 : f32 to vector<8x256xf32>
    %185 = arith.maximumf %183, %184 : vector<8x256xf32>
    %c17_i32_61 = arith.constant 17 : i32
    %186 = tpu.dynamic_rotate %185 by %c17_i32_61 dim 1 : vector<8x256xf32>, i32 -> vector<8x256xf32>
    %cst_62 = arith.constant 0.000000e+00 : f32
    %187 = vector.shape_cast %21 : vector<1x256xi1> to vector<1x256xi1>
    %188 = vector.broadcast %187 : vector<1x256xi1> to vector<8x256xi1>
    %189 = vector.broadcast %cst_62 : f32 to vector<8x256xf32>
    %190 = arith.select %188, %186, %189 : vector<8x256xi1>, vector<8x256xf32>
    %c16_i32_63 = arith.constant 16 : i32
    %191 = tpu.dynamic_rotate %185 by %c16_i32_63 dim 1 : vector<8x256xf32>, i32 -> vector<8x256xf32>
    %cst_64 = arith.constant 0.000000e+00 : f32
    %192 = vector.shape_cast %23 : vector<1x256xi1> to vector<1x256xi1>
    %193 = vector.broadcast %192 : vector<1x256xi1> to vector<8x256xi1>
    %194 = vector.broadcast %cst_64 : f32 to vector<8x256xf32>
    %195 = arith.select %193, %191, %194 : vector<8x256xi1>, vector<8x256xf32>
    %c15_i32_65 = arith.constant 15 : i32
    %196 = tpu.dynamic_rotate %185 by %c15_i32_65 dim 1 : vector<8x256xf32>, i32 -> vector<8x256xf32>
    %cst_66 = arith.constant 0.000000e+00 : f32
    %197 = vector.shape_cast %28 : vector<1x256xi1> to vector<1x256xi1>
    %198 = vector.broadcast %197 : vector<1x256xi1> to vector<8x256xi1>
    %199 = vector.broadcast %cst_66 : f32 to vector<8x256xf32>
    %200 = arith.select %198, %196, %199 : vector<8x256xi1>, vector<8x256xf32>
    %c1_i32_67 = arith.constant 1 : i32
    %201 = tpu.dynamic_rotate %185 by %c1_i32_67 dim 1 : vector<8x256xf32>, i32 -> vector<8x256xf32>
    %cst_68 = arith.constant 0.000000e+00 : f32
    %202 = vector.shape_cast %30 : vector<1x256xi1> to vector<1x256xi1>
    %203 = vector.broadcast %202 : vector<1x256xi1> to vector<8x256xi1>
    %204 = vector.broadcast %cst_68 : f32 to vector<8x256xf32>
    %205 = arith.select %203, %201, %204 : vector<8x256xi1>, vector<8x256xf32>
    %c255_i32_69 = arith.constant 255 : i32
    %206 = tpu.dynamic_rotate %185 by %c255_i32_69 dim 1 : vector<8x256xf32>, i32 -> vector<8x256xf32>
    %cst_70 = arith.constant 0.000000e+00 : f32
    %207 = vector.shape_cast %32 : vector<1x256xi1> to vector<1x256xi1>
    %208 = vector.broadcast %207 : vector<1x256xi1> to vector<8x256xi1>
    %209 = vector.broadcast %cst_70 : f32 to vector<8x256xf32>
    %210 = arith.select %208, %206, %209 : vector<8x256xi1>, vector<8x256xf32>
    %c241_i32_71 = arith.constant 241 : i32
    %211 = tpu.dynamic_rotate %185 by %c241_i32_71 dim 1 : vector<8x256xf32>, i32 -> vector<8x256xf32>
    %cst_72 = arith.constant 0.000000e+00 : f32
    %212 = vector.shape_cast %37 : vector<1x256xi1> to vector<1x256xi1>
    %213 = vector.broadcast %212 : vector<1x256xi1> to vector<8x256xi1>
    %214 = vector.broadcast %cst_72 : f32 to vector<8x256xf32>
    %215 = arith.select %213, %211, %214 : vector<8x256xi1>, vector<8x256xf32>
    %c240_i32_73 = arith.constant 240 : i32
    %216 = tpu.dynamic_rotate %185 by %c240_i32_73 dim 1 : vector<8x256xf32>, i32 -> vector<8x256xf32>
    %cst_74 = arith.constant 0.000000e+00 : f32
    %217 = vector.shape_cast %39 : vector<1x256xi1> to vector<1x256xi1>
    %218 = vector.broadcast %217 : vector<1x256xi1> to vector<8x256xi1>
    %219 = vector.broadcast %cst_74 : f32 to vector<8x256xf32>
    %220 = arith.select %218, %216, %219 : vector<8x256xi1>, vector<8x256xf32>
    %c239_i32_75 = arith.constant 239 : i32
    %221 = tpu.dynamic_rotate %185 by %c239_i32_75 dim 1 : vector<8x256xf32>, i32 -> vector<8x256xf32>
    %cst_76 = arith.constant 0.000000e+00 : f32
    %222 = vector.shape_cast %44 : vector<1x256xi1> to vector<1x256xi1>
    %223 = vector.broadcast %222 : vector<1x256xi1> to vector<8x256xi1>
    %224 = vector.broadcast %cst_76 : f32 to vector<8x256xf32>
    %225 = arith.select %223, %221, %224 : vector<8x256xi1>, vector<8x256xf32>
    %226 = tpu.concatenate %190, %195, %200, %205, %185, %210, %215, %220, %225 in 0 : vector<8x256xf32>, vector<8x256xf32>, vector<8x256xf32>, vector<8x256xf32>, vector<8x256xf32>, vector<8x256xf32>, vector<8x256xf32>, vector<8x256xf32>, vector<8x256xf32> -> vector<72x256xf32>
    %227 = arith.truncf %226 : vector<72x256xf32> to vector<72x256xbf16>
    %c0_77 = arith.constant 0 : index
    %c0_78 = arith.constant 0 : index
    %228 = vector.load %arg4[%c0_77, %c0_78] : memref<8x72xbf16, #tpu.memory_space<vmem>>, vector<8x72xbf16>
    %cst_79 = arith.constant dense<0.000000e+00> : vector<8x256xf32>
    %229 = tpu.matmul %228, %227, %cst_79 {dimension_numbers = #tpu.dot_dimension_numbers<[1], [0], [0], [1], [0, 0, 1, 1], [], []>} : vector<8x72xbf16>, vector<72x256xbf16>, vector<8x256xf32> -> vector<8x256xf32>
    %c0_80 = arith.constant 0 : index
    %c0_81 = arith.constant 0 : index
    %230 = vector.load %arg5[%c0_80, %c0_81] : memref<8x1xf32, #tpu.memory_space<vmem>>, vector<8x1xf32>
    %231 = vector.broadcast %230 : vector<8x1xf32> to vector<8x256xf32>
    %232 = arith.addf %229, %231 : vector<8x256xf32>
    %cst_82 = arith.constant 0.000000e+00 : f32
    %233 = vector.broadcast %cst_82 : f32 to vector<8x256xf32>
    %234 = arith.maximumf %232, %233 : vector<8x256xf32>
    %c255_i32_83 = arith.constant 255 : i32
    %235 = tpu.dynamic_rotate %234 by %c255_i32_83 dim 1 : vector<8x256xf32>, i32 -> vector<8x256xf32>
    %236 = arith.maximumf %234, %235 : vector<8x256xf32>
    %c240_i32_84 = arith.constant 240 : i32
    %237 = tpu.dynamic_rotate %236 by %c240_i32_84 dim 1 : vector<8x256xf32>, i32 -> vector<8x256xf32>
    %238 = arith.maximumf %236, %237 : vector<8x256xf32>
    %239 = arith.truncf %238 : vector<8x256xf32> to vector<8x256xbf16>
    %c0_85 = arith.constant 0 : index
    %c0_86 = arith.constant 0 : index
    %240 = vector.load %arg26[%c0_85, %c0_86] : memref<256x64xbf16, #tpu.memory_space<vmem>>, vector<256x64xbf16>
    %cst_87 = arith.constant dense<0.000000e+00> : vector<8x64xf32>
    %241 = tpu.matmul %239, %240, %cst_87 {dimension_numbers = #tpu.dot_dimension_numbers<[1], [0], [0], [1], [0, 0, 1, 1], [], []>} : vector<8x256xbf16>, vector<256x64xbf16>, vector<8x64xf32> -> vector<8x64xf32>
    %c9_i32 = arith.constant 9 : i32
    %242 = tpu.dynamic_rotate %241 by %c9_i32 dim 1 : vector<8x64xf32>, i32 -> vector<8x64xf32>
    %cst_88 = arith.constant 0.000000e+00 : f32
    %243 = vector.shape_cast %66 : vector<1x64xi1> to vector<1x64xi1>
    %244 = vector.broadcast %243 : vector<1x64xi1> to vector<8x64xi1>
    %245 = vector.broadcast %cst_88 : f32 to vector<8x64xf32>
    %246 = arith.select %244, %242, %245 : vector<8x64xi1>, vector<8x64xf32>
    %c8_i32_89 = arith.constant 8 : i32
    %247 = tpu.dynamic_rotate %241 by %c8_i32_89 dim 1 : vector<8x64xf32>, i32 -> vector<8x64xf32>
    %cst_90 = arith.constant 0.000000e+00 : f32
    %248 = vector.shape_cast %68 : vector<1x64xi1> to vector<1x64xi1>
    %249 = vector.broadcast %248 : vector<1x64xi1> to vector<8x64xi1>
    %250 = vector.broadcast %cst_90 : f32 to vector<8x64xf32>
    %251 = arith.select %249, %247, %250 : vector<8x64xi1>, vector<8x64xf32>
    %c7_i32 = arith.constant 7 : i32
    %252 = tpu.dynamic_rotate %241 by %c7_i32 dim 1 : vector<8x64xf32>, i32 -> vector<8x64xf32>
    %cst_91 = arith.constant 0.000000e+00 : f32
    %253 = vector.shape_cast %73 : vector<1x64xi1> to vector<1x64xi1>
    %254 = vector.broadcast %253 : vector<1x64xi1> to vector<8x64xi1>
    %255 = vector.broadcast %cst_91 : f32 to vector<8x64xf32>
    %256 = arith.select %254, %252, %255 : vector<8x64xi1>, vector<8x64xf32>
    %c1_i32_92 = arith.constant 1 : i32
    %257 = tpu.dynamic_rotate %241 by %c1_i32_92 dim 1 : vector<8x64xf32>, i32 -> vector<8x64xf32>
    %cst_93 = arith.constant 0.000000e+00 : f32
    %258 = vector.shape_cast %75 : vector<1x64xi1> to vector<1x64xi1>
    %259 = vector.broadcast %258 : vector<1x64xi1> to vector<8x64xi1>
    %260 = vector.broadcast %cst_93 : f32 to vector<8x64xf32>
    %261 = arith.select %259, %257, %260 : vector<8x64xi1>, vector<8x64xf32>
    %c63_i32 = arith.constant 63 : i32
    %262 = tpu.dynamic_rotate %241 by %c63_i32 dim 1 : vector<8x64xf32>, i32 -> vector<8x64xf32>
    %cst_94 = arith.constant 0.000000e+00 : f32
    %263 = vector.shape_cast %77 : vector<1x64xi1> to vector<1x64xi1>
    %264 = vector.broadcast %263 : vector<1x64xi1> to vector<8x64xi1>
    %265 = vector.broadcast %cst_94 : f32 to vector<8x64xf32>
    %266 = arith.select %264, %262, %265 : vector<8x64xi1>, vector<8x64xf32>
    %c57_i32 = arith.constant 57 : i32
    %267 = tpu.dynamic_rotate %241 by %c57_i32 dim 1 : vector<8x64xf32>, i32 -> vector<8x64xf32>
    %cst_95 = arith.constant 0.000000e+00 : f32
    %268 = vector.shape_cast %82 : vector<1x64xi1> to vector<1x64xi1>
    %269 = vector.broadcast %268 : vector<1x64xi1> to vector<8x64xi1>
    %270 = vector.broadcast %cst_95 : f32 to vector<8x64xf32>
    %271 = arith.select %269, %267, %270 : vector<8x64xi1>, vector<8x64xf32>
    %c56_i32_96 = arith.constant 56 : i32
    %272 = tpu.dynamic_rotate %241 by %c56_i32_96 dim 1 : vector<8x64xf32>, i32 -> vector<8x64xf32>
    %cst_97 = arith.constant 0.000000e+00 : f32
    %273 = vector.shape_cast %84 : vector<1x64xi1> to vector<1x64xi1>
    %274 = vector.broadcast %273 : vector<1x64xi1> to vector<8x64xi1>
    %275 = vector.broadcast %cst_97 : f32 to vector<8x64xf32>
    %276 = arith.select %274, %272, %275 : vector<8x64xi1>, vector<8x64xf32>
    %c55_i32 = arith.constant 55 : i32
    %277 = tpu.dynamic_rotate %241 by %c55_i32 dim 1 : vector<8x64xf32>, i32 -> vector<8x64xf32>
    %cst_98 = arith.constant 0.000000e+00 : f32
    %278 = vector.shape_cast %89 : vector<1x64xi1> to vector<1x64xi1>
    %279 = vector.broadcast %278 : vector<1x64xi1> to vector<8x64xi1>
    %280 = vector.broadcast %cst_98 : f32 to vector<8x64xf32>
    %281 = arith.select %279, %277, %280 : vector<8x64xi1>, vector<8x64xf32>
    %282 = tpu.concatenate %246, %251, %256, %261, %241, %266, %271, %276, %281 in 0 : vector<8x64xf32>, vector<8x64xf32>, vector<8x64xf32>, vector<8x64xf32>, vector<8x64xf32>, vector<8x64xf32>, vector<8x64xf32>, vector<8x64xf32>, vector<8x64xf32> -> vector<72x64xf32>
    %283 = arith.truncf %282 : vector<72x64xf32> to vector<72x64xbf16>
    %c0_99 = arith.constant 0 : index
    %c0_100 = arith.constant 0 : index
    %284 = vector.load %arg6[%c0_99, %c0_100] : memref<16x72xbf16, #tpu.memory_space<vmem>>, vector<16x72xbf16>
    %cst_101 = arith.constant dense<0.000000e+00> : vector<16x64xf32>
    %285 = tpu.matmul %284, %283, %cst_101 {dimension_numbers = #tpu.dot_dimension_numbers<[1], [0], [0], [1], [0, 0, 1, 1], [], []>} : vector<16x72xbf16>, vector<72x64xbf16>, vector<16x64xf32> -> vector<16x64xf32>
    %c0_102 = arith.constant 0 : index
    %c0_103 = arith.constant 0 : index
    %286 = vector.load %arg7[%c0_102, %c0_103] : memref<16x1xf32, #tpu.memory_space<vmem>>, vector<16x1xf32>
    %287 = vector.broadcast %286 : vector<16x1xf32> to vector<16x64xf32>
    %288 = arith.addf %285, %287 : vector<16x64xf32>
    %cst_104 = arith.constant 0.000000e+00 : f32
    %289 = vector.broadcast %cst_104 : f32 to vector<16x64xf32>
    %290 = arith.maximumf %288, %289 : vector<16x64xf32>
    %c9_i32_105 = arith.constant 9 : i32
    %291 = tpu.dynamic_rotate %290 by %c9_i32_105 dim 1 : vector<16x64xf32>, i32 -> vector<16x64xf32>
    %cst_106 = arith.constant 0.000000e+00 : f32
    %292 = vector.shape_cast %66 : vector<1x64xi1> to vector<1x64xi1>
    %293 = vector.broadcast %292 : vector<1x64xi1> to vector<16x64xi1>
    %294 = vector.broadcast %cst_106 : f32 to vector<16x64xf32>
    %295 = arith.select %293, %291, %294 : vector<16x64xi1>, vector<16x64xf32>
    %c8_i32_107 = arith.constant 8 : i32
    %296 = tpu.dynamic_rotate %290 by %c8_i32_107 dim 1 : vector<16x64xf32>, i32 -> vector<16x64xf32>
    %cst_108 = arith.constant 0.000000e+00 : f32
    %297 = vector.shape_cast %68 : vector<1x64xi1> to vector<1x64xi1>
    %298 = vector.broadcast %297 : vector<1x64xi1> to vector<16x64xi1>
    %299 = vector.broadcast %cst_108 : f32 to vector<16x64xf32>
    %300 = arith.select %298, %296, %299 : vector<16x64xi1>, vector<16x64xf32>
    %c7_i32_109 = arith.constant 7 : i32
    %301 = tpu.dynamic_rotate %290 by %c7_i32_109 dim 1 : vector<16x64xf32>, i32 -> vector<16x64xf32>
    %cst_110 = arith.constant 0.000000e+00 : f32
    %302 = vector.shape_cast %73 : vector<1x64xi1> to vector<1x64xi1>
    %303 = vector.broadcast %302 : vector<1x64xi1> to vector<16x64xi1>
    %304 = vector.broadcast %cst_110 : f32 to vector<16x64xf32>
    %305 = arith.select %303, %301, %304 : vector<16x64xi1>, vector<16x64xf32>
    %c1_i32_111 = arith.constant 1 : i32
    %306 = tpu.dynamic_rotate %290 by %c1_i32_111 dim 1 : vector<16x64xf32>, i32 -> vector<16x64xf32>
    %cst_112 = arith.constant 0.000000e+00 : f32
    %307 = vector.shape_cast %75 : vector<1x64xi1> to vector<1x64xi1>
    %308 = vector.broadcast %307 : vector<1x64xi1> to vector<16x64xi1>
    %309 = vector.broadcast %cst_112 : f32 to vector<16x64xf32>
    %310 = arith.select %308, %306, %309 : vector<16x64xi1>, vector<16x64xf32>
    %c63_i32_113 = arith.constant 63 : i32
    %311 = tpu.dynamic_rotate %290 by %c63_i32_113 dim 1 : vector<16x64xf32>, i32 -> vector<16x64xf32>
    %cst_114 = arith.constant 0.000000e+00 : f32
    %312 = vector.shape_cast %77 : vector<1x64xi1> to vector<1x64xi1>
    %313 = vector.broadcast %312 : vector<1x64xi1> to vector<16x64xi1>
    %314 = vector.broadcast %cst_114 : f32 to vector<16x64xf32>
    %315 = arith.select %313, %311, %314 : vector<16x64xi1>, vector<16x64xf32>
    %c57_i32_115 = arith.constant 57 : i32
    %316 = tpu.dynamic_rotate %290 by %c57_i32_115 dim 1 : vector<16x64xf32>, i32 -> vector<16x64xf32>
    %cst_116 = arith.constant 0.000000e+00 : f32
    %317 = vector.shape_cast %82 : vector<1x64xi1> to vector<1x64xi1>
    %318 = vector.broadcast %317 : vector<1x64xi1> to vector<16x64xi1>
    %319 = vector.broadcast %cst_116 : f32 to vector<16x64xf32>
    %320 = arith.select %318, %316, %319 : vector<16x64xi1>, vector<16x64xf32>
    %c56_i32_117 = arith.constant 56 : i32
    %321 = tpu.dynamic_rotate %290 by %c56_i32_117 dim 1 : vector<16x64xf32>, i32 -> vector<16x64xf32>
    %cst_118 = arith.constant 0.000000e+00 : f32
    %322 = vector.shape_cast %84 : vector<1x64xi1> to vector<1x64xi1>
    %323 = vector.broadcast %322 : vector<1x64xi1> to vector<16x64xi1>
    %324 = vector.broadcast %cst_118 : f32 to vector<16x64xf32>
    %325 = arith.select %323, %321, %324 : vector<16x64xi1>, vector<16x64xf32>
    %c55_i32_119 = arith.constant 55 : i32
    %326 = tpu.dynamic_rotate %290 by %c55_i32_119 dim 1 : vector<16x64xf32>, i32 -> vector<16x64xf32>
    %cst_120 = arith.constant 0.000000e+00 : f32
    %327 = vector.shape_cast %89 : vector<1x64xi1> to vector<1x64xi1>
    %328 = vector.broadcast %327 : vector<1x64xi1> to vector<16x64xi1>
    %329 = vector.broadcast %cst_120 : f32 to vector<16x64xf32>
    %330 = arith.select %328, %326, %329 : vector<16x64xi1>, vector<16x64xf32>
    %331 = tpu.concatenate %295, %300, %305, %310, %290, %315, %320, %325, %330 in 0 : vector<16x64xf32>, vector<16x64xf32>, vector<16x64xf32>, vector<16x64xf32>, vector<16x64xf32>, vector<16x64xf32>, vector<16x64xf32>, vector<16x64xf32>, vector<16x64xf32> -> vector<144x64xf32>
    %332 = arith.truncf %331 : vector<144x64xf32> to vector<144x64xbf16>
    %c0_121 = arith.constant 0 : index
    %c0_122 = arith.constant 0 : index
    %333 = vector.load %arg8[%c0_121, %c0_122] : memref<16x144xbf16, #tpu.memory_space<vmem>>, vector<16x144xbf16>
    %cst_123 = arith.constant dense<0.000000e+00> : vector<16x64xf32>
    %334 = tpu.matmul %333, %332, %cst_123 {dimension_numbers = #tpu.dot_dimension_numbers<[1], [0], [0], [1], [0, 0, 1, 1], [], []>} : vector<16x144xbf16>, vector<144x64xbf16>, vector<16x64xf32> -> vector<16x64xf32>
    %c0_124 = arith.constant 0 : index
    %c0_125 = arith.constant 0 : index
    %335 = vector.load %arg9[%c0_124, %c0_125] : memref<16x1xf32, #tpu.memory_space<vmem>>, vector<16x1xf32>
    %336 = vector.broadcast %335 : vector<16x1xf32> to vector<16x64xf32>
    %337 = arith.addf %334, %336 : vector<16x64xf32>
    %cst_126 = arith.constant 0.000000e+00 : f32
    %338 = vector.broadcast %cst_126 : f32 to vector<16x64xf32>
    %339 = arith.maximumf %337, %338 : vector<16x64xf32>
    %c63_i32_127 = arith.constant 63 : i32
    %340 = tpu.dynamic_rotate %339 by %c63_i32_127 dim 1 : vector<16x64xf32>, i32 -> vector<16x64xf32>
    %341 = arith.maximumf %339, %340 : vector<16x64xf32>
    %c56_i32_128 = arith.constant 56 : i32
    %342 = tpu.dynamic_rotate %341 by %c56_i32_128 dim 1 : vector<16x64xf32>, i32 -> vector<16x64xf32>
    %343 = arith.maximumf %341, %342 : vector<16x64xf32>
    %344 = arith.truncf %343 : vector<16x64xf32> to vector<16x64xbf16>
    %c0_129 = arith.constant 0 : index
    %c0_130 = arith.constant 0 : index
    %345 = vector.load %arg27[%c0_129, %c0_130] : memref<64x16xbf16, #tpu.memory_space<vmem>>, vector<64x16xbf16>
    %cst_131 = arith.constant dense<0.000000e+00> : vector<16x16xf32>
    %346 = tpu.matmul %344, %345, %cst_131 {dimension_numbers = #tpu.dot_dimension_numbers<[1], [0], [0], [1], [0, 0, 1, 1], [], []>} : vector<16x64xbf16>, vector<64x16xbf16>, vector<16x16xf32> -> vector<16x16xf32>
    %c5_i32 = arith.constant 5 : i32
    %347 = tpu.dynamic_rotate %346 by %c5_i32 dim 1 : vector<16x16xf32>, i32 -> vector<16x16xf32>
    %cst_132 = arith.constant 0.000000e+00 : f32
    %348 = vector.shape_cast %111 : vector<1x16xi1> to vector<1x16xi1>
    %349 = vector.broadcast %348 : vector<1x16xi1> to vector<16x16xi1>
    %350 = vector.broadcast %cst_132 : f32 to vector<16x16xf32>
    %351 = arith.select %349, %347, %350 : vector<16x16xi1>, vector<16x16xf32>
    %c4_i32_133 = arith.constant 4 : i32
    %352 = tpu.dynamic_rotate %346 by %c4_i32_133 dim 1 : vector<16x16xf32>, i32 -> vector<16x16xf32>
    %cst_134 = arith.constant 0.000000e+00 : f32
    %353 = vector.shape_cast %113 : vector<1x16xi1> to vector<1x16xi1>
    %354 = vector.broadcast %353 : vector<1x16xi1> to vector<16x16xi1>
    %355 = vector.broadcast %cst_134 : f32 to vector<16x16xf32>
    %356 = arith.select %354, %352, %355 : vector<16x16xi1>, vector<16x16xf32>
    %c3_i32 = arith.constant 3 : i32
    %357 = tpu.dynamic_rotate %346 by %c3_i32 dim 1 : vector<16x16xf32>, i32 -> vector<16x16xf32>
    %cst_135 = arith.constant 0.000000e+00 : f32
    %358 = vector.shape_cast %118 : vector<1x16xi1> to vector<1x16xi1>
    %359 = vector.broadcast %358 : vector<1x16xi1> to vector<16x16xi1>
    %360 = vector.broadcast %cst_135 : f32 to vector<16x16xf32>
    %361 = arith.select %359, %357, %360 : vector<16x16xi1>, vector<16x16xf32>
    %c1_i32_136 = arith.constant 1 : i32
    %362 = tpu.dynamic_rotate %346 by %c1_i32_136 dim 1 : vector<16x16xf32>, i32 -> vector<16x16xf32>
    %cst_137 = arith.constant 0.000000e+00 : f32
    %363 = vector.shape_cast %120 : vector<1x16xi1> to vector<1x16xi1>
    %364 = vector.broadcast %363 : vector<1x16xi1> to vector<16x16xi1>
    %365 = vector.broadcast %cst_137 : f32 to vector<16x16xf32>
    %366 = arith.select %364, %362, %365 : vector<16x16xi1>, vector<16x16xf32>
    %c15_i32_138 = arith.constant 15 : i32
    %367 = tpu.dynamic_rotate %346 by %c15_i32_138 dim 1 : vector<16x16xf32>, i32 -> vector<16x16xf32>
    %cst_139 = arith.constant 0.000000e+00 : f32
    %368 = vector.shape_cast %122 : vector<1x16xi1> to vector<1x16xi1>
    %369 = vector.broadcast %368 : vector<1x16xi1> to vector<16x16xi1>
    %370 = vector.broadcast %cst_139 : f32 to vector<16x16xf32>
    %371 = arith.select %369, %367, %370 : vector<16x16xi1>, vector<16x16xf32>
    %c13_i32 = arith.constant 13 : i32
    %372 = tpu.dynamic_rotate %346 by %c13_i32 dim 1 : vector<16x16xf32>, i32 -> vector<16x16xf32>
    %cst_140 = arith.constant 0.000000e+00 : f32
    %373 = vector.shape_cast %127 : vector<1x16xi1> to vector<1x16xi1>
    %374 = vector.broadcast %373 : vector<1x16xi1> to vector<16x16xi1>
    %375 = vector.broadcast %cst_140 : f32 to vector<16x16xf32>
    %376 = arith.select %374, %372, %375 : vector<16x16xi1>, vector<16x16xf32>
    %c12_i32_141 = arith.constant 12 : i32
    %377 = tpu.dynamic_rotate %346 by %c12_i32_141 dim 1 : vector<16x16xf32>, i32 -> vector<16x16xf32>
    %cst_142 = arith.constant 0.000000e+00 : f32
    %378 = vector.shape_cast %129 : vector<1x16xi1> to vector<1x16xi1>
    %379 = vector.broadcast %378 : vector<1x16xi1> to vector<16x16xi1>
    %380 = vector.broadcast %cst_142 : f32 to vector<16x16xf32>
    %381 = arith.select %379, %377, %380 : vector<16x16xi1>, vector<16x16xf32>
    %c11_i32 = arith.constant 11 : i32
    %382 = tpu.dynamic_rotate %346 by %c11_i32 dim 1 : vector<16x16xf32>, i32 -> vector<16x16xf32>
    %cst_143 = arith.constant 0.000000e+00 : f32
    %383 = vector.shape_cast %134 : vector<1x16xi1> to vector<1x16xi1>
    %384 = vector.broadcast %383 : vector<1x16xi1> to vector<16x16xi1>
    %385 = vector.broadcast %cst_143 : f32 to vector<16x16xf32>
    %386 = arith.select %384, %382, %385 : vector<16x16xi1>, vector<16x16xf32>
    %387 = tpu.concatenate %351, %356, %361, %366, %346, %371, %376, %381, %386 in 0 : vector<16x16xf32>, vector<16x16xf32>, vector<16x16xf32>, vector<16x16xf32>, vector<16x16xf32>, vector<16x16xf32>, vector<16x16xf32>, vector<16x16xf32>, vector<16x16xf32> -> vector<144x16xf32>
    %388 = arith.truncf %387 : vector<144x16xf32> to vector<144x16xbf16>
    %c0_144 = arith.constant 0 : index
    %c0_145 = arith.constant 0 : index
    %389 = vector.load %arg10[%c0_144, %c0_145] : memref<32x144xbf16, #tpu.memory_space<vmem>>, vector<32x144xbf16>
    %cst_146 = arith.constant dense<0.000000e+00> : vector<32x16xf32>
    %390 = tpu.matmul %389, %388, %cst_146 {dimension_numbers = #tpu.dot_dimension_numbers<[1], [0], [0], [1], [0, 0, 1, 1], [], []>} : vector<32x144xbf16>, vector<144x16xbf16>, vector<32x16xf32> -> vector<32x16xf32>
    %c0_147 = arith.constant 0 : index
    %c0_148 = arith.constant 0 : index
    %391 = vector.load %arg11[%c0_147, %c0_148] : memref<32x1xf32, #tpu.memory_space<vmem>>, vector<32x1xf32>
    %392 = vector.broadcast %391 : vector<32x1xf32> to vector<32x16xf32>
    %393 = arith.addf %390, %392 : vector<32x16xf32>
    %cst_149 = arith.constant 0.000000e+00 : f32
    %394 = vector.broadcast %cst_149 : f32 to vector<32x16xf32>
    %395 = arith.maximumf %393, %394 : vector<32x16xf32>
    %c5_i32_150 = arith.constant 5 : i32
    %396 = tpu.dynamic_rotate %395 by %c5_i32_150 dim 1 : vector<32x16xf32>, i32 -> vector<32x16xf32>
    %cst_151 = arith.constant 0.000000e+00 : f32
    %397 = vector.shape_cast %111 : vector<1x16xi1> to vector<1x16xi1>
    %398 = vector.broadcast %397 : vector<1x16xi1> to vector<32x16xi1>
    %399 = vector.broadcast %cst_151 : f32 to vector<32x16xf32>
    %400 = arith.select %398, %396, %399 : vector<32x16xi1>, vector<32x16xf32>
    %c4_i32_152 = arith.constant 4 : i32
    %401 = tpu.dynamic_rotate %395 by %c4_i32_152 dim 1 : vector<32x16xf32>, i32 -> vector<32x16xf32>
    %cst_153 = arith.constant 0.000000e+00 : f32
    %402 = vector.shape_cast %113 : vector<1x16xi1> to vector<1x16xi1>
    %403 = vector.broadcast %402 : vector<1x16xi1> to vector<32x16xi1>
    %404 = vector.broadcast %cst_153 : f32 to vector<32x16xf32>
    %405 = arith.select %403, %401, %404 : vector<32x16xi1>, vector<32x16xf32>
    %c3_i32_154 = arith.constant 3 : i32
    %406 = tpu.dynamic_rotate %395 by %c3_i32_154 dim 1 : vector<32x16xf32>, i32 -> vector<32x16xf32>
    %cst_155 = arith.constant 0.000000e+00 : f32
    %407 = vector.shape_cast %118 : vector<1x16xi1> to vector<1x16xi1>
    %408 = vector.broadcast %407 : vector<1x16xi1> to vector<32x16xi1>
    %409 = vector.broadcast %cst_155 : f32 to vector<32x16xf32>
    %410 = arith.select %408, %406, %409 : vector<32x16xi1>, vector<32x16xf32>
    %c1_i32_156 = arith.constant 1 : i32
    %411 = tpu.dynamic_rotate %395 by %c1_i32_156 dim 1 : vector<32x16xf32>, i32 -> vector<32x16xf32>
    %cst_157 = arith.constant 0.000000e+00 : f32
    %412 = vector.shape_cast %120 : vector<1x16xi1> to vector<1x16xi1>
    %413 = vector.broadcast %412 : vector<1x16xi1> to vector<32x16xi1>
    %414 = vector.broadcast %cst_157 : f32 to vector<32x16xf32>
    %415 = arith.select %413, %411, %414 : vector<32x16xi1>, vector<32x16xf32>
    %c15_i32_158 = arith.constant 15 : i32
    %416 = tpu.dynamic_rotate %395 by %c15_i32_158 dim 1 : vector<32x16xf32>, i32 -> vector<32x16xf32>
    %cst_159 = arith.constant 0.000000e+00 : f32
    %417 = vector.shape_cast %122 : vector<1x16xi1> to vector<1x16xi1>
    %418 = vector.broadcast %417 : vector<1x16xi1> to vector<32x16xi1>
    %419 = vector.broadcast %cst_159 : f32 to vector<32x16xf32>
    %420 = arith.select %418, %416, %419 : vector<32x16xi1>, vector<32x16xf32>
    %c13_i32_160 = arith.constant 13 : i32
    %421 = tpu.dynamic_rotate %395 by %c13_i32_160 dim 1 : vector<32x16xf32>, i32 -> vector<32x16xf32>
    %cst_161 = arith.constant 0.000000e+00 : f32
    %422 = vector.shape_cast %127 : vector<1x16xi1> to vector<1x16xi1>
    %423 = vector.broadcast %422 : vector<1x16xi1> to vector<32x16xi1>
    %424 = vector.broadcast %cst_161 : f32 to vector<32x16xf32>
    %425 = arith.select %423, %421, %424 : vector<32x16xi1>, vector<32x16xf32>
    %c12_i32_162 = arith.constant 12 : i32
    %426 = tpu.dynamic_rotate %395 by %c12_i32_162 dim 1 : vector<32x16xf32>, i32 -> vector<32x16xf32>
    %cst_163 = arith.constant 0.000000e+00 : f32
    %427 = vector.shape_cast %129 : vector<1x16xi1> to vector<1x16xi1>
    %428 = vector.broadcast %427 : vector<1x16xi1> to vector<32x16xi1>
    %429 = vector.broadcast %cst_163 : f32 to vector<32x16xf32>
    %430 = arith.select %428, %426, %429 : vector<32x16xi1>, vector<32x16xf32>
    %c11_i32_164 = arith.constant 11 : i32
    %431 = tpu.dynamic_rotate %395 by %c11_i32_164 dim 1 : vector<32x16xf32>, i32 -> vector<32x16xf32>
    %cst_165 = arith.constant 0.000000e+00 : f32
    %432 = vector.shape_cast %134 : vector<1x16xi1> to vector<1x16xi1>
    %433 = vector.broadcast %432 : vector<1x16xi1> to vector<32x16xi1>
    %434 = vector.broadcast %cst_165 : f32 to vector<32x16xf32>
    %435 = arith.select %433, %431, %434 : vector<32x16xi1>, vector<32x16xf32>
    %436 = tpu.concatenate %400, %405, %410, %415, %395, %420, %425, %430, %435 in 0 : vector<32x16xf32>, vector<32x16xf32>, vector<32x16xf32>, vector<32x16xf32>, vector<32x16xf32>, vector<32x16xf32>, vector<32x16xf32>, vector<32x16xf32>, vector<32x16xf32> -> vector<288x16xf32>
    %437 = arith.truncf %436 : vector<288x16xf32> to vector<288x16xbf16>
    %c0_166 = arith.constant 0 : index
    %c0_167 = arith.constant 0 : index
    %438 = vector.load %arg12[%c0_166, %c0_167] : memref<32x288xbf16, #tpu.memory_space<vmem>>, vector<32x288xbf16>
    %cst_168 = arith.constant dense<0.000000e+00> : vector<32x16xf32>
    %439 = tpu.matmul %438, %437, %cst_168 {dimension_numbers = #tpu.dot_dimension_numbers<[1], [0], [0], [1], [0, 0, 1, 1], [], []>} : vector<32x288xbf16>, vector<288x16xbf16>, vector<32x16xf32> -> vector<32x16xf32>
    %c0_169 = arith.constant 0 : index
    %c0_170 = arith.constant 0 : index
    %440 = vector.load %arg13[%c0_169, %c0_170] : memref<32x1xf32, #tpu.memory_space<vmem>>, vector<32x1xf32>
    %441 = vector.broadcast %440 : vector<32x1xf32> to vector<32x16xf32>
    %442 = arith.addf %439, %441 : vector<32x16xf32>
    %cst_171 = arith.constant 0.000000e+00 : f32
    %443 = vector.broadcast %cst_171 : f32 to vector<32x16xf32>
    %444 = arith.maximumf %442, %443 : vector<32x16xf32>
    %445 = arith.truncf %444 : vector<32x16xf32> to vector<32x16xbf16>
    %c0_172 = arith.constant 0 : index
    %c0_173 = arith.constant 0 : index
    %446 = vector.load %arg28[%c0_172, %c0_173] : memref<16x64xbf16, #tpu.memory_space<vmem>>, vector<16x64xbf16>
    %cst_174 = arith.constant dense<0.000000e+00> : vector<32x64xf32>
    %447 = tpu.matmul %445, %446, %cst_174 {dimension_numbers = #tpu.dot_dimension_numbers<[1], [0], [0], [1], [0, 0, 1, 1], [], []>} : vector<32x16xbf16>, vector<16x64xbf16>, vector<32x64xf32> -> vector<32x64xf32>
    %c9_i32_175 = arith.constant 9 : i32
    %448 = tpu.dynamic_rotate %447 by %c9_i32_175 dim 1 : vector<32x64xf32>, i32 -> vector<32x64xf32>
    %cst_176 = arith.constant 0.000000e+00 : f32
    %449 = vector.shape_cast %66 : vector<1x64xi1> to vector<1x64xi1>
    %450 = vector.broadcast %449 : vector<1x64xi1> to vector<32x64xi1>
    %451 = vector.broadcast %cst_176 : f32 to vector<32x64xf32>
    %452 = arith.select %450, %448, %451 : vector<32x64xi1>, vector<32x64xf32>
    %c8_i32_177 = arith.constant 8 : i32
    %453 = tpu.dynamic_rotate %447 by %c8_i32_177 dim 1 : vector<32x64xf32>, i32 -> vector<32x64xf32>
    %cst_178 = arith.constant 0.000000e+00 : f32
    %454 = vector.shape_cast %68 : vector<1x64xi1> to vector<1x64xi1>
    %455 = vector.broadcast %454 : vector<1x64xi1> to vector<32x64xi1>
    %456 = vector.broadcast %cst_178 : f32 to vector<32x64xf32>
    %457 = arith.select %455, %453, %456 : vector<32x64xi1>, vector<32x64xf32>
    %c7_i32_179 = arith.constant 7 : i32
    %458 = tpu.dynamic_rotate %447 by %c7_i32_179 dim 1 : vector<32x64xf32>, i32 -> vector<32x64xf32>
    %cst_180 = arith.constant 0.000000e+00 : f32
    %459 = vector.shape_cast %73 : vector<1x64xi1> to vector<1x64xi1>
    %460 = vector.broadcast %459 : vector<1x64xi1> to vector<32x64xi1>
    %461 = vector.broadcast %cst_180 : f32 to vector<32x64xf32>
    %462 = arith.select %460, %458, %461 : vector<32x64xi1>, vector<32x64xf32>
    %c1_i32_181 = arith.constant 1 : i32
    %463 = tpu.dynamic_rotate %447 by %c1_i32_181 dim 1 : vector<32x64xf32>, i32 -> vector<32x64xf32>
    %cst_182 = arith.constant 0.000000e+00 : f32
    %464 = vector.shape_cast %75 : vector<1x64xi1> to vector<1x64xi1>
    %465 = vector.broadcast %464 : vector<1x64xi1> to vector<32x64xi1>
    %466 = vector.broadcast %cst_182 : f32 to vector<32x64xf32>
    %467 = arith.select %465, %463, %466 : vector<32x64xi1>, vector<32x64xf32>
    %c63_i32_183 = arith.constant 63 : i32
    %468 = tpu.dynamic_rotate %447 by %c63_i32_183 dim 1 : vector<32x64xf32>, i32 -> vector<32x64xf32>
    %cst_184 = arith.constant 0.000000e+00 : f32
    %469 = vector.shape_cast %77 : vector<1x64xi1> to vector<1x64xi1>
    %470 = vector.broadcast %469 : vector<1x64xi1> to vector<32x64xi1>
    %471 = vector.broadcast %cst_184 : f32 to vector<32x64xf32>
    %472 = arith.select %470, %468, %471 : vector<32x64xi1>, vector<32x64xf32>
    %c57_i32_185 = arith.constant 57 : i32
    %473 = tpu.dynamic_rotate %447 by %c57_i32_185 dim 1 : vector<32x64xf32>, i32 -> vector<32x64xf32>
    %cst_186 = arith.constant 0.000000e+00 : f32
    %474 = vector.shape_cast %82 : vector<1x64xi1> to vector<1x64xi1>
    %475 = vector.broadcast %474 : vector<1x64xi1> to vector<32x64xi1>
    %476 = vector.broadcast %cst_186 : f32 to vector<32x64xf32>
    %477 = arith.select %475, %473, %476 : vector<32x64xi1>, vector<32x64xf32>
    %c56_i32_187 = arith.constant 56 : i32
    %478 = tpu.dynamic_rotate %447 by %c56_i32_187 dim 1 : vector<32x64xf32>, i32 -> vector<32x64xf32>
    %cst_188 = arith.constant 0.000000e+00 : f32
    %479 = vector.shape_cast %84 : vector<1x64xi1> to vector<1x64xi1>
    %480 = vector.broadcast %479 : vector<1x64xi1> to vector<32x64xi1>
    %481 = vector.broadcast %cst_188 : f32 to vector<32x64xf32>
    %482 = arith.select %480, %478, %481 : vector<32x64xi1>, vector<32x64xf32>
    %c55_i32_189 = arith.constant 55 : i32
    %483 = tpu.dynamic_rotate %447 by %c55_i32_189 dim 1 : vector<32x64xf32>, i32 -> vector<32x64xf32>
    %cst_190 = arith.constant 0.000000e+00 : f32
    %484 = vector.shape_cast %89 : vector<1x64xi1> to vector<1x64xi1>
    %485 = vector.broadcast %484 : vector<1x64xi1> to vector<32x64xi1>
    %486 = vector.broadcast %cst_190 : f32 to vector<32x64xf32>
    %487 = arith.select %485, %483, %486 : vector<32x64xi1>, vector<32x64xf32>
    %488 = tpu.concatenate %452, %457, %462, %467, %447, %472, %477, %482, %487 in 0 : vector<32x64xf32>, vector<32x64xf32>, vector<32x64xf32>, vector<32x64xf32>, vector<32x64xf32>, vector<32x64xf32>, vector<32x64xf32>, vector<32x64xf32>, vector<32x64xf32> -> vector<288x64xf32>
    %489 = arith.truncf %488 : vector<288x64xf32> to vector<288x64xbf16>
    %c0_191 = arith.constant 0 : index
    %c0_192 = arith.constant 0 : index
    %490 = vector.load %arg14[%c0_191, %c0_192] : memref<16x288xbf16, #tpu.memory_space<vmem>>, vector<16x288xbf16>
    %cst_193 = arith.constant dense<0.000000e+00> : vector<16x64xf32>
    %491 = tpu.matmul %490, %489, %cst_193 {dimension_numbers = #tpu.dot_dimension_numbers<[1], [0], [0], [1], [0, 0, 1, 1], [], []>} : vector<16x288xbf16>, vector<288x64xbf16>, vector<16x64xf32> -> vector<16x64xf32>
    %c9_i32_194 = arith.constant 9 : i32
    %492 = tpu.dynamic_rotate %339 by %c9_i32_194 dim 1 : vector<16x64xf32>, i32 -> vector<16x64xf32>
    %cst_195 = arith.constant 0.000000e+00 : f32
    %493 = vector.shape_cast %66 : vector<1x64xi1> to vector<1x64xi1>
    %494 = vector.broadcast %493 : vector<1x64xi1> to vector<16x64xi1>
    %495 = vector.broadcast %cst_195 : f32 to vector<16x64xf32>
    %496 = arith.select %494, %492, %495 : vector<16x64xi1>, vector<16x64xf32>
    %c8_i32_196 = arith.constant 8 : i32
    %497 = tpu.dynamic_rotate %339 by %c8_i32_196 dim 1 : vector<16x64xf32>, i32 -> vector<16x64xf32>
    %cst_197 = arith.constant 0.000000e+00 : f32
    %498 = vector.shape_cast %68 : vector<1x64xi1> to vector<1x64xi1>
    %499 = vector.broadcast %498 : vector<1x64xi1> to vector<16x64xi1>
    %500 = vector.broadcast %cst_197 : f32 to vector<16x64xf32>
    %501 = arith.select %499, %497, %500 : vector<16x64xi1>, vector<16x64xf32>
    %c7_i32_198 = arith.constant 7 : i32
    %502 = tpu.dynamic_rotate %339 by %c7_i32_198 dim 1 : vector<16x64xf32>, i32 -> vector<16x64xf32>
    %cst_199 = arith.constant 0.000000e+00 : f32
    %503 = vector.shape_cast %73 : vector<1x64xi1> to vector<1x64xi1>
    %504 = vector.broadcast %503 : vector<1x64xi1> to vector<16x64xi1>
    %505 = vector.broadcast %cst_199 : f32 to vector<16x64xf32>
    %506 = arith.select %504, %502, %505 : vector<16x64xi1>, vector<16x64xf32>
    %c1_i32_200 = arith.constant 1 : i32
    %507 = tpu.dynamic_rotate %339 by %c1_i32_200 dim 1 : vector<16x64xf32>, i32 -> vector<16x64xf32>
    %cst_201 = arith.constant 0.000000e+00 : f32
    %508 = vector.shape_cast %75 : vector<1x64xi1> to vector<1x64xi1>
    %509 = vector.broadcast %508 : vector<1x64xi1> to vector<16x64xi1>
    %510 = vector.broadcast %cst_201 : f32 to vector<16x64xf32>
    %511 = arith.select %509, %507, %510 : vector<16x64xi1>, vector<16x64xf32>
    %c63_i32_202 = arith.constant 63 : i32
    %512 = tpu.dynamic_rotate %339 by %c63_i32_202 dim 1 : vector<16x64xf32>, i32 -> vector<16x64xf32>
    %cst_203 = arith.constant 0.000000e+00 : f32
    %513 = vector.shape_cast %77 : vector<1x64xi1> to vector<1x64xi1>
    %514 = vector.broadcast %513 : vector<1x64xi1> to vector<16x64xi1>
    %515 = vector.broadcast %cst_203 : f32 to vector<16x64xf32>
    %516 = arith.select %514, %512, %515 : vector<16x64xi1>, vector<16x64xf32>
    %c57_i32_204 = arith.constant 57 : i32
    %517 = tpu.dynamic_rotate %339 by %c57_i32_204 dim 1 : vector<16x64xf32>, i32 -> vector<16x64xf32>
    %cst_205 = arith.constant 0.000000e+00 : f32
    %518 = vector.shape_cast %82 : vector<1x64xi1> to vector<1x64xi1>
    %519 = vector.broadcast %518 : vector<1x64xi1> to vector<16x64xi1>
    %520 = vector.broadcast %cst_205 : f32 to vector<16x64xf32>
    %521 = arith.select %519, %517, %520 : vector<16x64xi1>, vector<16x64xf32>
    %c56_i32_206 = arith.constant 56 : i32
    %522 = tpu.dynamic_rotate %339 by %c56_i32_206 dim 1 : vector<16x64xf32>, i32 -> vector<16x64xf32>
    %cst_207 = arith.constant 0.000000e+00 : f32
    %523 = vector.shape_cast %84 : vector<1x64xi1> to vector<1x64xi1>
    %524 = vector.broadcast %523 : vector<1x64xi1> to vector<16x64xi1>
    %525 = vector.broadcast %cst_207 : f32 to vector<16x64xf32>
    %526 = arith.select %524, %522, %525 : vector<16x64xi1>, vector<16x64xf32>
    %c55_i32_208 = arith.constant 55 : i32
    %527 = tpu.dynamic_rotate %339 by %c55_i32_208 dim 1 : vector<16x64xf32>, i32 -> vector<16x64xf32>
    %cst_209 = arith.constant 0.000000e+00 : f32
    %528 = vector.shape_cast %89 : vector<1x64xi1> to vector<1x64xi1>
    %529 = vector.broadcast %528 : vector<1x64xi1> to vector<16x64xi1>
    %530 = vector.broadcast %cst_209 : f32 to vector<16x64xf32>
    %531 = arith.select %529, %527, %530 : vector<16x64xi1>, vector<16x64xf32>
    %532 = tpu.concatenate %496, %501, %506, %511, %339, %516, %521, %526, %531 in 0 : vector<16x64xf32>, vector<16x64xf32>, vector<16x64xf32>, vector<16x64xf32>, vector<16x64xf32>, vector<16x64xf32>, vector<16x64xf32>, vector<16x64xf32>, vector<16x64xf32> -> vector<144x64xf32>
    %533 = arith.truncf %532 : vector<144x64xf32> to vector<144x64xbf16>
    %c0_210 = arith.constant 0 : index
    %c0_211 = arith.constant 0 : index
    %534 = vector.load %arg15[%c0_210, %c0_211] : memref<16x144xbf16, #tpu.memory_space<vmem>>, vector<16x144xbf16>
    %cst_212 = arith.constant dense<0.000000e+00> : vector<16x64xf32>
    %535 = tpu.matmul %534, %533, %cst_212 {dimension_numbers = #tpu.dot_dimension_numbers<[1], [0], [0], [1], [0, 0, 1, 1], [], []>} : vector<16x144xbf16>, vector<144x64xbf16>, vector<16x64xf32> -> vector<16x64xf32>
    %536 = arith.addf %491, %535 : vector<16x64xf32>
    %c0_213 = arith.constant 0 : index
    %c0_214 = arith.constant 0 : index
    %537 = vector.load %arg16[%c0_213, %c0_214] : memref<16x1xf32, #tpu.memory_space<vmem>>, vector<16x1xf32>
    %538 = vector.broadcast %537 : vector<16x1xf32> to vector<16x64xf32>
    %539 = arith.addf %536, %538 : vector<16x64xf32>
    %cst_215 = arith.constant 0.000000e+00 : f32
    %540 = vector.broadcast %cst_215 : f32 to vector<16x64xf32>
    %541 = arith.maximumf %539, %540 : vector<16x64xf32>
    %c9_i32_216 = arith.constant 9 : i32
    %542 = tpu.dynamic_rotate %541 by %c9_i32_216 dim 1 : vector<16x64xf32>, i32 -> vector<16x64xf32>
    %cst_217 = arith.constant 0.000000e+00 : f32
    %543 = vector.shape_cast %66 : vector<1x64xi1> to vector<1x64xi1>
    %544 = vector.broadcast %543 : vector<1x64xi1> to vector<16x64xi1>
    %545 = vector.broadcast %cst_217 : f32 to vector<16x64xf32>
    %546 = arith.select %544, %542, %545 : vector<16x64xi1>, vector<16x64xf32>
    %c8_i32_218 = arith.constant 8 : i32
    %547 = tpu.dynamic_rotate %541 by %c8_i32_218 dim 1 : vector<16x64xf32>, i32 -> vector<16x64xf32>
    %cst_219 = arith.constant 0.000000e+00 : f32
    %548 = vector.shape_cast %68 : vector<1x64xi1> to vector<1x64xi1>
    %549 = vector.broadcast %548 : vector<1x64xi1> to vector<16x64xi1>
    %550 = vector.broadcast %cst_219 : f32 to vector<16x64xf32>
    %551 = arith.select %549, %547, %550 : vector<16x64xi1>, vector<16x64xf32>
    %c7_i32_220 = arith.constant 7 : i32
    %552 = tpu.dynamic_rotate %541 by %c7_i32_220 dim 1 : vector<16x64xf32>, i32 -> vector<16x64xf32>
    %cst_221 = arith.constant 0.000000e+00 : f32
    %553 = vector.shape_cast %73 : vector<1x64xi1> to vector<1x64xi1>
    %554 = vector.broadcast %553 : vector<1x64xi1> to vector<16x64xi1>
    %555 = vector.broadcast %cst_221 : f32 to vector<16x64xf32>
    %556 = arith.select %554, %552, %555 : vector<16x64xi1>, vector<16x64xf32>
    %c1_i32_222 = arith.constant 1 : i32
    %557 = tpu.dynamic_rotate %541 by %c1_i32_222 dim 1 : vector<16x64xf32>, i32 -> vector<16x64xf32>
    %cst_223 = arith.constant 0.000000e+00 : f32
    %558 = vector.shape_cast %75 : vector<1x64xi1> to vector<1x64xi1>
    %559 = vector.broadcast %558 : vector<1x64xi1> to vector<16x64xi1>
    %560 = vector.broadcast %cst_223 : f32 to vector<16x64xf32>
    %561 = arith.select %559, %557, %560 : vector<16x64xi1>, vector<16x64xf32>
    %c63_i32_224 = arith.constant 63 : i32
    %562 = tpu.dynamic_rotate %541 by %c63_i32_224 dim 1 : vector<16x64xf32>, i32 -> vector<16x64xf32>
    %cst_225 = arith.constant 0.000000e+00 : f32
    %563 = vector.shape_cast %77 : vector<1x64xi1> to vector<1x64xi1>
    %564 = vector.broadcast %563 : vector<1x64xi1> to vector<16x64xi1>
    %565 = vector.broadcast %cst_225 : f32 to vector<16x64xf32>
    %566 = arith.select %564, %562, %565 : vector<16x64xi1>, vector<16x64xf32>
    %c57_i32_226 = arith.constant 57 : i32
    %567 = tpu.dynamic_rotate %541 by %c57_i32_226 dim 1 : vector<16x64xf32>, i32 -> vector<16x64xf32>
    %cst_227 = arith.constant 0.000000e+00 : f32
    %568 = vector.shape_cast %82 : vector<1x64xi1> to vector<1x64xi1>
    %569 = vector.broadcast %568 : vector<1x64xi1> to vector<16x64xi1>
    %570 = vector.broadcast %cst_227 : f32 to vector<16x64xf32>
    %571 = arith.select %569, %567, %570 : vector<16x64xi1>, vector<16x64xf32>
    %c56_i32_228 = arith.constant 56 : i32
    %572 = tpu.dynamic_rotate %541 by %c56_i32_228 dim 1 : vector<16x64xf32>, i32 -> vector<16x64xf32>
    %cst_229 = arith.constant 0.000000e+00 : f32
    %573 = vector.shape_cast %84 : vector<1x64xi1> to vector<1x64xi1>
    %574 = vector.broadcast %573 : vector<1x64xi1> to vector<16x64xi1>
    %575 = vector.broadcast %cst_229 : f32 to vector<16x64xf32>
    %576 = arith.select %574, %572, %575 : vector<16x64xi1>, vector<16x64xf32>
    %c55_i32_230 = arith.constant 55 : i32
    %577 = tpu.dynamic_rotate %541 by %c55_i32_230 dim 1 : vector<16x64xf32>, i32 -> vector<16x64xf32>
    %cst_231 = arith.constant 0.000000e+00 : f32
    %578 = vector.shape_cast %89 : vector<1x64xi1> to vector<1x64xi1>
    %579 = vector.broadcast %578 : vector<1x64xi1> to vector<16x64xi1>
    %580 = vector.broadcast %cst_231 : f32 to vector<16x64xf32>
    %581 = arith.select %579, %577, %580 : vector<16x64xi1>, vector<16x64xf32>
    %582 = tpu.concatenate %546, %551, %556, %561, %541, %566, %571, %576, %581 in 0 : vector<16x64xf32>, vector<16x64xf32>, vector<16x64xf32>, vector<16x64xf32>, vector<16x64xf32>, vector<16x64xf32>, vector<16x64xf32>, vector<16x64xf32>, vector<16x64xf32> -> vector<144x64xf32>
    %583 = arith.truncf %582 : vector<144x64xf32> to vector<144x64xbf16>
    %c0_232 = arith.constant 0 : index
    %c0_233 = arith.constant 0 : index
    %584 = vector.load %arg17[%c0_232, %c0_233] : memref<16x144xbf16, #tpu.memory_space<vmem>>, vector<16x144xbf16>
    %cst_234 = arith.constant dense<0.000000e+00> : vector<16x64xf32>
    %585 = tpu.matmul %584, %583, %cst_234 {dimension_numbers = #tpu.dot_dimension_numbers<[1], [0], [0], [1], [0, 0, 1, 1], [], []>} : vector<16x144xbf16>, vector<144x64xbf16>, vector<16x64xf32> -> vector<16x64xf32>
    %c0_235 = arith.constant 0 : index
    %c0_236 = arith.constant 0 : index
    %586 = vector.load %arg18[%c0_235, %c0_236] : memref<16x1xf32, #tpu.memory_space<vmem>>, vector<16x1xf32>
    %587 = vector.broadcast %586 : vector<16x1xf32> to vector<16x64xf32>
    %588 = arith.addf %585, %587 : vector<16x64xf32>
    %cst_237 = arith.constant 0.000000e+00 : f32
    %589 = vector.broadcast %cst_237 : f32 to vector<16x64xf32>
    %590 = arith.maximumf %588, %589 : vector<16x64xf32>
    %591 = arith.truncf %590 : vector<16x64xf32> to vector<16x64xbf16>
    %c0_238 = arith.constant 0 : index
    %c0_239 = arith.constant 0 : index
    %592 = vector.load %arg29[%c0_238, %c0_239] : memref<64x256xbf16, #tpu.memory_space<vmem>>, vector<64x256xbf16>
    %cst_240 = arith.constant dense<0.000000e+00> : vector<16x256xf32>
    %593 = tpu.matmul %591, %592, %cst_240 {dimension_numbers = #tpu.dot_dimension_numbers<[1], [0], [0], [1], [0, 0, 1, 1], [], []>} : vector<16x64xbf16>, vector<64x256xbf16>, vector<16x256xf32> -> vector<16x256xf32>
    %c17_i32_241 = arith.constant 17 : i32
    %594 = tpu.dynamic_rotate %593 by %c17_i32_241 dim 1 : vector<16x256xf32>, i32 -> vector<16x256xf32>
    %cst_242 = arith.constant 0.000000e+00 : f32
    %595 = vector.shape_cast %21 : vector<1x256xi1> to vector<1x256xi1>
    %596 = vector.broadcast %595 : vector<1x256xi1> to vector<16x256xi1>
    %597 = vector.broadcast %cst_242 : f32 to vector<16x256xf32>
    %598 = arith.select %596, %594, %597 : vector<16x256xi1>, vector<16x256xf32>
    %c16_i32_243 = arith.constant 16 : i32
    %599 = tpu.dynamic_rotate %593 by %c16_i32_243 dim 1 : vector<16x256xf32>, i32 -> vector<16x256xf32>
    %cst_244 = arith.constant 0.000000e+00 : f32
    %600 = vector.shape_cast %23 : vector<1x256xi1> to vector<1x256xi1>
    %601 = vector.broadcast %600 : vector<1x256xi1> to vector<16x256xi1>
    %602 = vector.broadcast %cst_244 : f32 to vector<16x256xf32>
    %603 = arith.select %601, %599, %602 : vector<16x256xi1>, vector<16x256xf32>
    %c15_i32_245 = arith.constant 15 : i32
    %604 = tpu.dynamic_rotate %593 by %c15_i32_245 dim 1 : vector<16x256xf32>, i32 -> vector<16x256xf32>
    %cst_246 = arith.constant 0.000000e+00 : f32
    %605 = vector.shape_cast %28 : vector<1x256xi1> to vector<1x256xi1>
    %606 = vector.broadcast %605 : vector<1x256xi1> to vector<16x256xi1>
    %607 = vector.broadcast %cst_246 : f32 to vector<16x256xf32>
    %608 = arith.select %606, %604, %607 : vector<16x256xi1>, vector<16x256xf32>
    %c1_i32_247 = arith.constant 1 : i32
    %609 = tpu.dynamic_rotate %593 by %c1_i32_247 dim 1 : vector<16x256xf32>, i32 -> vector<16x256xf32>
    %cst_248 = arith.constant 0.000000e+00 : f32
    %610 = vector.shape_cast %30 : vector<1x256xi1> to vector<1x256xi1>
    %611 = vector.broadcast %610 : vector<1x256xi1> to vector<16x256xi1>
    %612 = vector.broadcast %cst_248 : f32 to vector<16x256xf32>
    %613 = arith.select %611, %609, %612 : vector<16x256xi1>, vector<16x256xf32>
    %c255_i32_249 = arith.constant 255 : i32
    %614 = tpu.dynamic_rotate %593 by %c255_i32_249 dim 1 : vector<16x256xf32>, i32 -> vector<16x256xf32>
    %cst_250 = arith.constant 0.000000e+00 : f32
    %615 = vector.shape_cast %32 : vector<1x256xi1> to vector<1x256xi1>
    %616 = vector.broadcast %615 : vector<1x256xi1> to vector<16x256xi1>
    %617 = vector.broadcast %cst_250 : f32 to vector<16x256xf32>
    %618 = arith.select %616, %614, %617 : vector<16x256xi1>, vector<16x256xf32>
    %c241_i32_251 = arith.constant 241 : i32
    %619 = tpu.dynamic_rotate %593 by %c241_i32_251 dim 1 : vector<16x256xf32>, i32 -> vector<16x256xf32>
    %cst_252 = arith.constant 0.000000e+00 : f32
    %620 = vector.shape_cast %37 : vector<1x256xi1> to vector<1x256xi1>
    %621 = vector.broadcast %620 : vector<1x256xi1> to vector<16x256xi1>
    %622 = vector.broadcast %cst_252 : f32 to vector<16x256xf32>
    %623 = arith.select %621, %619, %622 : vector<16x256xi1>, vector<16x256xf32>
    %c240_i32_253 = arith.constant 240 : i32
    %624 = tpu.dynamic_rotate %593 by %c240_i32_253 dim 1 : vector<16x256xf32>, i32 -> vector<16x256xf32>
    %cst_254 = arith.constant 0.000000e+00 : f32
    %625 = vector.shape_cast %39 : vector<1x256xi1> to vector<1x256xi1>
    %626 = vector.broadcast %625 : vector<1x256xi1> to vector<16x256xi1>
    %627 = vector.broadcast %cst_254 : f32 to vector<16x256xf32>
    %628 = arith.select %626, %624, %627 : vector<16x256xi1>, vector<16x256xf32>
    %c239_i32_255 = arith.constant 239 : i32
    %629 = tpu.dynamic_rotate %593 by %c239_i32_255 dim 1 : vector<16x256xf32>, i32 -> vector<16x256xf32>
    %cst_256 = arith.constant 0.000000e+00 : f32
    %630 = vector.shape_cast %44 : vector<1x256xi1> to vector<1x256xi1>
    %631 = vector.broadcast %630 : vector<1x256xi1> to vector<16x256xi1>
    %632 = vector.broadcast %cst_256 : f32 to vector<16x256xf32>
    %633 = arith.select %631, %629, %632 : vector<16x256xi1>, vector<16x256xf32>
    %634 = tpu.concatenate %598, %603, %608, %613, %593, %618, %623, %628, %633 in 0 : vector<16x256xf32>, vector<16x256xf32>, vector<16x256xf32>, vector<16x256xf32>, vector<16x256xf32>, vector<16x256xf32>, vector<16x256xf32>, vector<16x256xf32>, vector<16x256xf32> -> vector<144x256xf32>
    %635 = arith.truncf %634 : vector<144x256xf32> to vector<144x256xbf16>
    %c0_257 = arith.constant 0 : index
    %c0_258 = arith.constant 0 : index
    %636 = vector.load %arg19[%c0_257, %c0_258] : memref<8x144xbf16, #tpu.memory_space<vmem>>, vector<8x144xbf16>
    %cst_259 = arith.constant dense<0.000000e+00> : vector<8x256xf32>
    %637 = tpu.matmul %636, %635, %cst_259 {dimension_numbers = #tpu.dot_dimension_numbers<[1], [0], [0], [1], [0, 0, 1, 1], [], []>} : vector<8x144xbf16>, vector<144x256xbf16>, vector<8x256xf32> -> vector<8x256xf32>
    %c17_i32_260 = arith.constant 17 : i32
    %638 = tpu.dynamic_rotate %234 by %c17_i32_260 dim 1 : vector<8x256xf32>, i32 -> vector<8x256xf32>
    %cst_261 = arith.constant 0.000000e+00 : f32
    %639 = vector.shape_cast %21 : vector<1x256xi1> to vector<1x256xi1>
    %640 = vector.broadcast %639 : vector<1x256xi1> to vector<8x256xi1>
    %641 = vector.broadcast %cst_261 : f32 to vector<8x256xf32>
    %642 = arith.select %640, %638, %641 : vector<8x256xi1>, vector<8x256xf32>
    %c16_i32_262 = arith.constant 16 : i32
    %643 = tpu.dynamic_rotate %234 by %c16_i32_262 dim 1 : vector<8x256xf32>, i32 -> vector<8x256xf32>
    %cst_263 = arith.constant 0.000000e+00 : f32
    %644 = vector.shape_cast %23 : vector<1x256xi1> to vector<1x256xi1>
    %645 = vector.broadcast %644 : vector<1x256xi1> to vector<8x256xi1>
    %646 = vector.broadcast %cst_263 : f32 to vector<8x256xf32>
    %647 = arith.select %645, %643, %646 : vector<8x256xi1>, vector<8x256xf32>
    %c15_i32_264 = arith.constant 15 : i32
    %648 = tpu.dynamic_rotate %234 by %c15_i32_264 dim 1 : vector<8x256xf32>, i32 -> vector<8x256xf32>
    %cst_265 = arith.constant 0.000000e+00 : f32
    %649 = vector.shape_cast %28 : vector<1x256xi1> to vector<1x256xi1>
    %650 = vector.broadcast %649 : vector<1x256xi1> to vector<8x256xi1>
    %651 = vector.broadcast %cst_265 : f32 to vector<8x256xf32>
    %652 = arith.select %650, %648, %651 : vector<8x256xi1>, vector<8x256xf32>
    %c1_i32_266 = arith.constant 1 : i32
    %653 = tpu.dynamic_rotate %234 by %c1_i32_266 dim 1 : vector<8x256xf32>, i32 -> vector<8x256xf32>
    %cst_267 = arith.constant 0.000000e+00 : f32
    %654 = vector.shape_cast %30 : vector<1x256xi1> to vector<1x256xi1>
    %655 = vector.broadcast %654 : vector<1x256xi1> to vector<8x256xi1>
    %656 = vector.broadcast %cst_267 : f32 to vector<8x256xf32>
    %657 = arith.select %655, %653, %656 : vector<8x256xi1>, vector<8x256xf32>
    %c255_i32_268 = arith.constant 255 : i32
    %658 = tpu.dynamic_rotate %234 by %c255_i32_268 dim 1 : vector<8x256xf32>, i32 -> vector<8x256xf32>
    %cst_269 = arith.constant 0.000000e+00 : f32
    %659 = vector.shape_cast %32 : vector<1x256xi1> to vector<1x256xi1>
    %660 = vector.broadcast %659 : vector<1x256xi1> to vector<8x256xi1>
    %661 = vector.broadcast %cst_269 : f32 to vector<8x256xf32>
    %662 = arith.select %660, %658, %661 : vector<8x256xi1>, vector<8x256xf32>
    %c241_i32_270 = arith.constant 241 : i32
    %663 = tpu.dynamic_rotate %234 by %c241_i32_270 dim 1 : vector<8x256xf32>, i32 -> vector<8x256xf32>
    %cst_271 = arith.constant 0.000000e+00 : f32
    %664 = vector.shape_cast %37 : vector<1x256xi1> to vector<1x256xi1>
    %665 = vector.broadcast %664 : vector<1x256xi1> to vector<8x256xi1>
    %666 = vector.broadcast %cst_271 : f32 to vector<8x256xf32>
    %667 = arith.select %665, %663, %666 : vector<8x256xi1>, vector<8x256xf32>
    %c240_i32_272 = arith.constant 240 : i32
    %668 = tpu.dynamic_rotate %234 by %c240_i32_272 dim 1 : vector<8x256xf32>, i32 -> vector<8x256xf32>
    %cst_273 = arith.constant 0.000000e+00 : f32
    %669 = vector.shape_cast %39 : vector<1x256xi1> to vector<1x256xi1>
    %670 = vector.broadcast %669 : vector<1x256xi1> to vector<8x256xi1>
    %671 = vector.broadcast %cst_273 : f32 to vector<8x256xf32>
    %672 = arith.select %670, %668, %671 : vector<8x256xi1>, vector<8x256xf32>
    %c239_i32_274 = arith.constant 239 : i32
    %673 = tpu.dynamic_rotate %234 by %c239_i32_274 dim 1 : vector<8x256xf32>, i32 -> vector<8x256xf32>
    %cst_275 = arith.constant 0.000000e+00 : f32
    %674 = vector.shape_cast %44 : vector<1x256xi1> to vector<1x256xi1>
    %675 = vector.broadcast %674 : vector<1x256xi1> to vector<8x256xi1>
    %676 = vector.broadcast %cst_275 : f32 to vector<8x256xf32>
    %677 = arith.select %675, %673, %676 : vector<8x256xi1>, vector<8x256xf32>
    %678 = tpu.concatenate %642, %647, %652, %657, %234, %662, %667, %672, %677 in 0 : vector<8x256xf32>, vector<8x256xf32>, vector<8x256xf32>, vector<8x256xf32>, vector<8x256xf32>, vector<8x256xf32>, vector<8x256xf32>, vector<8x256xf32>, vector<8x256xf32> -> vector<72x256xf32>
    %679 = arith.truncf %678 : vector<72x256xf32> to vector<72x256xbf16>
    %c0_276 = arith.constant 0 : index
    %c0_277 = arith.constant 0 : index
    %680 = vector.load %arg20[%c0_276, %c0_277] : memref<8x72xbf16, #tpu.memory_space<vmem>>, vector<8x72xbf16>
    %cst_278 = arith.constant dense<0.000000e+00> : vector<8x256xf32>
    %681 = tpu.matmul %680, %679, %cst_278 {dimension_numbers = #tpu.dot_dimension_numbers<[1], [0], [0], [1], [0, 0, 1, 1], [], []>} : vector<8x72xbf16>, vector<72x256xbf16>, vector<8x256xf32> -> vector<8x256xf32>
    %682 = arith.addf %637, %681 : vector<8x256xf32>
    %c0_279 = arith.constant 0 : index
    %c0_280 = arith.constant 0 : index
    %683 = vector.load %arg21[%c0_279, %c0_280] : memref<8x1xf32, #tpu.memory_space<vmem>>, vector<8x1xf32>
    %684 = vector.broadcast %683 : vector<8x1xf32> to vector<8x256xf32>
    %685 = arith.addf %682, %684 : vector<8x256xf32>
    %cst_281 = arith.constant 0.000000e+00 : f32
    %686 = vector.broadcast %cst_281 : f32 to vector<8x256xf32>
    %687 = arith.maximumf %685, %686 : vector<8x256xf32>
    %c17_i32_282 = arith.constant 17 : i32
    %688 = tpu.dynamic_rotate %687 by %c17_i32_282 dim 1 : vector<8x256xf32>, i32 -> vector<8x256xf32>
    %cst_283 = arith.constant 0.000000e+00 : f32
    %689 = vector.shape_cast %21 : vector<1x256xi1> to vector<1x256xi1>
    %690 = vector.broadcast %689 : vector<1x256xi1> to vector<8x256xi1>
    %691 = vector.broadcast %cst_283 : f32 to vector<8x256xf32>
    %692 = arith.select %690, %688, %691 : vector<8x256xi1>, vector<8x256xf32>
    %c16_i32_284 = arith.constant 16 : i32
    %693 = tpu.dynamic_rotate %687 by %c16_i32_284 dim 1 : vector<8x256xf32>, i32 -> vector<8x256xf32>
    %cst_285 = arith.constant 0.000000e+00 : f32
    %694 = vector.shape_cast %23 : vector<1x256xi1> to vector<1x256xi1>
    %695 = vector.broadcast %694 : vector<1x256xi1> to vector<8x256xi1>
    %696 = vector.broadcast %cst_285 : f32 to vector<8x256xf32>
    %697 = arith.select %695, %693, %696 : vector<8x256xi1>, vector<8x256xf32>
    %c15_i32_286 = arith.constant 15 : i32
    %698 = tpu.dynamic_rotate %687 by %c15_i32_286 dim 1 : vector<8x256xf32>, i32 -> vector<8x256xf32>
    %cst_287 = arith.constant 0.000000e+00 : f32
    %699 = vector.shape_cast %28 : vector<1x256xi1> to vector<1x256xi1>
    %700 = vector.broadcast %699 : vector<1x256xi1> to vector<8x256xi1>
    %701 = vector.broadcast %cst_287 : f32 to vector<8x256xf32>
    %702 = arith.select %700, %698, %701 : vector<8x256xi1>, vector<8x256xf32>
    %c1_i32_288 = arith.constant 1 : i32
    %703 = tpu.dynamic_rotate %687 by %c1_i32_288 dim 1 : vector<8x256xf32>, i32 -> vector<8x256xf32>
    %cst_289 = arith.constant 0.000000e+00 : f32
    %704 = vector.shape_cast %30 : vector<1x256xi1> to vector<1x256xi1>
    %705 = vector.broadcast %704 : vector<1x256xi1> to vector<8x256xi1>
    %706 = vector.broadcast %cst_289 : f32 to vector<8x256xf32>
    %707 = arith.select %705, %703, %706 : vector<8x256xi1>, vector<8x256xf32>
    %c255_i32_290 = arith.constant 255 : i32
    %708 = tpu.dynamic_rotate %687 by %c255_i32_290 dim 1 : vector<8x256xf32>, i32 -> vector<8x256xf32>
    %cst_291 = arith.constant 0.000000e+00 : f32
    %709 = vector.shape_cast %32 : vector<1x256xi1> to vector<1x256xi1>
    %710 = vector.broadcast %709 : vector<1x256xi1> to vector<8x256xi1>
    %711 = vector.broadcast %cst_291 : f32 to vector<8x256xf32>
    %712 = arith.select %710, %708, %711 : vector<8x256xi1>, vector<8x256xf32>
    %c241_i32_292 = arith.constant 241 : i32
    %713 = tpu.dynamic_rotate %687 by %c241_i32_292 dim 1 : vector<8x256xf32>, i32 -> vector<8x256xf32>
    %cst_293 = arith.constant 0.000000e+00 : f32
    %714 = vector.shape_cast %37 : vector<1x256xi1> to vector<1x256xi1>
    %715 = vector.broadcast %714 : vector<1x256xi1> to vector<8x256xi1>
    %716 = vector.broadcast %cst_293 : f32 to vector<8x256xf32>
    %717 = arith.select %715, %713, %716 : vector<8x256xi1>, vector<8x256xf32>
    %c240_i32_294 = arith.constant 240 : i32
    %718 = tpu.dynamic_rotate %687 by %c240_i32_294 dim 1 : vector<8x256xf32>, i32 -> vector<8x256xf32>
    %cst_295 = arith.constant 0.000000e+00 : f32
    %719 = vector.shape_cast %39 : vector<1x256xi1> to vector<1x256xi1>
    %720 = vector.broadcast %719 : vector<1x256xi1> to vector<8x256xi1>
    %721 = vector.broadcast %cst_295 : f32 to vector<8x256xf32>
    %722 = arith.select %720, %718, %721 : vector<8x256xi1>, vector<8x256xf32>
    %c239_i32_296 = arith.constant 239 : i32
    %723 = tpu.dynamic_rotate %687 by %c239_i32_296 dim 1 : vector<8x256xf32>, i32 -> vector<8x256xf32>
    %cst_297 = arith.constant 0.000000e+00 : f32
    %724 = vector.shape_cast %44 : vector<1x256xi1> to vector<1x256xi1>
    %725 = vector.broadcast %724 : vector<1x256xi1> to vector<8x256xi1>
    %726 = vector.broadcast %cst_297 : f32 to vector<8x256xf32>
    %727 = arith.select %725, %723, %726 : vector<8x256xi1>, vector<8x256xf32>
    %728 = tpu.concatenate %692, %697, %702, %707, %687, %712, %717, %722, %727 in 0 : vector<8x256xf32>, vector<8x256xf32>, vector<8x256xf32>, vector<8x256xf32>, vector<8x256xf32>, vector<8x256xf32>, vector<8x256xf32>, vector<8x256xf32>, vector<8x256xf32> -> vector<72x256xf32>
    %729 = arith.truncf %728 : vector<72x256xf32> to vector<72x256xbf16>
    %c0_298 = arith.constant 0 : index
    %c0_299 = arith.constant 0 : index
    %730 = vector.load %arg22[%c0_298, %c0_299] : memref<8x72xbf16, #tpu.memory_space<vmem>>, vector<8x72xbf16>
    %cst_300 = arith.constant dense<0.000000e+00> : vector<8x256xf32>
    %731 = tpu.matmul %730, %729, %cst_300 {dimension_numbers = #tpu.dot_dimension_numbers<[1], [0], [0], [1], [0, 0, 1, 1], [], []>} : vector<8x72xbf16>, vector<72x256xbf16>, vector<8x256xf32> -> vector<8x256xf32>
    %c0_301 = arith.constant 0 : index
    %c0_302 = arith.constant 0 : index
    %732 = vector.load %arg23[%c0_301, %c0_302] : memref<8x1xf32, #tpu.memory_space<vmem>>, vector<8x1xf32>
    %733 = vector.broadcast %732 : vector<8x1xf32> to vector<8x256xf32>
    %734 = arith.addf %731, %733 : vector<8x256xf32>
    %cst_303 = arith.constant 0.000000e+00 : f32
    %735 = vector.broadcast %cst_303 : f32 to vector<8x256xf32>
    %736 = arith.maximumf %734, %735 : vector<8x256xf32>
    %c17_i32_304 = arith.constant 17 : i32
    %737 = tpu.dynamic_rotate %736 by %c17_i32_304 dim 1 : vector<8x256xf32>, i32 -> vector<8x256xf32>
    %cst_305 = arith.constant 0.000000e+00 : f32
    %738 = vector.shape_cast %21 : vector<1x256xi1> to vector<1x256xi1>
    %739 = vector.broadcast %738 : vector<1x256xi1> to vector<8x256xi1>
    %740 = vector.broadcast %cst_305 : f32 to vector<8x256xf32>
    %741 = arith.select %739, %737, %740 : vector<8x256xi1>, vector<8x256xf32>
    %c16_i32_306 = arith.constant 16 : i32
    %742 = tpu.dynamic_rotate %736 by %c16_i32_306 dim 1 : vector<8x256xf32>, i32 -> vector<8x256xf32>
    %cst_307 = arith.constant 0.000000e+00 : f32
    %743 = vector.shape_cast %23 : vector<1x256xi1> to vector<1x256xi1>
    %744 = vector.broadcast %743 : vector<1x256xi1> to vector<8x256xi1>
    %745 = vector.broadcast %cst_307 : f32 to vector<8x256xf32>
    %746 = arith.select %744, %742, %745 : vector<8x256xi1>, vector<8x256xf32>
    %c15_i32_308 = arith.constant 15 : i32
    %747 = tpu.dynamic_rotate %736 by %c15_i32_308 dim 1 : vector<8x256xf32>, i32 -> vector<8x256xf32>
    %cst_309 = arith.constant 0.000000e+00 : f32
    %748 = vector.shape_cast %28 : vector<1x256xi1> to vector<1x256xi1>
    %749 = vector.broadcast %748 : vector<1x256xi1> to vector<8x256xi1>
    %750 = vector.broadcast %cst_309 : f32 to vector<8x256xf32>
    %751 = arith.select %749, %747, %750 : vector<8x256xi1>, vector<8x256xf32>
    %c1_i32_310 = arith.constant 1 : i32
    %752 = tpu.dynamic_rotate %736 by %c1_i32_310 dim 1 : vector<8x256xf32>, i32 -> vector<8x256xf32>
    %cst_311 = arith.constant 0.000000e+00 : f32
    %753 = vector.shape_cast %30 : vector<1x256xi1> to vector<1x256xi1>
    %754 = vector.broadcast %753 : vector<1x256xi1> to vector<8x256xi1>
    %755 = vector.broadcast %cst_311 : f32 to vector<8x256xf32>
    %756 = arith.select %754, %752, %755 : vector<8x256xi1>, vector<8x256xf32>
    %c255_i32_312 = arith.constant 255 : i32
    %757 = tpu.dynamic_rotate %736 by %c255_i32_312 dim 1 : vector<8x256xf32>, i32 -> vector<8x256xf32>
    %cst_313 = arith.constant 0.000000e+00 : f32
    %758 = vector.shape_cast %32 : vector<1x256xi1> to vector<1x256xi1>
    %759 = vector.broadcast %758 : vector<1x256xi1> to vector<8x256xi1>
    %760 = vector.broadcast %cst_313 : f32 to vector<8x256xf32>
    %761 = arith.select %759, %757, %760 : vector<8x256xi1>, vector<8x256xf32>
    %c241_i32_314 = arith.constant 241 : i32
    %762 = tpu.dynamic_rotate %736 by %c241_i32_314 dim 1 : vector<8x256xf32>, i32 -> vector<8x256xf32>
    %cst_315 = arith.constant 0.000000e+00 : f32
    %763 = vector.shape_cast %37 : vector<1x256xi1> to vector<1x256xi1>
    %764 = vector.broadcast %763 : vector<1x256xi1> to vector<8x256xi1>
    %765 = vector.broadcast %cst_315 : f32 to vector<8x256xf32>
    %766 = arith.select %764, %762, %765 : vector<8x256xi1>, vector<8x256xf32>
    %c240_i32_316 = arith.constant 240 : i32
    %767 = tpu.dynamic_rotate %736 by %c240_i32_316 dim 1 : vector<8x256xf32>, i32 -> vector<8x256xf32>
    %cst_317 = arith.constant 0.000000e+00 : f32
    %768 = vector.shape_cast %39 : vector<1x256xi1> to vector<1x256xi1>
    %769 = vector.broadcast %768 : vector<1x256xi1> to vector<8x256xi1>
    %770 = vector.broadcast %cst_317 : f32 to vector<8x256xf32>
    %771 = arith.select %769, %767, %770 : vector<8x256xi1>, vector<8x256xf32>
    %c239_i32_318 = arith.constant 239 : i32
    %772 = tpu.dynamic_rotate %736 by %c239_i32_318 dim 1 : vector<8x256xf32>, i32 -> vector<8x256xf32>
    %cst_319 = arith.constant 0.000000e+00 : f32
    %773 = vector.shape_cast %44 : vector<1x256xi1> to vector<1x256xi1>
    %774 = vector.broadcast %773 : vector<1x256xi1> to vector<8x256xi1>
    %775 = vector.broadcast %cst_319 : f32 to vector<8x256xf32>
    %776 = arith.select %774, %772, %775 : vector<8x256xi1>, vector<8x256xf32>
    %777 = tpu.concatenate %741, %746, %751, %756, %736, %761, %766, %771, %776 in 0 : vector<8x256xf32>, vector<8x256xf32>, vector<8x256xf32>, vector<8x256xf32>, vector<8x256xf32>, vector<8x256xf32>, vector<8x256xf32>, vector<8x256xf32>, vector<8x256xf32> -> vector<72x256xf32>
    %778 = arith.truncf %777 : vector<72x256xf32> to vector<72x256xbf16>
    %c0_320 = arith.constant 0 : index
    %c0_321 = arith.constant 0 : index
    %779 = vector.load %arg24[%c0_320, %c0_321] : memref<8x72xbf16, #tpu.memory_space<vmem>>, vector<8x72xbf16>
    %cst_322 = arith.constant dense<0.000000e+00> : vector<8x256xf32>
    %780 = tpu.matmul %779, %778, %cst_322 {dimension_numbers = #tpu.dot_dimension_numbers<[1], [0], [0], [1], [0, 0, 1, 1], [], []>} : vector<8x72xbf16>, vector<72x256xbf16>, vector<8x256xf32> -> vector<8x256xf32>
    %c0_323 = arith.constant 0 : index
    %c0_324 = arith.constant 0 : index
    %781 = vector.load %arg25[%c0_323, %c0_324] : memref<8x1xf32, #tpu.memory_space<vmem>>, vector<8x1xf32>
    %782 = vector.broadcast %781 : vector<8x1xf32> to vector<8x256xf32>
    %783 = arith.addf %780, %782 : vector<8x256xf32>
    %c0_325 = arith.constant 0 : index
    %c0_326 = arith.constant 0 : index
    %c0_327 = arith.constant 0 : index
    %784 = vector.load %arg30[%c0_325, %c0_326, %c0_327] : memref<1x8x256xf32, #tpu.memory_space<vmem>>, vector<1x8x256xf32>
    %785 = vector.shape_cast %784 : vector<1x8x256xf32> to vector<8x256xf32>
    %786 = vector.shape_cast %783 : vector<8x256xf32> to vector<1x8x256xf32>
    tpu.vector_store %arg30[%c0_325, %c0_326, %c0_327], %786 {strides = array<i32>} : memref<1x8x256xf32, #tpu.memory_space<vmem>>, vector<1x8x256xf32>,
    return
  }
  func.func @transform_0(%arg0: i32) -> (i32, i32, i32) {
    %c0_i32 = arith.constant 0 : i32
    %c0_i32_0 = arith.constant 0 : i32
    %c0_i32_1 = arith.constant 0 : i32
    return %arg0, %c0_i32, %c0_i32_0 : i32, i32, i32
  }
  func.func @transform_1(%arg0: i32) -> (i32, i32) {
    %c0_i32 = arith.constant 0 : i32
    %c0_i32_0 = arith.constant 0 : i32
    %c0_i32_1 = arith.constant 0 : i32
    return %c0_i32, %c0_i32_0 : i32, i32
  }
  func.func @transform_2(%arg0: i32) -> (i32, i32) {
    %c0_i32 = arith.constant 0 : i32
    %c0_i32_0 = arith.constant 0 : i32
    %c0_i32_1 = arith.constant 0 : i32
    return %c0_i32, %c0_i32_0 : i32, i32
  }
  func.func @transform_3(%arg0: i32) -> (i32, i32) {
    %c0_i32 = arith.constant 0 : i32
    %c0_i32_0 = arith.constant 0 : i32
    %c0_i32_1 = arith.constant 0 : i32
    return %c0_i32, %c0_i32_0 : i32, i32
  }
  func.func @transform_4(%arg0: i32) -> (i32, i32) {
    %c0_i32 = arith.constant 0 : i32
    %c0_i32_0 = arith.constant 0 : i32
    %c0_i32_1 = arith.constant 0 : i32
    return %c0_i32, %c0_i32_0 : i32, i32
  }
  func.func @transform_5(%arg0: i32) -> (i32, i32) {
    %c0_i32 = arith.constant 0 : i32
    %c0_i32_0 = arith.constant 0 : i32
    %c0_i32_1 = arith.constant 0 : i32
    return %c0_i32, %c0_i32_0 : i32, i32
  }
  func.func @transform_6(%arg0: i32) -> (i32, i32) {
    %c0_i32 = arith.constant 0 : i32
    %c0_i32_0 = arith.constant 0 : i32
    %c0_i32_1 = arith.constant 0 : i32
    return %c0_i32, %c0_i32_0 : i32, i32
  }
  func.func @transform_7(%arg0: i32) -> (i32, i32) {
    %c0_i32 = arith.constant 0 : i32
    %c0_i32_0 = arith.constant 0 : i32
    %c0_i32_1 = arith.constant 0 : i32
    return %c0_i32, %c0_i32_0 : i32, i32
  }
  func.func @transform_8(%arg0: i32) -> (i32, i32) {
    %c0_i32 = arith.constant 0 : i32
    %c0_i32_0 = arith.constant 0 : i32
    %c0_i32_1 = arith.constant 0 : i32
    return %c0_i32, %c0_i32_0 : i32, i32
  }
  func.func @transform_9(%arg0: i32) -> (i32, i32) {
    %c0_i32 = arith.constant 0 : i32
    %c0_i32_0 = arith.constant 0 : i32
    %c0_i32_1 = arith.constant 0 : i32
    return %c0_i32, %c0_i32_0 : i32, i32
  }
  func.func @transform_10(%arg0: i32) -> (i32, i32) {
    %c0_i32 = arith.constant 0 : i32
    %c0_i32_0 = arith.constant 0 : i32
    %c0_i32_1 = arith.constant 0 : i32
    return %c0_i32, %c0_i32_0 : i32, i32
  }
  func.func @transform_11(%arg0: i32) -> (i32, i32) {
    %c0_i32 = arith.constant 0 : i32
    %c0_i32_0 = arith.constant 0 : i32
    %c0_i32_1 = arith.constant 0 : i32
    return %c0_i32, %c0_i32_0 : i32, i32
  }
  func.func @transform_12(%arg0: i32) -> (i32, i32) {
    %c0_i32 = arith.constant 0 : i32
    %c0_i32_0 = arith.constant 0 : i32
    %c0_i32_1 = arith.constant 0 : i32
    return %c0_i32, %c0_i32_0 : i32, i32
  }
  func.func @transform_13(%arg0: i32) -> (i32, i32) {
    %c0_i32 = arith.constant 0 : i32
    %c0_i32_0 = arith.constant 0 : i32
    %c0_i32_1 = arith.constant 0 : i32
    return %c0_i32, %c0_i32_0 : i32, i32
  }
  func.func @transform_14(%arg0: i32) -> (i32, i32) {
    %c0_i32 = arith.constant 0 : i32
    %c0_i32_0 = arith.constant 0 : i32
    %c0_i32_1 = arith.constant 0 : i32
    return %c0_i32, %c0_i32_0 : i32, i32
  }
  func.func @transform_15(%arg0: i32) -> (i32, i32) {
    %c0_i32 = arith.constant 0 : i32
    %c0_i32_0 = arith.constant 0 : i32
    %c0_i32_1 = arith.constant 0 : i32
    return %c0_i32, %c0_i32_0 : i32, i32
  }
  func.func @transform_16(%arg0: i32) -> (i32, i32) {
    %c0_i32 = arith.constant 0 : i32
    %c0_i32_0 = arith.constant 0 : i32
    %c0_i32_1 = arith.constant 0 : i32
    return %c0_i32, %c0_i32_0 : i32, i32
  }
  func.func @transform_17(%arg0: i32) -> (i32, i32) {
    %c0_i32 = arith.constant 0 : i32
    %c0_i32_0 = arith.constant 0 : i32
    %c0_i32_1 = arith.constant 0 : i32
    return %c0_i32, %c0_i32_0 : i32, i32
  }
  func.func @transform_18(%arg0: i32) -> (i32, i32) {
    %c0_i32 = arith.constant 0 : i32
    %c0_i32_0 = arith.constant 0 : i32
    %c0_i32_1 = arith.constant 0 : i32
    return %c0_i32, %c0_i32_0 : i32, i32
  }
  func.func @transform_19(%arg0: i32) -> (i32, i32) {
    %c0_i32 = arith.constant 0 : i32
    %c0_i32_0 = arith.constant 0 : i32
    %c0_i32_1 = arith.constant 0 : i32
    return %c0_i32, %c0_i32_0 : i32, i32
  }
  func.func @transform_20(%arg0: i32) -> (i32, i32) {
    %c0_i32 = arith.constant 0 : i32
    %c0_i32_0 = arith.constant 0 : i32
    %c0_i32_1 = arith.constant 0 : i32
    return %c0_i32, %c0_i32_0 : i32, i32
  }
  func.func @transform_21(%arg0: i32) -> (i32, i32) {
    %c0_i32 = arith.constant 0 : i32
    %c0_i32_0 = arith.constant 0 : i32
    %c0_i32_1 = arith.constant 0 : i32
    return %c0_i32, %c0_i32_0 : i32, i32
  }
  func.func @transform_22(%arg0: i32) -> (i32, i32) {
    %c0_i32 = arith.constant 0 : i32
    %c0_i32_0 = arith.constant 0 : i32
    %c0_i32_1 = arith.constant 0 : i32
    return %c0_i32, %c0_i32_0 : i32, i32
  }
  func.func @transform_23(%arg0: i32) -> (i32, i32) {
    %c0_i32 = arith.constant 0 : i32
    %c0_i32_0 = arith.constant 0 : i32
    %c0_i32_1 = arith.constant 0 : i32
    return %c0_i32, %c0_i32_0 : i32, i32
  }
  func.func @transform_24(%arg0: i32) -> (i32, i32) {
    %c0_i32 = arith.constant 0 : i32
    %c0_i32_0 = arith.constant 0 : i32
    %c0_i32_1 = arith.constant 0 : i32
    return %c0_i32, %c0_i32_0 : i32, i32
  }
  func.func @transform_25(%arg0: i32) -> (i32, i32) {
    %c0_i32 = arith.constant 0 : i32
    %c0_i32_0 = arith.constant 0 : i32
    %c0_i32_1 = arith.constant 0 : i32
    return %c0_i32, %c0_i32_0 : i32, i32
  }
  func.func @transform_26(%arg0: i32) -> (i32, i32) {
    %c0_i32 = arith.constant 0 : i32
    %c0_i32_0 = arith.constant 0 : i32
    %c0_i32_1 = arith.constant 0 : i32
    return %c0_i32, %c0_i32_0 : i32, i32
  }
  func.func @transform_27(%arg0: i32) -> (i32, i32) {
    %c0_i32 = arith.constant 0 : i32
    %c0_i32_0 = arith.constant 0 : i32
    %c0_i32_1 = arith.constant 0 : i32
    return %c0_i32, %c0_i32_0 : i32, i32
  }
  func.func @transform_28(%arg0: i32) -> (i32, i32) {
    %c0_i32 = arith.constant 0 : i32
    %c0_i32_0 = arith.constant 0 : i32
    %c0_i32_1 = arith.constant 0 : i32
    return %c0_i32, %c0_i32_0 : i32, i32
  }
  func.func @transform_29(%arg0: i32) -> (i32, i32, i32) {
    %c0_i32 = arith.constant 0 : i32
    %c0_i32_0 = arith.constant 0 : i32
    %c0_i32_1 = arith.constant 0 : i32
    return %arg0, %c0_i32, %c0_i32_0 : i32, i32, i32
  }
}

</mosaic_0001>

<llo_original>
// kernel: unet_forward.1
$region0: #{unet_forward.1}
  #allocation0 [shape = 'u32[]', space=smem, size = 0x4, offset = 0x4, fixed_abs, tag = 'smem constant byte address 0x4 - core index']
  #allocation1 [shape = 'u32[144,128]{1,0:T(1,128)}', space=vmem, size = 0x12000, scoped, tag = 'internal scratch']
  %s0 = inlined_call_operand.smem [shape: u32[30], index: -1, kind: input, shape index: {}]
  %s1 = sld [smem:[%s0]]
  %s2 = scalar_lea.smem %s0, 1
  %s3 = sld [smem:[%s2]]
  %s4 = scalar_lea.smem %s0, 2
  %s5 = sld [smem:[%s4]]
  %s6 = scalar_lea.smem %s0, 3
  %s7 = sld [smem:[%s6]]
  %s8 = scalar_lea.smem %s0, 4
  %s9 = sld [smem:[%s8]]
  %s10 = scalar_lea.smem %s0, 5
  %s11 = sld [smem:[%s10]]
  %s12 = scalar_lea.smem %s0, 6
  %s13 = sld [smem:[%s12]]
  %s14 = scalar_lea.smem %s0, 7
  %s15 = sld [smem:[%s14]]
  %s16 = scalar_lea.smem %s0, 8
  %s17 = sld [smem:[%s16]]
  %s18 = scalar_lea.smem %s0, 9
  %s19 = sld [smem:[%s18]]
  %s20 = scalar_lea.smem %s0, 10
  %s21 = sld [smem:[%s20]]
  %s22 = scalar_lea.smem %s0, 11
  %s23 = sld [smem:[%s22]]
  %s24 = scalar_lea.smem %s0, 12
  %s25 = sld [smem:[%s24]]
  %s26 = scalar_lea.smem %s0, 13
  %s27 = sld [smem:[%s26]]
  %s28 = scalar_lea.smem %s0, 14
  %s29 = sld [smem:[%s28]]
  %s30 = scalar_lea.smem %s0, 15
  %s31 = sld [smem:[%s30]]
  %s32 = scalar_lea.smem %s0, 16
  %s33 = sld [smem:[%s32]]
  %s34 = scalar_lea.smem %s0, 17
  %s35 = sld [smem:[%s34]]
  %s36 = scalar_lea.smem %s0, 18
  %s37 = sld [smem:[%s36]]
  %s38 = scalar_lea.smem %s0, 19
  %s39 = sld [smem:[%s38]]
  %s40 = scalar_lea.smem %s0, 20
  %s41 = sld [smem:[%s40]]
  %s42 = scalar_lea.smem %s0, 21
  %s43 = sld [smem:[%s42]]
  %s44 = scalar_lea.smem %s0, 22
  %s45 = sld [smem:[%s44]]
  %s46 = scalar_lea.smem %s0, 23
  %s47 = sld [smem:[%s46]]
  %s48 = scalar_lea.smem %s0, 24
  %s49 = sld [smem:[%s48]]
  %s50 = scalar_lea.smem %s0, 25
  %s51 = sld [smem:[%s50]]
  %s52 = scalar_lea.smem %s0, 26
  %s53 = sld [smem:[%s52]]
  %s54 = scalar_lea.smem %s0, 27
  %s55 = sld [smem:[%s54]]
  %s56 = scalar_lea.smem %s0, 28
  %s57 = sld [smem:[%s56]]
  %s58 = scalar_lea.smem %s0, 29
  %s59 = sld [smem:[%s58]]
  %s60 = sld [smem:[#allocation0]]
  $region149: #{unet_forward.1} parent=0
    _
  %s62 = ssub.s32 1, %s60
  %s63 = scalar_select 0, %s62, %s60
  loop: start=0, step=1, limit=4
  $region2: #{unet_forward.1} parent=0 // loop_pre_header
    _
  $region3: #{unet_forward.1} parent=0 // loop_header
    %s65 = sphi 0, %s69
    %p66 = scmp.ge.s32.totalorder %s65, 4
    %s75 = sphi 0, %s77
    %s78 = sphi 0, %s75
    %s79 = sphi 0, %s78
    %s95 = sphi 0, %s79
    %s99 = sphi 0, %s99
    %s101 = sphi 0, %s99
    %s102 = sphi 0, %s101
    %s116 = sphi 0, %s102
    %s120 = sphi 0, %s120
    %s122 = sphi 0, %s120
    %s123 = sphi 0, %s122
    %s137 = sphi 0, %s123
    %s141 = sphi 0, %s141
    %s143 = sphi 0, %s141
    %s144 = sphi 0, %s143
    %s158 = sphi 0, %s144
    %s162 = sphi 0, %s162
    %s164 = sphi 0, %s162
    %s165 = sphi 0, %s164
    %s179 = sphi 0, %s165
    %s183 = sphi 0, %s183
    %s185 = sphi 0, %s183
    %s186 = sphi 0, %s185
    %s200 = sphi 0, %s186
    %s204 = sphi 0, %s204
    %s206 = sphi 0, %s204
    %s207 = sphi 0, %s206
    %s221 = sphi 0, %s207
    %s225 = sphi 0, %s225
    %s227 = sphi 0, %s225
    %s228 = sphi 0, %s227
    %s242 = sphi 0, %s228
    %s246 = sphi 0, %s246
    %s248 = sphi 0, %s246
    %s249 = sphi 0, %s248
    %s263 = sphi 0, %s249
    %s267 = sphi 0, %s267
    %s269 = sphi 0, %s267
    %s270 = sphi 0, %s269
    %s284 = sphi 0, %s270
    %s288 = sphi 0, %s288
    %s290 = sphi 0, %s288
    %s291 = sphi 0, %s290
    %s305 = sphi 0, %s291
    %s309 = sphi 0, %s309
    %s311 = sphi 0, %s309
    %s312 = sphi 0, %s311
    %s326 = sphi 0, %s312
    %s330 = sphi 0, %s330
    %s332 = sphi 0, %s330
    %s333 = sphi 0, %s332
    %s347 = sphi 0, %s333
    %s351 = sphi 0, %s351
    %s353 = sphi 0, %s351
    %s354 = sphi 0, %s353
    %s368 = sphi 0, %s354
    %s372 = sphi 0, %s372
    %s374 = sphi 0, %s372
    %s375 = sphi 0, %s374
    %s389 = sphi 0, %s375
    %s393 = sphi 0, %s393
    %s395 = sphi 0, %s393
    %s396 = sphi 0, %s395
    %s410 = sphi 0, %s396
    %s414 = sphi 0, %s414
    %s416 = sphi 0, %s414
    %s417 = sphi 0, %s416
    %s431 = sphi 0, %s417
    %s435 = sphi 0, %s435
    %s437 = sphi 0, %s435
    %s438 = sphi 0, %s437
    %s452 = sphi 0, %s438
    %s456 = sphi 0, %s456
    %s458 = sphi 0, %s456
    %s459 = sphi 0, %s458
    %s473 = sphi 0, %s459
    %s477 = sphi 0, %s477
    %s479 = sphi 0, %s477
    %s480 = sphi 0, %s479
    %s494 = sphi 0, %s480
    %s498 = sphi 0, %s498
    %s500 = sphi 0, %s498
    %s501 = sphi 0, %s500
    %s515 = sphi 0, %s501
    %s519 = sphi 0, %s519
    %s521 = sphi 0, %s519
    %s522 = sphi 0, %s521
    %s536 = sphi 0, %s522
    %s540 = sphi 0, %s540
    %s542 = sphi 0, %s540
    %s543 = sphi 0, %s542
    %s557 = sphi 0, %s543
    %s561 = sphi 0, %s561
    %s563 = sphi 0, %s561
    %s564 = sphi 0, %s563
    %s578 = sphi 0, %s564
    %s582 = sphi 0, %s582
    %s584 = sphi 0, %s582
    %s585 = sphi 0, %s584
    %s599 = sphi 0, %s585
    %s603 = sphi 0, %s603
    %s605 = sphi 0, %s603
    %s606 = sphi 0, %s605
    %s620 = sphi 0, %s606
    %s624 = sphi 0, %s624
    %s626 = sphi 0, %s624
    %s627 = sphi 0, %s626
    %s641 = sphi 0, %s627
    %s645 = sphi 0, %s645
    %s647 = sphi 0, %s645
    %s648 = sphi 0, %s647
    %s662 = sphi 0, %s648
    %s666 = sphi 0, %s666
    %s668 = sphi 0, %s666
    %s669 = sphi 0, %s668
    %s683 = sphi 0, %s669
    %s689 = sphi 0, %s691
    %s692 = sphi 0, %s689
    %s693 = sphi 0, %s692
    %s709 = sphi 0, %s693
  $region4: #{unet_forward.1} parent=0 // loop_header_branch
    %68 = sbr.rel (%p66) target = $region8
  $region5: #{unet_forward.1} parent=0 // loop_body
    %s70 = ssub.s32 %s65, 1
    %s71 = ssub.s32 %s65, 2
    %s72 = sadd.s32 %s65, 1
    %s73 = ssub.s32 %s65, %s72
    %p74 = scmp.eq.s32.totalorder %s73, 0
    %s76 = sadd.s32 %s75, 1
    %s77 = scalar_select %p74, %s75, %s76
    %p80 = pneg %p74
    %p81 = scmp.eq.s32.totalorder %s65, 1
    %p82 = por %p80, %p81
    %p83 = scmp.ne.s32.totalorder %s75, %s78
    %p84 = scmp.eq.s32.totalorder %s65, 0
    %p85 = por %p83, %p84
    %p86 = scmp.ne.s32.totalorder %s75, %s78
    %p87 = scmp.eq.s32.totalorder %s70, 1
    %p88 = por %p86, %p87
    %p89 = scmp.ne.s32.totalorder %s78, %s79
    %p90 = scmp.eq.s32.totalorder %s70, 0
    %p91 = por %p89, %p90
    %p92 = scmp.ne.s32.totalorder %s78, %s79
    %p93 = scmp.eq.s32.totalorder %s71, 1
    %p94 = por %p92, %p93
    %p96 = scmp.ne.s32.totalorder %s79, %s95
    %p97 = scmp.eq.s32.totalorder %s71, 0
    %p98 = por %p96, %p97
    %s100 = sadd.s32 %s99, 1
    %p103 = scmp.eq.s32.totalorder %s65, 1
    %p104 = scmp.ne.s32.totalorder %s99, %s101
    %p105 = scmp.eq.s32.totalorder %s65, 0
    %p106 = por %p104, %p105
    %p107 = scmp.ne.s32.totalorder %s99, %s101
    %p108 = scmp.eq.s32.totalorder %s70, 1
    %p109 = por %p107, %p108
    %p110 = scmp.ne.s32.totalorder %s101, %s102
    %p111 = scmp.eq.s32.totalorder %s70, 0
    %p112 = por %p110, %p111
    %p113 = scmp.ne.s32.totalorder %s101, %s102
    %p114 = scmp.eq.s32.totalorder %s71, 1
    %p115 = por %p113, %p114
    %p117 = scmp.ne.s32.totalorder %s102, %s116
    %p118 = scmp.eq.s32.totalorder %s71, 0
    %p119 = por %p117, %p118
    %s121 = sadd.s32 %s120, 1
    %p124 = scmp.eq.s32.totalorder %s65, 1
    %p125 = scmp.ne.s32.totalorder %s120, %s122
    %p126 = scmp.eq.s32.totalorder %s65, 0
    %p127 = por %p125, %p126
    %p128 = scmp.ne.s32.totalorder %s120, %s122
    %p129 = scmp.eq.s32.totalorder %s70, 1
    %p130 = por %p128, %p129
    %p131 = scmp.ne.s32.totalorder %s122, %s123
    %p132 = scmp.eq.s32.totalorder %s70, 0
    %p133 = por %p131, %p132
    %p134 = scmp.ne.s32.totalorder %s122, %s123
    %p135 = scmp.eq.s32.totalorder %s71, 1
    %p136 = por %p134, %p135
    %p138 = scmp.ne.s32.totalorder %s123, %s137
    %p139 = scmp.eq.s32.totalorder %s71, 0
    %p140 = por %p138, %p139
    %s142 = sadd.s32 %s141, 1
    %p145 = scmp.eq.s32.totalorder %s65, 1
    %p146 = scmp.ne.s32.totalorder %s141, %s143
    %p147 = scmp.eq.s32.totalorder %s65, 0
    %p148 = por %p146, %p147
    %p149 = scmp.ne.s32.totalorder %s141, %s143
    %p150 = scmp.eq.s32.totalorder %s70, 1
    %p151 = por %p149, %p150
    %p152 = scmp.ne.s32.totalorder %s143, %s144
    %p153 = scmp.eq.s32.totalorder %s70, 0
    %p154 = por %p152, %p153
    %p155 = scmp.ne.s32.totalorder %s143, %s144
    %p156 = scmp.eq.s32.totalorder %s71, 1
    %p157 = por %p155, %p156
    %p159 = scmp.ne.s32.totalorder %s144, %s158
    %p160 = scmp.eq.s32.totalorder %s71, 0
    %p161 = por %p159, %p160
    %s163 = sadd.s32 %s162, 1
    %p166 = scmp.eq.s32.totalorder %s65, 1
    %p167 = scmp.ne.s32.totalorder %s162, %s164
    %p168 = scmp.eq.s32.totalorder %s65, 0
    %p169 = por %p167, %p168
    %p170 = scmp.ne.s32.totalorder %s162, %s164
    %p171 = scmp.eq.s32.totalorder %s70, 1
    %p172 = por %p170, %p171
    %p173 = scmp.ne.s32.totalorder %s164, %s165
    %p174 = scmp.eq.s32.totalorder %s70, 0
    %p175 = por %p173, %p174
    %p176 = scmp.ne.s32.totalorder %s164, %s165
    %p177 = scmp.eq.s32.totalorder %s71, 1
    %p178 = por %p176, %p177
    %p180 = scmp.ne.s32.totalorder %s165, %s179
    %p181 = scmp.eq.s32.totalorder %s71, 0
    %p182 = por %p180, %p181
    %s184 = sadd.s32 %s183, 1
    %p187 = scmp.eq.s32.totalorder %s65, 1
    %p188 = scmp.ne.s32.totalorder %s183, %s185
    %p189 = scmp.eq.s32.totalorder %s65, 0
    %p190 = por %p188, %p189
    %p191 = scmp.ne.s32.totalorder %s183, %s185
    %p192 = scmp.eq.s32.totalorder %s70, 1
    %p193 = por %p191, %p192
    %p194 = scmp.ne.s32.totalorder %s185, %s186
    %p195 = scmp.eq.s32.totalorder %s70, 0
    %p196 = por %p194, %p195
    %p197 = scmp.ne.s32.totalorder %s185, %s186
    %p198 = scmp.eq.s32.totalorder %s71, 1
    %p199 = por %p197, %p198
    %p201 = scmp.ne.s32.totalorder %s186, %s200
    %p202 = scmp.eq.s32.totalorder %s71, 0
    %p203 = por %p201, %p202
    %s205 = sadd.s32 %s204, 1
    %p208 = scmp.eq.s32.totalorder %s65, 1
    %p209 = scmp.ne.s32.totalorder %s204, %s206
    %p210 = scmp.eq.s32.totalorder %s65, 0
    %p211 = por %p209, %p210
    %p212 = scmp.ne.s32.totalorder %s204, %s206
    %p213 = scmp.eq.s32.totalorder %s70, 1
    %p214 = por %p212, %p213
    %p215 = scmp.ne.s32.totalorder %s206, %s207
    %p216 = scmp.eq.s32.totalorder %s70, 0
    %p217 = por %p215, %p216
    %p218 = scmp.ne.s32.totalorder %s206, %s207
    %p219 = scmp.eq.s32.totalorder %s71, 1
    %p220 = por %p218, %p219
    %p222 = scmp.ne.s32.totalorder %s207, %s221
    %p223 = scmp.eq.s32.totalorder %s71, 0
    %p224 = por %p222, %p223
    %s226 = sadd.s32 %s225, 1
    %p229 = scmp.eq.s32.totalorder %s65, 1
    %p230 = scmp.ne.s32.totalorder %s225, %s227
    %p231 = scmp.eq.s32.totalorder %s65, 0
    %p232 = por %p230, %p231
    %p233 = scmp.ne.s32.totalorder %s225, %s227
    %p234 = scmp.eq.s32.totalorder %s70, 1
    %p235 = por %p233, %p234
    %p236 = scmp.ne.s32.totalorder %s227, %s228
    %p237 = scmp.eq.s32.totalorder %s70, 0
    %p238 = por %p236, %p237
    %p239 = scmp.ne.s32.totalorder %s227, %s228
    %p240 = scmp.eq.s32.totalorder %s71, 1
    %p241 = por %p239, %p240
    %p243 = scmp.ne.s32.totalorder %s228, %s242
    %p244 = scmp.eq.s32.totalorder %s71, 0
    %p245 = por %p243, %p244
    %s247 = sadd.s32 %s246, 1
    %p250 = scmp.eq.s32.totalorder %s65, 1
    %p251 = scmp.ne.s32.totalorder %s246, %s248
    %p252 = scmp.eq.s32.totalorder %s65, 0
    %p253 = por %p251, %p252
    %p254 = scmp.ne.s32.totalorder %s246, %s248
    %p255 = scmp.eq.s32.totalorder %s70, 1
    %p256 = por %p254, %p255
    %p257 = scmp.ne.s32.totalorder %s248, %s249
    %p258 = scmp.eq.s32.totalorder %s70, 0
    %p259 = por %p257, %p258
    %p260 = scmp.ne.s32.totalorder %s248, %s249
    %p261 = scmp.eq.s32.totalorder %s71, 1
    %p262 = por %p260, %p261
    %p264 = scmp.ne.s32.totalorder %s249, %s263
    %p265 = scmp.eq.s32.totalorder %s71, 0
    %p266 = por %p264, %p265
    %s268 = sadd.s32 %s267, 1
    %p271 = scmp.eq.s32.totalorder %s65, 1
    %p272 = scmp.ne.s32.totalorder %s267, %s269
    %p273 = scmp.eq.s32.totalorder %s65, 0
    %p274 = por %p272, %p273
    %p275 = scmp.ne.s32.totalorder %s267, %s269
    %p276 = scmp.eq.s32.totalorder %s70, 1
    %p277 = por %p275, %p276
    %p278 = scmp.ne.s32.totalorder %s269, %s270
    %p279 = scmp.eq.s32.totalorder %s70, 0
    %p280 = por %p278, %p279
    %p281 = scmp.ne.s32.totalorder %s269, %s270
    %p282 = scmp.eq.s32.totalorder %s71, 1
    %p283 = por %p281, %p282
    %p285 = scmp.ne.s32.totalorder %s270, %s284
    %p286 = scmp.eq.s32.totalorder %s71, 0
    %p287 = por %p285, %p286
    %s289 = sadd.s32 %s288, 1
    %p292 = scmp.eq.s32.totalorder %s65, 1
    %p293 = scmp.ne.s32.totalorder %s288, %s290
    %p294 = scmp.eq.s32.totalorder %s65, 0
    %p295 = por %p293, %p294
    %p296 = scmp.ne.s32.totalorder %s288, %s290
    %p297 = scmp.eq.s32.totalorder %s70, 1
    %p298 = por %p296, %p297
    %p299 = scmp.ne.s32.totalorder %s290, %s291
    %p300 = scmp.eq.s32.totalorder %s70, 0
    %p301 = por %p299, %p300
    %p302 = scmp.ne.s32.totalorder %s290, %s291
    %p303 = scmp.eq.s32.totalorder %s71, 1
    %p304 = por %p302, %p303
    %p306 = scmp.ne.s32.totalorder %s291, %s305
    %p307 = scmp.eq.s32.totalorder %s71, 0
    %p308 = por %p306, %p307
    %s310 = sadd.s32 %s309, 1
    %p313 = scmp.eq.s32.totalorder %s65, 1
    %p314 = scmp.ne.s32.totalorder %s309, %s311
    %p315 = scmp.eq.s32.totalorder %s65, 0
    %p316 = por %p314, %p315
    %p317 = scmp.ne.s32.totalorder %s309, %s311
    %p318 = scmp.eq.s32.totalorder %s70, 1
    %p319 = por %p317, %p318
    %p320 = scmp.ne.s32.totalorder %s311, %s312
    %p321 = scmp.eq.s32.totalorder %s70, 0
    %p322 = por %p320, %p321
    %p323 = scmp.ne.s32.totalorder %s311, %s312
    %p324 = scmp.eq.s32.totalorder %s71, 1
    %p325 = por %p323, %p324
    %p327 = scmp.ne.s32.totalorder %s312, %s326
    %p328 = scmp.eq.s32.totalorder %s71, 0
    %p329 = por %p327, %p328
    %s331 = sadd.s32 %s330, 1
    %p334 = scmp.eq.s32.totalorder %s65, 1
    %p335 = scmp.ne.s32.totalorder %s330, %s332
    %p336 = scmp.eq.s32.totalorder %s65, 0
    %p337 = por %p335, %p336
    %p338 = scmp.ne.s32.totalorder %s330, %s332
    %p339 = scmp.eq.s32.totalorder %s70, 1
    %p340 = por %p338, %p339
    %p341 = scmp.ne.s32.totalorder %s332, %s333
    %p342 = scmp.eq.s32.totalorder %s70, 0
    %p343 = por %p341, %p342
    %p344 = scmp.ne.s32.totalorder %s332, %s333
    %p345 = scmp.eq.s32.totalorder %s71, 1
    %p346 = por %p344, %p345
    %p348 = scmp.ne.s32.totalorder %s333, %s347
    %p349 = scmp.eq.s32.totalorder %s71, 0
    %p350 = por %p348, %p349
    %s352 = sadd.s32 %s351, 1
    %p355 = scmp.eq.s32.totalorder %s65, 1
    %p356 = scmp.ne.s32.totalorder %s351, %s353
    %p357 = scmp.eq.s32.totalorder %s65, 0
    %p358 = por %p356, %p357
    %p359 = scmp.ne.s32.totalorder %s351, %s353
    %p360 = scmp.eq.s32.totalorder %s70, 1
    %p361 = por %p359, %p360
    %p362 = scmp.ne.s32.totalorder %s353, %s354
    %p363 = scmp.eq.s32.totalorder %s70, 0
    %p364 = por %p362, %p363
    %p365 = scmp.ne.s32.totalorder %s353, %s354
    %p366 = scmp.eq.s32.totalorder %s71, 1
    %p367 = por %p365, %p366
    %p369 = scmp.ne.s32.totalorder %s354, %s368
    %p370 = scmp.eq.s32.totalorder %s71, 0
    %p371 = por %p369, %p370
    %s373 = sadd.s32 %s372, 1
    %p376 = scmp.eq.s32.totalorder %s65, 1
    %p377 = scmp.ne.s32.totalorder %s372, %s374
    %p378 = scmp.eq.s32.totalorder %s65, 0
    %p379 = por %p377, %p378
    %p380 = scmp.ne.s32.totalorder %s372, %s374
    %p381 = scmp.eq.s32.totalorder %s70, 1
    %p382 = por %p380, %p381
    %p383 = scmp.ne.s32.totalorder %s374, %s375
    %p384 = scmp.eq.s32.totalorder %s70, 0
    %p385 = por %p383, %p384
    %p386 = scmp.ne.s32.totalorder %s374, %s375
    %p387 = scmp.eq.s32.totalorder %s71, 1
    %p388 = por %p386, %p387
    %p390 = scmp.ne.s32.totalorder %s375, %s389
    %p391 = scmp.eq.s32.totalorder %s71, 0
    %p392 = por %p390, %p391
    %s394 = sadd.s32 %s393, 1
    %p397 = scmp.eq.s32.totalorder %s65, 1
    %p398 = scmp.ne.s32.totalorder %s393, %s395
    %p399 = scmp.eq.s32.totalorder %s65, 0
    %p400 = por %p398, %p399
    %p401 = scmp.ne.s32.totalorder %s393, %s395
    %p402 = scmp.eq.s32.totalorder %s70, 1
    %p403 = por %p401, %p402
    %p404 = scmp.ne.s32.totalorder %s395, %s396
    %p405 = scmp.eq.s32.totalorder %s70, 0
    %p406 = por %p404, %p405
    %p407 = scmp.ne.s32.totalorder %s395, %s396
    %p408 = scmp.eq.s32.totalorder %s71, 1
    %p409 = por %p407, %p408
    %p411 = scmp.ne.s32.totalorder %s396, %s410
    %p412 = scmp.eq.s32.totalorder %s71, 0
    %p413 = por %p411, %p412
    %s415 = sadd.s32 %s414, 1
    %p418 = scmp.eq.s32.totalorder %s65, 1
    %p419 = scmp.ne.s32.totalorder %s414, %s416
    %p420 = scmp.eq.s32.totalorder %s65, 0
    %p421 = por %p419, %p420
    %p422 = scmp.ne.s32.totalorder %s414, %s416
    %p423 = scmp.eq.s32.totalorder %s70, 1
    %p424 = por %p422, %p423
    %p425 = scmp.ne.s32.totalorder %s416, %s417
    %p426 = scmp.eq.s32.totalorder %s70, 0
    %p427 = por %p425, %p426
    %p428 = scmp.ne.s32.totalorder %s416, %s417
    %p429 = scmp.eq.s32.totalorder %s71, 1
    %p430 = por %p428, %p429
    %p432 = scmp.ne.s32.totalorder %s417, %s431
    %p433 = scmp.eq.s32.totalorder %s71, 0
    %p434 = por %p432, %p433
    %s436 = sadd.s32 %s435, 1
    %p439 = scmp.eq.s32.totalorder %s65, 1
    %p440 = scmp.ne.s32.totalorder %s435, %s437
    %p441 = scmp.eq.s32.totalorder %s65, 0
    %p442 = por %p440, %p441
    %p443 = scmp.ne.s32.totalorder %s435, %s437
    %p444 = scmp.eq.s32.totalorder %s70, 1
    %p445 = por %p443, %p444
    %p446 = scmp.ne.s32.totalorder %s437, %s438
    %p447 = scmp.eq.s32.totalorder %s70, 0
    %p448 = por %p446, %p447
    %p449 = scmp.ne.s32.totalorder %s437, %s438
    %p450 = scmp.eq.s32.totalorder %s71, 1
    %p451 = por %p449, %p450
    %p453 = scmp.ne.s32.totalorder %s438, %s452
    %p454 = scmp.eq.s32.totalorder %s71, 0
    %p455 = por %p453, %p454
    %s457 = sadd.s32 %s456, 1
    %p460 = scmp.eq.s32.totalorder %s65, 1
    %p461 = scmp.ne.s32.totalorder %s456, %s458
    %p462 = scmp.eq.s32.totalorder %s65, 0
    %p463 = por %p461, %p462
    %p464 = scmp.ne.s32.totalorder %s456, %s458
    %p465 = scmp.eq.s32.totalorder %s70, 1
    %p466 = por %p464, %p465
    %p467 = scmp.ne.s32.totalorder %s458, %s459
    %p468 = scmp.eq.s32.totalorder %s70, 0
    %p469 = por %p467, %p468
    %p470 = scmp.ne.s32.totalorder %s458, %s459
    %p471 = scmp.eq.s32.totalorder %s71, 1
    %p472 = por %p470, %p471
    %p474 = scmp.ne.s32.totalorder %s459, %s473
    %p475 = scmp.eq.s32.totalorder %s71, 0
    %p476 = por %p474, %p475
    %s478 = sadd.s32 %s477, 1
    %p481 = scmp.eq.s32.totalorder %s65, 1
    %p482 = scmp.ne.s32.totalorder %s477, %s479
    %p483 = scmp.eq.s32.totalorder %s65, 0
    %p484 = por %p482, %p483
    %p485 = scmp.ne.s32.totalorder %s477, %s479
    %p486 = scmp.eq.s32.totalorder %s70, 1
    %p487 = por %p485, %p486
    %p488 = scmp.ne.s32.totalorder %s479, %s480
    %p489 = scmp.eq.s32.totalorder %s70, 0
    %p490 = por %p488, %p489
    %p491 = scmp.ne.s32.totalorder %s479, %s480
    %p492 = scmp.eq.s32.totalorder %s71, 1
    %p493 = por %p491, %p492
    %p495 = scmp.ne.s32.totalorder %s480, %s494
    %p496 = scmp.eq.s32.totalorder %s71, 0
    %p497 = por %p495, %p496
    %s499 = sadd.s32 %s498, 1
    %p502 = scmp.eq.s32.totalorder %s65, 1
    %p503 = scmp.ne.s32.totalorder %s498, %s500
    %p504 = scmp.eq.s32.totalorder %s65, 0
    %p505 = por %p503, %p504
    %p506 = scmp.ne.s32.totalorder %s498, %s500
    %p507 = scmp.eq.s32.totalorder %s70, 1
    %p508 = por %p506, %p507
    %p509 = scmp.ne.s32.totalorder %s500, %s501
    %p510 = scmp.eq.s32.totalorder %s70, 0
    %p511 = por %p509, %p510
    %p512 = scmp.ne.s32.totalorder %s500, %s501
    %p513 = scmp.eq.s32.totalorder %s71, 1
    %p514 = por %p512, %p513
    %p516 = scmp.ne.s32.totalorder %s501, %s515
    %p517 = scmp.eq.s32.totalorder %s71, 0
    %p518 = por %p516, %p517
    %s520 = sadd.s32 %s519, 1
    %p523 = scmp.eq.s32.totalorder %s65, 1
    %p524 = scmp.ne.s32.totalorder %s519, %s521
    %p525 = scmp.eq.s32.totalorder %s65, 0
    %p526 = por %p524, %p525
    %p527 = scmp.ne.s32.totalorder %s519, %s521
    %p528 = scmp.eq.s32.totalorder %s70, 1
    %p529 = por %p527, %p528
    %p530 = scmp.ne.s32.totalorder %s521, %s522
    %p531 = scmp.eq.s32.totalorder %s70, 0
    %p532 = por %p530, %p531
    %p533 = scmp.ne.s32.totalorder %s521, %s522
    %p534 = scmp.eq.s32.totalorder %s71, 1
    %p535 = por %p533, %p534
    %p537 = scmp.ne.s32.totalorder %s522, %s536
    %p538 = scmp.eq.s32.totalorder %s71, 0
    %p539 = por %p537, %p538
    %s541 = sadd.s32 %s540, 1
    %p544 = scmp.eq.s32.totalorder %s65, 1
    %p545 = scmp.ne.s32.totalorder %s540, %s542
    %p546 = scmp.eq.s32.totalorder %s65, 0
    %p547 = por %p545, %p546
    %p548 = scmp.ne.s32.totalorder %s540, %s542
    %p549 = scmp.eq.s32.totalorder %s70, 1
    %p550 = por %p548, %p549
    %p551 = scmp.ne.s32.totalorder %s542, %s543
    %p552 = scmp.eq.s32.totalorder %s70, 0
    %p553 = por %p551, %p552
    %p554 = scmp.ne.s32.totalorder %s542, %s543
    %p555 = scmp.eq.s32.totalorder %s71, 1
    %p556 = por %p554, %p555
    %p558 = scmp.ne.s32.totalorder %s543, %s557
    %p559 = scmp.eq.s32.totalorder %s71, 0
    %p560 = por %p558, %p559
    %s562 = sadd.s32 %s561, 1
    %p565 = scmp.eq.s32.totalorder %s65, 1
    %p566 = scmp.ne.s32.totalorder %s561, %s563
    %p567 = scmp.eq.s32.totalorder %s65, 0
    %p568 = por %p566, %p567
    %p569 = scmp.ne.s32.totalorder %s561, %s563
    %p570 = scmp.eq.s32.totalorder %s70, 1
    %p571 = por %p569, %p570
    %p572 = scmp.ne.s32.totalorder %s563, %s564
    %p573 = scmp.eq.s32.totalorder %s70, 0
    %p574 = por %p572, %p573
    %p575 = scmp.ne.s32.totalorder %s563, %s564
    %p576 = scmp.eq.s32.totalorder %s71, 1
    %p577 = por %p575, %p576
    %p579 = scmp.ne.s32.totalorder %s564, %s578
    %p580 = scmp.eq.s32.totalorder %s71, 0
    %p581 = por %p579, %p580
    %s583 = sadd.s32 %s582, 1
    %p586 = scmp.eq.s32.totalorder %s65, 1
    %p587 = scmp.ne.s32.totalorder %s582, %s584
    %p588 = scmp.eq.s32.totalorder %s65, 0
    %p589 = por %p587, %p588
    %p590 = scmp.ne.s32.totalorder %s582, %s584
    %p591 = scmp.eq.s32.totalorder %s70, 1
    %p592 = por %p590, %p591
    %p593 = scmp.ne.s32.totalorder %s584, %s585
    %p594 = scmp.eq.s32.totalorder %s70, 0
    %p595 = por %p593, %p594
    %p596 = scmp.ne.s32.totalorder %s584, %s585
    %p597 = scmp.eq.s32.totalorder %s71, 1
    %p598 = por %p596, %p597
    %p600 = scmp.ne.s32.totalorder %s585, %s599
    %p601 = scmp.eq.s32.totalorder %s71, 0
    %p602 = por %p600, %p601
    %s604 = sadd.s32 %s603, 1
    %p607 = scmp.eq.s32.totalorder %s65, 1
    %p608 = scmp.ne.s32.totalorder %s603, %s605
    %p609 = scmp.eq.s32.totalorder %s65, 0
    %p610 = por %p608, %p609
    %p611 = scmp.ne.s32.totalorder %s603, %s605
    %p612 = scmp.eq.s32.totalorder %s70, 1
    %p613 = por %p611, %p612
    %p614 = scmp.ne.s32.totalorder %s605, %s606
    %p615 = scmp.eq.s32.totalorder %s70, 0
    %p616 = por %p614, %p615
    %p617 = scmp.ne.s32.totalorder %s605, %s606
    %p618 = scmp.eq.s32.totalorder %s71, 1
    %p619 = por %p617, %p618
    %p621 = scmp.ne.s32.totalorder %s606, %s620
    %p622 = scmp.eq.s32.totalorder %s71, 0
    %p623 = por %p621, %p622
    %s625 = sadd.s32 %s624, 1
    %p628 = scmp.eq.s32.totalorder %s65, 1
    %p629 = scmp.ne.s32.totalorder %s624, %s626
    %p630 = scmp.eq.s32.totalorder %s65, 0
    %p631 = por %p629, %p630
    %p632 = scmp.ne.s32.totalorder %s624, %s626
    %p633 = scmp.eq.s32.totalorder %s70, 1
    %p634 = por %p632, %p633
    %p635 = scmp.ne.s32.totalorder %s626, %s627
    %p636 = scmp.eq.s32.totalorder %s70, 0
    %p637 = por %p635, %p636
    %p638 = scmp.ne.s32.totalorder %s626, %s627
    %p639 = scmp.eq.s32.totalorder %s71, 1
    %p640 = por %p638, %p639
    %p642 = scmp.ne.s32.totalorder %s627, %s641
    %p643 = scmp.eq.s32.totalorder %s71, 0
    %p644 = por %p642, %p643
    %s646 = sadd.s32 %s645, 1
    %p649 = scmp.eq.s32.totalorder %s65, 1
    %p650 = scmp.ne.s32.totalorder %s645, %s647
    %p651 = scmp.eq.s32.totalorder %s65, 0
    %p652 = por %p650, %p651
    %p653 = scmp.ne.s32.totalorder %s645, %s647
    %p654 = scmp.eq.s32.totalorder %s70, 1
    %p655 = por %p653, %p654
    %p656 = scmp.ne.s32.totalorder %s647, %s648
    %p657 = scmp.eq.s32.totalorder %s70, 0
    %p658 = por %p656, %p657
    %p659 = scmp.ne.s32.totalorder %s647, %s648
    %p660 = scmp.eq.s32.totalorder %s71, 1
    %p661 = por %p659, %p660
    %p663 = scmp.ne.s32.totalorder %s648, %s662
    %p664 = scmp.eq.s32.totalorder %s71, 0
    %p665 = por %p663, %p664
    %s667 = sadd.s32 %s666, 1
    %p670 = scmp.eq.s32.totalorder %s65, 1
    %p671 = scmp.ne.s32.totalorder %s666, %s668
    %p672 = scmp.eq.s32.totalorder %s65, 0
    %p673 = por %p671, %p672
    %p674 = scmp.ne.s32.totalorder %s666, %s668
    %p675 = scmp.eq.s32.totalorder %s70, 1
    %p676 = por %p674, %p675
    %p677 = scmp.ne.s32.totalorder %s668, %s669
    %p678 = scmp.eq.s32.totalorder %s70, 0
    %p679 = por %p677, %p678
    %p680 = scmp.ne.s32.totalorder %s668, %s669
    %p681 = scmp.eq.s32.totalorder %s71, 1
    %p682 = por %p680, %p681
    %p684 = scmp.ne.s32.totalorder %s669, %s683
    %p685 = scmp.eq.s32.totalorder %s71, 0
    %p686 = por %p684, %p685
    %s687 = ssub.s32 %s65, %s72
    %p688 = scmp.eq.s32.totalorder %s687, 0
    %s690 = sadd.s32 %s689, 1
    %s691 = scalar_select %p688, %s689, %s690
    %p694 = pneg %p688
    %p695 = scmp.eq.s32.totalorder %s65, 1
    %p696 = por %p694, %p695
    %p697 = scmp.ne.s32.totalorder %s689, %s692
    %p698 = scmp.eq.s32.totalorder %s65, 0
    %p699 = por %p697, %p698
    %p700 = scmp.ne.s32.totalorder %s689, %s692
    %p701 = scmp.eq.s32.totalorder %s70, 1
    %p702 = por %p700, %p701
    %p703 = scmp.ne.s32.totalorder %s692, %s693
    %p704 = scmp.eq.s32.totalorder %s70, 0
    %p705 = por %p703, %p704
    %p706 = scmp.ne.s32.totalorder %s692, %s693
    %p707 = scmp.eq.s32.totalorder %s71, 1
    %p708 = por %p706, %p707
    %p710 = scmp.ne.s32.totalorder %s693, %s709
    %p711 = scmp.eq.s32.totalorder %s71, 0
    %p712 = por %p710, %p711
    %p713 = scmp.le.s32.totalorder 1, %s65
    %p714 = scmp.lt.s32.totalorder %s65, 3
    %p715 = pnand %p713, %p714
    %p716 = pneg %p715
    // Predicated region
    $region9: #{unet_forward.1} parent=5 // pred_check
      _
    $region10: #{unet_forward.1} parent=5 // pred_check_branch
      %718 = sbr.rel (%p715) target = $region12
    $region11: #{unet_forward.1} parent=5 // pred_region
      %s719 = ssub.s32 %s65, 1
      // Predicated region
      $region13: #{unet_forward.1} parent=11 // pred_check
        %p720 = pneg %p112
      $region14: #{unet_forward.1} parent=11 // pred_check_branch
        %722 = sbr.rel (%p720) target = $region16
      $region15: #{unet_forward.1} parent=11 // pred_region
        _
      $region16: #{unet_forward.1} parent=11 // pred_fallthru
        _
      // Predicated region
      $region17: #{unet_forward.1} parent=11 // pred_check
        %p723 = pneg %p133
      $region18: #{unet_forward.1} parent=11 // pred_check_branch
        %725 = sbr.rel (%p723) target = $region20
      $region19: #{unet_forward.1} parent=11 // pred_region
        _
      $region20: #{unet_forward.1} parent=11 // pred_fallthru
        _
      // Predicated region
      $region21: #{unet_forward.1} parent=11 // pred_check
        %p726 = pneg %p154
      $region22: #{unet_forward.1} parent=11 // pred_check_branch
        %728 = sbr.rel (%p726) target = $region24
      $region23: #{unet_forward.1} parent=11 // pred_region
        _
      $region24: #{unet_forward.1} parent=11 // pred_fallthru
        _
      // Predicated region
      $region25: #{unet_forward.1} parent=11 // pred_check
        %p729 = pneg %p175
      $region26: #{unet_forward.1} parent=11 // pred_check_branch
        %731 = sbr.rel (%p729) target = $region28
      $region27: #{unet_forward.1} parent=11 // pred_region
        _
      $region28: #{unet_forward.1} parent=11 // pred_fallthru
        _
      // Predicated region
      $region29: #{unet_forward.1} parent=11 // pred_check
        %p732 = pneg %p196
      $region30: #{unet_forward.1} parent=11 // pred_check_branch
        %734 = sbr.rel (%p732) target = $region32
      $region31: #{unet_forward.1} parent=11 // pred_region
        _
      $region32: #{unet_forward.1} parent=11 // pred_fallthru
        _
      // Predicated region
      $region33: #{unet_forward.1} parent=11 // pred_check
        %p735 = pneg %p217
      $region34: #{unet_forward.1} parent=11 // pred_check_branch
        %737 = sbr.rel (%p735) target = $region36
      $region35: #{unet_forward.1} parent=11 // pred_region
        _
      $region36: #{unet_forward.1} parent=11 // pred_fallthru
        _
      // Predicated region
      $region37: #{unet_forward.1} parent=11 // pred_check
        %p738 = pneg %p238
      $region38: #{unet_forward.1} parent=11 // pred_check_branch
        %740 = sbr.rel (%p738) target = $region40
      $region39: #{unet_forward.1} parent=11 // pred_region
        _
      $region40: #{unet_forward.1} parent=11 // pred_fallthru
        _
      // Predicated region
      $region41: #{unet_forward.1} parent=11 // pred_check
        %p741 = pneg %p259
      $region42: #{unet_forward.1} parent=11 // pred_check_branch
        %743 = sbr.rel (%p741) target = $region44
      $region43: #{unet_forward.1} parent=11 // pred_region
        _
      $region44: #{unet_forward.1} parent=11 // pred_fallthru
        _
      // Predicated region
      $region45: #{unet_forward.1} parent=11 // pred_check
        %p744 = pneg %p280
      $region46: #{unet_forward.1} parent=11 // pred_check_branch
        %746 = sbr.rel (%p744) target = $region48
      $region47: #{unet_forward.1} parent=11 // pred_region
        _
      $region48: #{unet_forward.1} parent=11 // pred_fallthru
        _
      // Predicated region
      $region49: #{unet_forward.1} parent=11 // pred_check
        %p747 = pneg %p301
      $region50: #{unet_forward.1} parent=11 // pred_check_branch
        %749 = sbr.rel (%p747) target = $region52
      $region51: #{unet_forward.1} parent=11 // pred_region
        _
      $region52: #{unet_forward.1} parent=11 // pred_fallthru
        _
      // Predicated region
      $region53: #{unet_forward.1} parent=11 // pred_check
        %p750 = pneg %p322
      $region54: #{unet_forward.1} parent=11 // pred_check_branch
        %752 = sbr.rel (%p750) target = $region56
      $region55: #{unet_forward.1} parent=11 // pred_region
        _
      $region56: #{unet_forward.1} parent=11 // pred_fallthru
        _
      // Predicated region
      $region57: #{unet_forward.1} parent=11 // pred_check
        %p753 = pneg %p343
      $region58: #{unet_forward.1} parent=11 // pred_check_branch
        %755 = sbr.rel (%p753) target = $region60
      $region59: #{unet_forward.1} parent=11 // pred_region
        _
      $region60: #{unet_forward.1} parent=11 // pred_fallthru
        _
      // Predicated region
      $region61: #{unet_forward.1} parent=11 // pred_check
        %p756 = pneg %p364
      $region62: #{unet_forward.1} parent=11 // pred_check_branch
        %758 = sbr.rel (%p756) target = $region64
      $region63: #{unet_forward.1} parent=11 // pred_region
        _
      $region64: #{unet_forward.1} parent=11 // pred_fallthru
        _
      // Predicated region
      $region65: #{unet_forward.1} parent=11 // pred_check
        %p759 = pneg %p385
      $region66: #{unet_forward.1} parent=11 // pred_check_branch
        %761 = sbr.rel (%p759) target = $region68
      $region67: #{unet_forward.1} parent=11 // pred_region
        _
      $region68: #{unet_forward.1} parent=11 // pred_fallthru
        _
      // Predicated region
      $region69: #{unet_forward.1} parent=11 // pred_check
        %p762 = pneg %p406
      $region70: #{unet_forward.1} parent=11 // pred_check_branch
        %764 = sbr.rel (%p762) target = $region72
      $region71: #{unet_forward.1} parent=11 // pred_region
        _
      $region72: #{unet_forward.1} parent=11 // pred_fallthru
        _
      // Predicated region
      $region73: #{unet_forward.1} parent=11 // pred_check
        %p765 = pneg %p427
      $region74: #{unet_forward.1} parent=11 // pred_check_branch
        %767 = sbr.rel (%p765) target = $region76
      $region75: #{unet_forward.1} parent=11 // pred_region
        _
      $region76: #{unet_forward.1} parent=11 // pred_fallthru
        _
      // Predicated region
      $region77: #{unet_forward.1} parent=11 // pred_check
        %p768 = pneg %p448
      $region78: #{unet_forward.1} parent=11 // pred_check_branch
        %770 = sbr.rel (%p768) target = $region80
      $region79: #{unet_forward.1} parent=11 // pred_region
        _
      $region80: #{unet_forward.1} parent=11 // pred_fallthru
        _
      // Predicated region
      $region81: #{unet_forward.1} parent=11 // pred_check
        %p771 = pneg %p469
      $region82: #{unet_forward.1} parent=11 // pred_check_branch
        %773 = sbr.rel (%p771) target = $region84
      $region83: #{unet_forward.1} parent=11 // pred_region
        _
      $region84: #{unet_forward.1} parent=11 // pred_fallthru
        _
      // Predicated region
      $region85: #{unet_forward.1} parent=11 // pred_check
        %p774 = pneg %p490
      $region86: #{unet_forward.1} parent=11 // pred_check_branch
        %776 = sbr.rel (%p774) target = $region88
      $region87: #{unet_forward.1} parent=11 // pred_region
        _
      $region88: #{unet_forward.1} parent=11 // pred_fallthru
        _
      // Predicated region
      $region89: #{unet_forward.1} parent=11 // pred_check
        %p777 = pneg %p511
      $region90: #{unet_forward.1} parent=11 // pred_check_branch
        %779 = sbr.rel (%p777) target = $region92
      $region91: #{unet_forward.1} parent=11 // pred_region
        _
      $region92: #{unet_forward.1} parent=11 // pred_fallthru
        _
      // Predicated region
      $region93: #{unet_forward.1} parent=11 // pred_check
        %p780 = pneg %p532
      $region94: #{unet_forward.1} parent=11 // pred_check_branch
        %782 = sbr.rel (%p780) target = $region96
      $region95: #{unet_forward.1} parent=11 // pred_region
        _
      $region96: #{unet_forward.1} parent=11 // pred_fallthru
        _
      // Predicated region
      $region97: #{unet_forward.1} parent=11 // pred_check
        %p783 = pneg %p553
      $region98: #{unet_forward.1} parent=11 // pred_check_branch
        %785 = sbr.rel (%p783) target = $region100
      $region99: #{unet_forward.1} parent=11 // pred_region
        _
      $region100: #{unet_forward.1} parent=11 // pred_fallthru
        _
      // Predicated region
      $region101: #{unet_forward.1} parent=11 // pred_check
        %p786 = pneg %p574
      $region102: #{unet_forward.1} parent=11 // pred_check_branch
        %788 = sbr.rel (%p786) target = $region104
      $region103: #{unet_forward.1} parent=11 // pred_region
        _
      $region104: #{unet_forward.1} parent=11 // pred_fallthru
        _
      // Predicated region
      $region105: #{unet_forward.1} parent=11 // pred_check
        %p789 = pneg %p595
      $region106: #{unet_forward.1} parent=11 // pred_check_branch
        %791 = sbr.rel (%p789) target = $region108
      $region107: #{unet_forward.1} parent=11 // pred_region
        _
      $region108: #{unet_forward.1} parent=11 // pred_fallthru
        _
      // Predicated region
      $region109: #{unet_forward.1} parent=11 // pred_check
        %p792 = pneg %p616
      $region110: #{unet_forward.1} parent=11 // pred_check_branch
        %794 = sbr.rel (%p792) target = $region112
      $region111: #{unet_forward.1} parent=11 // pred_region
        _
      $region112: #{unet_forward.1} parent=11 // pred_fallthru
        _
      // Predicated region
      $region113: #{unet_forward.1} parent=11 // pred_check
        %p795 = pneg %p637
      $region114: #{unet_forward.1} parent=11 // pred_check_branch
        %797 = sbr.rel (%p795) target = $region116
      $region115: #{unet_forward.1} parent=11 // pred_region
        _
      $region116: #{unet_forward.1} parent=11 // pred_fallthru
        _
      // Predicated region
      $region117: #{unet_forward.1} parent=11 // pred_check
        %p798 = pneg %p658
      $region118: #{unet_forward.1} parent=11 // pred_check_branch
        %800 = sbr.rel (%p798) target = $region120
      $region119: #{unet_forward.1} parent=11 // pred_region
        _
      $region120: #{unet_forward.1} parent=11 // pred_fallthru
        _
      // Predicated region
      $region121: #{unet_forward.1} parent=11 // pred_check
        %p801 = pneg %p679
      $region122: #{unet_forward.1} parent=11 // pred_check_branch
        %803 = sbr.rel (%p801) target = $region124
      $region123: #{unet_forward.1} parent=11 // pred_region
        _
      $region124: #{unet_forward.1} parent=11 // pred_fallthru
        _
    $region12: #{unet_forward.1} parent=5 // pred_fallthru
      _
    %p804 = scmp.lt.s32.totalorder %s65, 2
    // Predicated region
    $region125: #{unet_forward.1} parent=5 // pred_check
      %p805 = pneg %p804
    $region126: #{unet_forward.1} parent=5 // pred_check_branch
      %807 = sbr.rel (%p805) target = $region128
    $region127: #{unet_forward.1} parent=5 // pred_region
      // Predicated region
      $region129: #{unet_forward.1} parent=127 // pred_check
        %p808 = pneg %p85
      $region130: #{unet_forward.1} parent=127 // pred_check_branch
        %810 = sbr.rel (%p808) target = $region132
      $region131: #{unet_forward.1} parent=127 // pred_region
        %p811 = scmp.lt.s32.totalorder %s65, 1
        %s812 = scalar_select %p811, %s65, 1
        %s813 = smul.addr %s812, 2
        %s814 = smul.addr %s813, 8
        %s815 = scalar_lea.vmem %s1, %s814
      $region132: #{unet_forward.1} parent=127 // pred_fallthru
        _
    $region128: #{unet_forward.1} parent=5 // pred_fallthru
      _
    %p816 = scmp.le.s32.totalorder 1, %s65
    %p817 = scmp.lt.s32.totalorder %s65, 3
    %p818 = pnand %p816, %p817
    %p819 = pneg %p818
    // Predicated region
    $region133: #{unet_forward.1} parent=5 // pred_check
      _
    $region134: #{unet_forward.1} parent=5 // pred_check_branch
      %821 = sbr.rel (%p818) target = $region136
    $region135: #{unet_forward.1} parent=5 // pred_region
      %s822 = ssub.s32 %s65, 1
      %p823 = scmp.lt.s32.totalorder %s70, 1
      %s824 = scalar_select %p823, %s70, 1
      %s825 = smul.addr %s824, 2
      %s826 = smul.addr %s825, 8
      %s827 = scalar_lea.vmem %s1, %s826
      %p828 = pneg %p91
      %p829 = pneg %p88
      %p830 = pneg %p112
      %p831 = pneg %p109
      %p832 = pneg %p133
      %p833 = pneg %p130
      %p834 = pneg %p154
      %p835 = pneg %p151
      %p836 = pneg %p175
      %p837 = pneg %p172
      %p838 = pneg %p196
      %p839 = pneg %p193
      %p840 = pneg %p217
      %p841 = pneg %p214
      %p842 = pneg %p238
      %p843 = pneg %p235
      %p844 = pneg %p259
      %p845 = pneg %p256
      %p846 = pneg %p280
      %p847 = pneg %p277
      %p848 = pneg %p301
      %p849 = pneg %p298
      %p850 = pneg %p322
      %p851 = pneg %p319
      %p852 = pneg %p343
      %p853 = pneg %p340
      %p854 = pneg %p364
      %p855 = pneg %p361
      %p856 = pneg %p385
      %p857 = pneg %p382
      %p858 = pneg %p406
      %p859 = pneg %p403
      %p860 = pneg %p427
      %p861 = pneg %p424
      %p862 = pneg %p448
      %p863 = pneg %p445
      %p864 = pneg %p469
      %p865 = pneg %p466
      %p866 = pneg %p490
      %p867 = pneg %p487
      %p868 = pneg %p511
      %p869 = pneg %p508
      %p870 = pneg %p532
      %p871 = pneg %p529
      %p872 = pneg %p553
      %p873 = pneg %p550
      %p874 = pneg %p574
      %p875 = pneg %p571
      %p876 = pneg %p595
      %p877 = pneg %p592
      %p878 = pneg %p616
      %p879 = pneg %p613
      %p880 = pneg %p637
      %p881 = pneg %p634
      %p882 = pneg %p658
      %p883 = pneg %p655
      %p884 = pneg %p679
      %p885 = pneg %p676
      %p886 = pneg %p705
      %p887 = pneg %p702
      %p888 = scmp.lt.s32.totalorder %s70, 1
      %s889 = scalar_select %p888, %s70, 1
      %s890 = smul.addr %s889, 2
      %s891 = smul.addr %s890, 8
      %s892 = scalar_lea.vmem %s59, %s891
      %p893 = scmp.lt.s32.totalorder %s70, 1
      %s894 = scalar_select %p893, %s70, 1
      %s895 = smul.addr %s894, 2
      %s896 = smul.addr %s895, 8
      %s897 = scalar_lea.vmem %s1, %s896
      %p898 = scmp.lt.s32.totalorder %s70, 1
      %s899 = scalar_select %p898, %s70, 1
      %s900 = smul.addr %s899, 2
      %s901 = smul.addr %s900, 8
      %s902 = scalar_lea.vmem %s59, %s901
      %v904 = vlaneseq
      %v905 = vand.u32 %v904, 127
      %v906 = vadd.s32 %v905, 128
      %vm907 = vcmp.lt.s32.totalorder %v905, 0
      %v908 = vsub.s32 0, %v905
      %v909 = vsel %vm907, %v908, %v905
      %v910 = vshrl.u32 %v909, 4
      %v911 = vand.u32 %v909, 15
      %v912 = vsub.s32 0, %v911
      %v913 = vsel %vm907, %v912, %v911
      %vm914 = vcmp.lt.s32.totalorder %v906, 0
      %v915 = vsub.s32 0, %v906
      %v916 = vsel %vm914, %v915, %v906
      %v917 = vshrl.u32 %v916, 4
      %v918 = vand.u32 %v916, 15
      %v919 = vsub.s32 0, %v918
      %v920 = vsel %vm914, %v919, %v918
      %vm921 = vcmp.ne.s32.totalorder %v913, 0
      %vm922 = vcmp.ne.s32.totalorder %v920, 0
      %vm923 = vcmp.lt.s32.totalorder %v913, 0
      %vm924 = vcmp.lt.s32.totalorder %v920, 0
      %vm925 = vmand %vm923, %vm921
      %vm926 = vmand %vm924, %vm922
      %v927 = vadd.s32 %v913, 16
      %v928 = vadd.s32 %v920, 16
      %v929 = vsel %vm925, %v927, %v913
      %v930 = vsel %vm926, %v928, %v920
      %vm931 = vcmp.ge.s32.totalorder %v905, 16
      %vm932 = vcmp.ge.s32.totalorder %v906, 16
      %vm933 = vcmp.ge.s32.totalorder %v929, 1
      %vm934 = vcmp.ge.s32.totalorder %v930, 1
      %vm935 = vmand %vm931, %vm933
      %vm936 = vmand %vm932, %vm934
      %vm937 = vcmp.le.s32.totalorder %v929, 14
      %vm938 = vcmp.le.s32.totalorder %v930, 14
      %vm939 = vmand %vm931, %vm937
      %vm940 = vmand %vm932, %vm938
      %vm941 = vcmp.lt.s32.totalorder %v905, 240
      %vm942 = vcmp.lt.s32.totalorder %v906, 240
      %vm943 = vmand %vm941, %vm933
      %vm944 = vmand %vm942, %vm934
      %vm945 = vmand %vm941, %vm937
      %vm946 = vmand %vm942, %vm938
      %vm947 = vcmp.lt.s32.totalorder %v905, 0
      %v948 = vsub.s32 0, %v905
      %v949 = vsel %vm947, %v948, %v905
      %v950 = vshrl.u32 %v949, 3
      %v951 = vand.u32 %v949, 7
      %v952 = vsub.s32 0, %v951
      %v953 = vsel %vm947, %v952, %v951
      %vm954 = vcmp.ne.s32.totalorder %v953, 0
      %vm955 = vcmp.lt.s32.totalorder %v953, 0
      %vm956 = vmand %vm955, %vm954
      %v957 = vadd.s32 %v953, 8
      %v958 = vsel %vm956, %v957, %v953
      %vm959 = vcmp.ge.s32.totalorder %v905, 8
      %vm960 = vcmp.ge.s32.totalorder %v958, 1
      %vm961 = vmand %vm959, %vm960
      %vm962 = vcmp.le.s32.totalorder %v958, 6
      %vm963 = vmand %vm959, %vm962
      %vm964 = vcmp.lt.s32.totalorder %v905, 56
      %vm965 = vmand %vm964, %vm960
      %vm966 = vmand %vm964, %vm962
      %vm967 = vcmp.lt.s32.totalorder %v905, 0
      %v968 = vsub.s32 0, %v905
      %v969 = vsel %vm967, %v968, %v905
      %v970 = vshrl.u32 %v969, 2
      %v971 = vand.u32 %v969, 3
      %v972 = vsub.s32 0, %v971
      %v973 = vsel %vm967, %v972, %v971
      %vm974 = vcmp.ne.s32.totalorder %v973, 0
      %vm975 = vcmp.lt.s32.totalorder %v973, 0
      %vm976 = vmand %vm975, %vm974
      %v977 = vadd.s32 %v973, 4
      %v978 = vsel %vm976, %v977, %v973
      %vm979 = vcmp.ge.s32.totalorder %v905, 4
      %vm980 = vcmp.ge.s32.totalorder %v978, 1
      %vm981 = vmand %vm979, %vm980
      %vm982 = vcmp.le.s32.totalorder %v978, 2
      %vm983 = vmand %vm979, %vm982
      %vm984 = vcmp.lt.s32.totalorder %v905, 12
      %vm985 = vmand %vm984, %vm980
      %vm986 = vmand %vm984, %vm982
      %v987 = vld [vmem:[%s897] sm:$0xff]
      %v988 = vld [vmem:[%s897 + $0x8] sm:$0xff]
      %989 = vrot.lane.b32.xlu0 %v987, 17
      %v990 = vpop.permute.xlu0 %989
      %991 = vrot.lane.b32.xlu0 %v988, 17
      %v992 = vpop.permute.xlu0 %991
      %vm993 = vcmp.lt.s32.totalorder %v905, 17
      %v994 = vsel %vm993, %v990, %v992
      %v995 = vsel %vm993, %v992, %v990
      %v996 = vsel %vm935, 1, 0
      %v997 = vsel %vm936, 1, 0
      %vm998 = vcmp.eq.s32.totalorder %v996, 1
      %vm999 = vcmp.eq.s32.totalorder %v997, 1
      %v1000 = vsel %vm998, %v995, 0.0
      %v1001 = vsel %vm999, %v994, 0.0
      %1002 = vrot.lane.b32.xlu0 %v987, 16
      %v1003 = vpop.permute.xlu0 %1002
      %1004 = vrot.lane.b32.xlu0 %v988, 16
      %v1005 = vpop.permute.xlu0 %1004
      %vm1006 = vcmp.lt.s32.totalorder %v905, 16
      %v1007 = vsel %vm1006, %v1003, %v1005
      %v1008 = vsel %vm1006, %v1005, %v1003
      %v1009 = vsel %vm931, 1, 0
      %v1010 = vsel %vm932, 1, 0
      %vm1011 = vcmp.eq.s32.totalorder %v1009, 1
      %vm1012 = vcmp.eq.s32.totalorder %v1010, 1
      %v1013 = vsel %vm1011, %v1008, 0.0
      %v1014 = vsel %vm1012, %v1007, 0.0
      %1015 = vrot.lane.b32.xlu0 %v987, 15
      %v1016 = vpop.permute.xlu0 %1015
      %1017 = vrot.lane.b32.xlu0 %v988, 15
      %v1018 = vpop.permute.xlu0 %1017
      %vm1019 = vcmp.lt.s32.totalorder %v905, 15
      %v1020 = vsel %vm1019, %v1016, %v1018
      %v1021 = vsel %vm1019, %v1018, %v1016
      %v1022 = vsel %vm939, 1, 0
      %v1023 = vsel %vm940, 1, 0
      %vm1024 = vcmp.eq.s32.totalorder %v1022, 1
      %vm1025 = vcmp.eq.s32.totalorder %v1023, 1
      %v1026 = vsel %vm1024, %v1021, 0.0
      %v1027 = vsel %vm1025, %v1020, 0.0
      %1028 = vrot.lane.b32.xlu0 %v987, 1
      %v1029 = vpop.permute.xlu0 %1028
      %1030 = vrot.lane.b32.xlu0 %v988, 1
      %v1031 = vpop.permute.xlu0 %1030
      %vm1032 = vcmp.lt.s32.totalorder %v905, 1
      %v1033 = vsel %vm1032, %v1029, %v1031
      %v1034 = vsel %vm1032, %v1031, %v1029
      %v1035 = vsel %vm933, 1, 0
      %v1036 = vsel %vm934, 1, 0
      %vm1037 = vcmp.eq.s32.totalorder %v1035, 1
      %vm1038 = vcmp.eq.s32.totalorder %v1036, 1
      %v1039 = vsel %vm1037, %v1034, 0.0
      %v1040 = vsel %vm1038, %v1033, 0.0
      %1041 = vrot.lane.b32.xlu0 %v987, 127
      %v1042 = vpop.permute.xlu0 %1041
      %1043 = vrot.lane.b32.xlu0 %v988, 127
      %v1044 = vpop.permute.xlu0 %1043
      %vm1045 = vcmp.lt.s32.totalorder %v905, 127
      %v1046 = vsel %vm1045, %v1042, %v1044
      %v1047 = vsel %vm1045, %v1044, %v1042
      %v1048 = vsel %vm937, 1, 0
      %v1049 = vsel %vm938, 1, 0
      %vm1050 = vcmp.eq.s32.totalorder %v1048, 1
      %vm1051 = vcmp.eq.s32.totalorder %v1049, 1
      %v1052 = vsel %vm1050, %v1046, 0.0
      %v1053 = vsel %vm1051, %v1047, 0.0
      %1054 = vrot.lane.b32.xlu0 %v987, 113
      %v1055 = vpop.permute.xlu0 %1054
      %1056 = vrot.lane.b32.xlu0 %v988, 113
      %v1057 = vpop.permute.xlu0 %1056
      %vm1058 = vcmp.lt.s32.totalorder %v905, 113
      %v1059 = vsel %vm1058, %v1055, %v1057
      %v1060 = vsel %vm1058, %v1057, %v1055
      %v1061 = vsel %vm943, 1, 0
      %v1062 = vsel %vm944, 1, 0
      %vm1063 = vcmp.eq.s32.totalorder %v1061, 1
      %vm1064 = vcmp.eq.s32.totalorder %v1062, 1
      %v1065 = vsel %vm1063, %v1059, 0.0
      %v1066 = vsel %vm1064, %v1060, 0.0
      %1067 = vrot.lane.b32.xlu0 %v987, 112
      %v1068 = vpop.permute.xlu0 %1067
      %1069 = vrot.lane.b32.xlu0 %v988, 112
      %v1070 = vpop.permute.xlu0 %1069
      %vm1071 = vcmp.lt.s32.totalorder %v905, 112
      %v1072 = vsel %vm1071, %v1068, %v1070
      %v1073 = vsel %vm1071, %v1070, %v1068
      %v1074 = vsel %vm941, 1, 0
      %v1075 = vsel %vm942, 1, 0
      %vm1076 = vcmp.eq.s32.totalorder %v1074, 1
      %vm1077 = vcmp.eq.s32.totalorder %v1075, 1
      %v1078 = vsel %vm1076, %v1072, 0.0
      %v1079 = vsel %vm1077, %v1073, 0.0
      %1080 = vrot.lane.b32.xlu0 %v987, 111
      %v1081 = vpop.permute.xlu0 %1080
      %1082 = vrot.lane.b32.xlu0 %v988, 111
      %v1083 = vpop.permute.xlu0 %1082
      %vm1084 = vcmp.lt.s32.totalorder %v905, 111
      %v1085 = vsel %vm1084, %v1081, %v1083
      %v1086 = vsel %vm1084, %v1083, %v1081
      %v1087 = vsel %vm945, 1, 0
      %v1088 = vsel %vm946, 1, 0
      %vm1089 = vcmp.eq.s32.totalorder %v1087, 1
      %vm1090 = vcmp.eq.s32.totalorder %v1088, 1
      %v1091 = vsel %vm1089, %v1085, 0.0
      %v1092 = vsel %vm1090, %v1086, 0.0
      %v1093 = vpack.c.bf16 %v1013, %v1000
      %v1094 = vpack.c.bf16 %v1014, %v1001
      %v1095 = vpack.c.bf16 %v1039, %v1026
      %v1096 = vpack.c.bf16 %v1040, %v1027
      %v1097 = vpack.c.bf16 %v1052, %v987
      %v1098 = vpack.c.bf16 %v1053, %v988
      %v1099 = vpack.c.bf16 %v1078, %v1065
      %v1100 = vpack.c.bf16 %v1079, %v1066
      %v1101 = vpack.c.bf16 %v1091, %v1091
      %v1102 = vpack.c.bf16 %v1092, %v1092
      %v1103 = vld [vmem:[%s3] sm:$0xf]
      %v1104 = vld [vmem:[%s5] sm:$0xff]
      %1106 = vset.pattern.permute.xlu0 0
      %1107 = vperm.xlu0 %1106, %v1104
      %v1108 = vpop.permute.xlu0 %1107
      %vm1110 = vcmask 588800
      %v1112 = vsel %vm1110, %v1103, 0
      %vm1114 = vcmask 1043456
      %v1116 = vsel %vm1114, %v1101, 0
      %v1119 = vsel %vm1114, %v1102, 0
      %1121 = vmatprep.subr.bf16.mxu0 0
      %1122 = vmatpush1.bf16.msra.mxu0 0
      %1123 = vmatprep.subr.bf16.mxu0 0
      %1124 = vmatpush1.bf16.msra.mxu0 0
      %1125 = vmatprep.subr.bf16.mxu0 0
      %1126 = vmatpush1.bf16.msra.mxu0 0
      %1127 = vmatprep.subr.bf16.mxu0 %v1119
      %1128 = vmatpush1.bf16.msra.mxu0 %v1116
      %1129 = vmatprep.subr.bf16.mxu0 %v1100
      %1130 = vmatpush1.bf16.msra.mxu0 %v1099
      %1131 = vmatprep.subr.bf16.mxu0 %v1098
      %1132 = vmatpush1.bf16.msra.mxu0 %v1097
      %1133 = vmatprep.subr.bf16.mxu0 %v1096
      %1134 = vmatpush1.bf16.msra.mxu0 %v1095
      %1135 = vmatprep.subr.bf16.mxu0 %v1094
      %1136 = vmatpush1.bf16.msra.mxu0 %v1093
      %1137 = vmatprep.subr.bf16.mxu0 0
      %1138 = vmatpush2.bf16.msra.mxu0 0
      %1139 = vmatprep.subr.bf16.mxu0 0
      %1140 = vmatpush2.bf16.msra.mxu0 0
      %1141 = vmatprep.subr.bf16.mxu0 0
      %1142 = vmatpush2.bf16.msra.mxu0 0
      %1143 = vmatprep.subr.bf16.mxu0 0
      %1144 = vmatpush2.bf16.msra.mxu0 0
      %1145 = vmatprep.subr.bf16.mxu0 0
      %1146 = vmatpush2.bf16.msra.mxu0 0
      %1147 = vmatprep.subr.bf16.mxu0 0
      %1148 = vmatpush2.bf16.msra.mxu0 0
      %1149 = vmatprep.subr.bf16.mxu0 0
      %1150 = vmatpush2.bf16.msra.mxu0 0
      %1151 = vmatprep.subr.bf16.mxu0 0
      %1152 = vmatpush2.bf16.msra.mxu0 0
      %1153 = vmatprep.mubr.bf16.mxu0 0
      %1154 = vmatmul.mubr.bf16.gmra.mxu0 %v1112
      %v1155 = vpop.f32.mrf.mxu0
      %v1156 = vadd.f32 %v1108, %v1155
      %v1157 = vpop.f32.mrf.mxu0
      %v1158 = vadd.f32 %v1108, %v1157
      %v1159 = vpop.f32.mrf.mxu0
      %v1160 = vpop.f32.mrf.mxu0
      %1161 = vdwg.mxu0
      %v1162 = vmax.f32 %v1156, 0.0
      %v1163 = vmax.f32 %v1158, 0.0
      %1164 = vrot.lane.b32.xlu0 %v1162, 17
      %v1165 = vpop.permute.xlu0 %1164
      %1166 = vrot.lane.b32.xlu0 %v1163, 17
      %v1167 = vpop.permute.xlu0 %1166
      %v1168 = vsel %vm993, %v1165, %v1167
      %v1169 = vsel %vm993, %v1167, %v1165
      %v1170 = vsel %vm998, %v1169, 0.0
      %v1171 = vsel %vm999, %v1168, 0.0
      %1172 = vrot.lane.b32.xlu0 %v1162, 16
      %v1173 = vpop.permute.xlu0 %1172
      %1174 = vrot.lane.b32.xlu0 %v1163, 16
      %v1175 = vpop.permute.xlu0 %1174
      %v1176 = vsel %vm1006, %v1173, %v1175
      %v1177 = vsel %vm1006, %v1175, %v1173
      %v1178 = vsel %vm1011, %v1177, 0.0
      %v1179 = vsel %vm1012, %v1176, 0.0
      %1180 = vrot.lane.b32.xlu0 %v1162, 15
      %v1181 = vpop.permute.xlu0 %1180
      %1182 = vrot.lane.b32.xlu0 %v1163, 15
      %v1183 = vpop.permute.xlu0 %1182
      %v1184 = vsel %vm1019, %v1181, %v1183
      %v1185 = vsel %vm1019, %v1183, %v1181
      %v1186 = vsel %vm1024, %v1185, 0.0
      %v1187 = vsel %vm1025, %v1184, 0.0
      %1188 = vrot.lane.b32.xlu0 %v1162, 1
      %v1189 = vpop.permute.xlu0 %1188
      %1190 = vrot.lane.b32.xlu0 %v1163, 1
      %v1191 = vpop.permute.xlu0 %1190
      %v1192 = vsel %vm1032, %v1189, %v1191
      %v1193 = vsel %vm1032, %v1191, %v1189
      %v1194 = vsel %vm1037, %v1193, 0.0
      %v1195 = vsel %vm1038, %v1192, 0.0
      %1196 = vrot.lane.b32.xlu0 %v1162, 127
      %v1197 = vpop.permute.xlu0 %1196
      %1198 = vrot.lane.b32.xlu0 %v1163, 127
      %v1199 = vpop.permute.xlu0 %1198
      %v1200 = vsel %vm1045, %v1197, %v1199
      %v1201 = vsel %vm1045, %v1199, %v1197
      %v1202 = vsel %vm1050, %v1200, 0.0
      %v1203 = vsel %vm1051, %v1201, 0.0
      %1204 = vrot.lane.b32.xlu0 %v1162, 113
      %v1205 = vpop.permute.xlu0 %1204
      %1206 = vrot.lane.b32.xlu0 %v1163, 113
      %v1207 = vpop.permute.xlu0 %1206
      %v1208 = vsel %vm1058, %v1205, %v1207
      %v1209 = vsel %vm1058, %v1207, %v1205
      %v1210 = vsel %vm1063, %v1208, 0.0
      %v1211 = vsel %vm1064, %v1209, 0.0
      %1212 = vrot.lane.b32.xlu0 %v1162, 112
      %v1213 = vpop.permute.xlu0 %1212
      %1214 = vrot.lane.b32.xlu0 %v1163, 112
      %v1215 = vpop.permute.xlu0 %1214
      %v1216 = vsel %vm1071, %v1213, %v1215
      %v1217 = vsel %vm1071, %v1215, %v1213
      %v1218 = vsel %vm1076, %v1216, 0.0
      %v1219 = vsel %vm1077, %v1217, 0.0
      %1220 = vrot.lane.b32.xlu0 %v1162, 111
      %v1221 = vpop.permute.xlu0 %1220
      %1222 = vrot.lane.b32.xlu0 %v1163, 111
      %v1223 = vpop.permute.xlu0 %1222
      %v1224 = vsel %vm1084, %v1221, %v1223
      %v1225 = vsel %vm1084, %v1223, %v1221
      %v1226 = vsel %vm1089, %v1224, 0.0
      %v1227 = vsel %vm1090, %v1225, 0.0
      %v1228 = vpack.c.bf16 %v1178, %v1170
      %v1229 = vpack.c.bf16 %v1179, %v1171
      %v1230 = vpack.c.bf16 %v1194, %v1186
      %v1231 = vpack.c.bf16 %v1195, %v1187
      %v1232 = vpack.c.bf16 %v1202, %v1162
      %v1233 = vpack.c.bf16 %v1203, %v1163
      %v1234 = vpack.c.bf16 %v1218, %v1210
      %v1235 = vpack.c.bf16 %v1219, %v1211
      %v1236 = vpack.c.bf16 %v1226, %v1226
      %v1237 = vpack.c.bf16 %v1227, %v1227
      %v1238 = vld [vmem:[%s7] sm:$0xf]
      %v1239 = vld [vmem:[%s9] sm:$0xff]
      %1241 = vset.pattern.permute.xlu0 0
      %1242 = vperm.xlu0 %1241, %v1239
      %v1243 = vpop.permute.xlu0 %1242
      %v1246 = vsel %vm1110, %v1238, 0
      %v1249 = vsel %vm1114, %v1236, 0
      %v1252 = vsel %vm1114, %v1237, 0
      %1254 = vmatprep.subr.bf16.mxu0 0
      %1255 = vmatpush1.bf16.msra.mxu0 0
      %1256 = vmatprep.subr.bf16.mxu0 0
      %1257 = vmatpush1.bf16.msra.mxu0 0
      %1258 = vmatprep.subr.bf16.mxu0 0
      %1259 = vmatpush1.bf16.msra.mxu0 0
      %1260 = vmatprep.subr.bf16.mxu0 %v1252
      %1261 = vmatpush1.bf16.msra.mxu0 %v1249
      %1262 = vmatprep.subr.bf16.mxu0 %v1235
      %1263 = vmatpush1.bf16.msra.mxu0 %v1234
      %1264 = vmatprep.subr.bf16.mxu0 %v1233
      %1265 = vmatpush1.bf16.msra.mxu0 %v1232
      %1266 = vmatprep.subr.bf16.mxu0 %v1231
      %1267 = vmatpush1.bf16.msra.mxu0 %v1230
      %1268 = vmatprep.subr.bf16.mxu0 %v1229
      %1269 = vmatpush1.bf16.msra.mxu0 %v1228
      %1270 = vmatprep.subr.bf16.mxu0 0
      %1271 = vmatpush2.bf16.msra.mxu0 0
      %1272 = vmatprep.subr.bf16.mxu0 0
      %1273 = vmatpush2.bf16.msra.mxu0 0
      %1274 = vmatprep.subr.bf16.mxu0 0
      %1275 = vmatpush2.bf16.msra.mxu0 0
      %1276 = vmatprep.subr.bf16.mxu0 0
      %1277 = vmatpush2.bf16.msra.mxu0 0
      %1278 = vmatprep.subr.bf16.mxu0 0
      %1279 = vmatpush2.bf16.msra.mxu0 0
      %1280 = vmatprep.subr.bf16.mxu0 0
      %1281 = vmatpush2.bf16.msra.mxu0 0
      %1282 = vmatprep.subr.bf16.mxu0 0
      %1283 = vmatpush2.bf16.msra.mxu0 0
      %1284 = vmatprep.subr.bf16.mxu0 0
      %1285 = vmatpush2.bf16.msra.mxu0 0
      %1286 = vmatprep.mubr.bf16.mxu0 0
      %1287 = vmatmul.mubr.bf16.gmra.mxu0 %v1246
      %v1288 = vpop.f32.mrf.mxu0
      %v1289 = vadd.f32 %v1243, %v1288
      %v1290 = vpop.f32.mrf.mxu0
      %v1291 = vadd.f32 %v1243, %v1290
      %v1292 = vpop.f32.mrf.mxu0
      %v1293 = vpop.f32.mrf.mxu0
      %1294 = vdwg.mxu0
      %v1295 = vmax.f32 %v1289, 0.0
      %v1296 = vmax.f32 %v1291, 0.0
      %1297 = vrot.lane.b32.xlu0 %v1295, 127
      %v1298 = vpop.permute.xlu0 %1297
      %1299 = vrot.lane.b32.xlu0 %v1296, 127
      %v1300 = vpop.permute.xlu0 %1299
      %v1301 = vsel %vm1045, %v1298, %v1300
      %v1302 = vsel %vm1045, %v1300, %v1298
      %v1303 = vmax.f32 %v1295, %v1301
      %v1304 = vmax.f32 %v1296, %v1302
      %1305 = vrot.lane.b32.xlu0 %v1303, 112
      %v1306 = vpop.permute.xlu0 %1305
      %1307 = vrot.lane.b32.xlu0 %v1304, 112
      %v1308 = vpop.permute.xlu0 %1307
      %v1309 = vsel %vm1071, %v1306, %v1308
      %v1310 = vsel %vm1071, %v1308, %v1306
      %v1311 = vmax.f32 %v1303, %v1309
      %v1312 = vmax.f32 %v1304, %v1310
      %v1313 = vpack.c.bf16 %v1311, %v1311
      %v1314 = vpack.c.bf16 %v1312, %v1312
      %v1315 = vld [vmem:[%s51] sm:$0xf]
      %v1316 = vld [vmem:[%s51 + $0x4] sm:$0xf]
      %v1317 = vld [vmem:[%s51 + $0x8] sm:$0xf]
      %v1318 = vld [vmem:[%s51 + $0xc] sm:$0xf]
      %v1319 = vld [vmem:[%s51 + $0x10] sm:$0xf]
      %v1320 = vld [vmem:[%s51 + $0x14] sm:$0xf]
      %v1321 = vld [vmem:[%s51 + $0x18] sm:$0xf]
      %v1322 = vld [vmem:[%s51 + $0x1c] sm:$0xf]
      %v1323 = vld [vmem:[%s51 + $0x20] sm:$0xf]
      %v1324 = vld [vmem:[%s51 + $0x24] sm:$0xf]
      %v1325 = vld [vmem:[%s51 + $0x28] sm:$0xf]
      %v1326 = vld [vmem:[%s51 + $0x2c] sm:$0xf]
      %v1327 = vld [vmem:[%s51 + $0x30] sm:$0xf]
      %v1328 = vld [vmem:[%s51 + $0x34] sm:$0xf]
      %v1329 = vld [vmem:[%s51 + $0x38] sm:$0xf]
      %v1330 = vld [vmem:[%s51 + $0x3c] sm:$0xf]
      %v1331 = vld [vmem:[%s51 + $0x40] sm:$0xf]
      %v1332 = vld [vmem:[%s51 + $0x44] sm:$0xf]
      %v1333 = vld [vmem:[%s51 + $0x48] sm:$0xf]
      %v1334 = vld [vmem:[%s51 + $0x4c] sm:$0xf]
      %v1335 = vld [vmem:[%s51 + $0x50] sm:$0xf]
      %v1336 = vld [vmem:[%s51 + $0x54] sm:$0xf]
      %v1337 = vld [vmem:[%s51 + $0x58] sm:$0xf]
      %v1338 = vld [vmem:[%s51 + $0x5c] sm:$0xf]
      %v1339 = vld [vmem:[%s51 + $0x60] sm:$0xf]
      %v1340 = vld [vmem:[%s51 + $0x64] sm:$0xf]
      %v1341 = vld [vmem:[%s51 + $0x68] sm:$0xf]
      %v1342 = vld [vmem:[%s51 + $0x6c] sm:$0xf]
      %v1343 = vld [vmem:[%s51 + $0x70] sm:$0xf]
      %v1344 = vld [vmem:[%s51 + $0x74] sm:$0xf]
      %v1345 = vld [vmem:[%s51 + $0x78] sm:$0xf]
      %v1346 = vld [vmem:[%s51 + $0x7c] sm:$0xf]
      %v1379 = vunpack.c.l.b16 %v1315
      %v1380 = vunpack.c.l.b16 %v1316
      %v1381 = vunpack.c.l.b16 %v1317
      %v1382 = vunpack.c.l.b16 %v1318
      %v1383 = vunpack.c.l.b16 %v1319
      %v1384 = vunpack.c.l.b16 %v1320
      %v1385 = vunpack.c.l.b16 %v1321
      %v1386 = vunpack.c.l.b16 %v1322
      %v1387 = vunpack.c.l.b16 %v1323
      %v1388 = vunpack.c.l.b16 %v1324
      %v1389 = vunpack.c.l.b16 %v1325
      %v1390 = vunpack.c.l.b16 %v1326
      %v1391 = vunpack.c.l.b16 %v1327
      %v1392 = vunpack.c.l.b16 %v1328
      %v1393 = vunpack.c.l.b16 %v1329
      %v1394 = vunpack.c.l.b16 %v1330
      %v1395 = vunpack.c.l.b16 %v1331
      %v1396 = vunpack.c.l.b16 %v1332
      %v1397 = vunpack.c.l.b16 %v1333
      %v1398 = vunpack.c.l.b16 %v1334
      %v1399 = vunpack.c.l.b16 %v1335
      %v1400 = vunpack.c.l.b16 %v1336
      %v1401 = vunpack.c.l.b16 %v1337
      %v1402 = vunpack.c.l.b16 %v1338
      %v1403 = vunpack.c.l.b16 %v1339
      %v1404 = vunpack.c.l.b16 %v1340
      %v1405 = vunpack.c.l.b16 %v1341
      %v1406 = vunpack.c.l.b16 %v1342
      %v1407 = vunpack.c.l.b16 %v1343
      %v1408 = vunpack.c.l.b16 %v1344
      %v1409 = vunpack.c.l.b16 %v1345
      %v1410 = vunpack.c.l.b16 %v1346
      %v1411 = vpack.c.b16 %v1380, %v1379
      %v1412 = vpack.c.b16 %v1382, %v1381
      %v1413 = vpack.c.b16 %v1384, %v1383
      %v1414 = vpack.c.b16 %v1386, %v1385
      %v1415 = vpack.c.b16 %v1388, %v1387
      %v1416 = vpack.c.b16 %v1390, %v1389
      %v1417 = vpack.c.b16 %v1392, %v1391
      %v1418 = vpack.c.b16 %v1394, %v1393
      %v1419 = vpack.c.b16 %v1396, %v1395
      %v1420 = vpack.c.b16 %v1398, %v1397
      %v1421 = vpack.c.b16 %v1400, %v1399
      %v1422 = vpack.c.b16 %v1402, %v1401
      %v1423 = vpack.c.b16 %v1404, %v1403
      %v1424 = vpack.c.b16 %v1406, %v1405
      %v1425 = vpack.c.b16 %v1408, %v1407
      %v1426 = vpack.c.b16 %v1410, %v1409
      %1443 = vmatprep.subr.bf16.mxu0 0
      %1444 = vmatpush1.bf16.msra.mxu0 %v1418
      %1445 = vmatprep.subr.bf16.mxu0 0
      %1446 = vmatpush1.bf16.msra.mxu0 %v1417
      %1447 = vmatprep.subr.bf16.mxu0 0
      %1448 = vmatpush1.bf16.msra.mxu0 %v1416
      %1449 = vmatprep.subr.bf16.mxu0 0
      %1450 = vmatpush1.bf16.msra.mxu0 %v1415
      %1451 = vmatprep.subr.bf16.mxu0 0
      %1452 = vmatpush1.bf16.msra.mxu0 %v1414
      %1453 = vmatprep.subr.bf16.mxu0 0
      %1454 = vmatpush1.bf16.msra.mxu0 %v1413
      %1455 = vmatprep.subr.bf16.mxu0 0
      %1456 = vmatpush1.bf16.msra.mxu0 %v1412
      %1457 = vmatprep.subr.bf16.mxu0 0
      %1458 = vmatpush1.bf16.msra.mxu0 %v1411
      %1459 = vmatprep.subr.bf16.mxu0 0
      %1460 = vmatpush2.bf16.msra.mxu0 %v1426
      %1461 = vmatprep.subr.bf16.mxu0 0
      %1462 = vmatpush2.bf16.msra.mxu0 %v1425
      %1463 = vmatprep.subr.bf16.mxu0 0
      %1464 = vmatpush2.bf16.msra.mxu0 %v1424
      %1465 = vmatprep.subr.bf16.mxu0 0
      %1466 = vmatpush2.bf16.msra.mxu0 %v1423
      %1467 = vmatprep.subr.bf16.mxu0 0
      %1468 = vmatpush2.bf16.msra.mxu0 %v1422
      %1469 = vmatprep.subr.bf16.mxu0 0
      %1470 = vmatpush2.bf16.msra.mxu0 %v1421
      %1471 = vmatprep.subr.bf16.mxu0 0
      %1472 = vmatpush2.bf16.msra.mxu0 %v1420
      %1473 = vmatprep.subr.bf16.mxu0 0
      %1474 = vmatpush2.bf16.msra.mxu0 %v1419
      %1475 = vmatprep.mubr.bf16.mxu0 %v1314
      %1476 = vmatmul.mubr.bf16.gmra.mxu0 %v1313
      %v1477 = vpop.f32.mrf.mxu0
      %v1478 = vadd.f32 0.0, %v1477
      %v1479 = vpop.f32.mrf.mxu0
      %v1480 = vpop.f32.mrf.mxu0
      %v1481 = vpop.f32.mrf.mxu0
      %1482 = vdwg.mxu0
      %vm1483 = vcmask 1048064
      %1484 = vrot.lane.b32.xlu0 %v1478, 64
      %v1485 = vpop.permute.xlu0 %1484
      %v1486 = vsel %vm1483, %v1485, %v1478
      %1487 = vrot.lane.b32.xlu0 %v1486, 64
      %v1488 = vpop.permute.xlu0 %1487
      %v1489 = vsel %vm1483, %v1488, %v1478
      %v1490 = vsel %vm961, 1, 0
      %vm1491 = vcmp.eq.s32.totalorder %v1490, 1
      %1493 = vrot.lane.b32.xlu0 %v1489, 73
      %v1494 = vpop.permute.xlu0 %1493
      %v1496 = vsel %vm1491, %v1494, 0.0
      %v1497 = vsel %vm959, 1, 0
      %vm1498 = vcmp.eq.s32.totalorder %v1497, 1
      %1499 = vrot.lane.b32.xlu0 %v1489, 72
      %v1500 = vpop.permute.xlu0 %1499
      %v1502 = vsel %vm1498, %v1500, 0.0
      %v1503 = vsel %vm963, 1, 0
      %vm1504 = vcmp.eq.s32.totalorder %v1503, 1
      %1505 = vrot.lane.b32.xlu0 %v1489, 71
      %v1506 = vpop.permute.xlu0 %1505
      %v1508 = vsel %vm1504, %v1506, 0.0
      %v1509 = vsel %vm960, 1, 0
      %vm1510 = vcmp.eq.s32.totalorder %v1509, 1
      %1511 = vrot.lane.b32.xlu0 %v1489, 65
      %v1512 = vpop.permute.xlu0 %1511
      %v1514 = vsel %vm1510, %v1512, 0.0
      %v1515 = vsel %vm962, 1, 0
      %vm1516 = vcmp.eq.s32.totalorder %v1515, 1
      %1517 = vrot.lane.b32.xlu0 %v1489, 127
      %v1518 = vpop.permute.xlu0 %1517
      %v1520 = vsel %vm1516, %v1518, 0.0
      %v1521 = vsel %vm965, 1, 0
      %vm1522 = vcmp.eq.s32.totalorder %v1521, 1
      %1523 = vrot.lane.b32.xlu0 %v1489, 121
      %v1524 = vpop.permute.xlu0 %1523
      %v1526 = vsel %vm1522, %v1524, 0.0
      %v1527 = vsel %vm964, 1, 0
      %vm1528 = vcmp.eq.s32.totalorder %v1527, 1
      %1529 = vrot.lane.b32.xlu0 %v1489, 120
      %v1530 = vpop.permute.xlu0 %1529
      %v1532 = vsel %vm1528, %v1530, 0.0
      %v1533 = vsel %vm966, 1, 0
      %vm1534 = vcmp.eq.s32.totalorder %v1533, 1
      %1535 = vrot.lane.b32.xlu0 %v1489, 119
      %v1536 = vpop.permute.xlu0 %1535
      %v1538 = vsel %vm1534, %v1536, 0.0
      %v1539 = vpack.c.bf16 %v1502, %v1496
      %v1540 = vpack.c.bf16 %v1514, %v1508
      %v1541 = vpack.c.bf16 %v1520, %v1478
      %v1542 = vpack.c.bf16 %v1532, %v1526
      %v1543 = vpack.c.bf16 %v1538, %v1538
      %v1544 = vld [vmem:[%s11] sm:$0xf]
      %v1545 = vld [vmem:[%s11 + $0x4] sm:$0xf]
      %v1546 = vld [vmem:[%s13] sm:$0xff]
      %v1547 = vld [vmem:[%s13 + $0x8] sm:$0xff]
      %1549 = vset.pattern.permute.xlu0 0
      %1550 = vperm.xlu0 %1549, %v1546
      %v1551 = vpop.permute.xlu0 %1550
      %1554 = vset.pattern.permute.xlu0 0
      %1555 = vperm.xlu0 %1554, %v1547
      %v1556 = vpop.permute.xlu0 %1555
      %v1560 = vunpack.c.l.b16 %v1544
      %v1561 = vunpack.c.l.b16 %v1545
      %v1562 = vpack.c.b16 %v1561, %v1560
      %v1564 = vsel %vm1110, %v1562, 0
      %v1567 = vsel %vm1114, %v1543, 0
      %1569 = vmatprep.subr.bf16.mxu0 0
      %1570 = vmatpush1.bf16.msra.mxu0 0
      %1571 = vmatprep.subr.bf16.mxu0 0
      %1572 = vmatpush1.bf16.msra.mxu0 0
      %1573 = vmatprep.subr.bf16.mxu0 0
      %1574 = vmatpush1.bf16.msra.mxu0 0
      %1575 = vmatprep.subr.bf16.mxu0 0
      %1576 = vmatpush1.bf16.msra.mxu0 %v1567
      %1577 = vmatprep.subr.bf16.mxu0 0
      %1578 = vmatpush1.bf16.msra.mxu0 %v1542
      %1579 = vmatprep.subr.bf16.mxu0 0
      %1580 = vmatpush1.bf16.msra.mxu0 %v1541
      %1581 = vmatprep.subr.bf16.mxu0 0
      %1582 = vmatpush1.bf16.msra.mxu0 %v1540
      %1583 = vmatprep.subr.bf16.mxu0 0
      %1584 = vmatpush1.bf16.msra.mxu0 %v1539
      %1585 = vmatprep.subr.bf16.mxu0 0
      %1586 = vmatpush2.bf16.msra.mxu0 0
      %1587 = vmatprep.subr.bf16.mxu0 0
      %1588 = vmatpush2.bf16.msra.mxu0 0
      %1589 = vmatprep.subr.bf16.mxu0 0
      %1590 = vmatpush2.bf16.msra.mxu0 0
      %1591 = vmatprep.subr.bf16.mxu0 0
      %1592 = vmatpush2.bf16.msra.mxu0 0
      %1593 = vmatprep.subr.bf16.mxu0 0
      %1594 = vmatpush2.bf16.msra.mxu0 0
      %1595 = vmatprep.subr.bf16.mxu0 0
      %1596 = vmatpush2.bf16.msra.mxu0 0
      %1597 = vmatprep.subr.bf16.mxu0 0
      %1598 = vmatpush2.bf16.msra.mxu0 0
      %1599 = vmatprep.subr.bf16.mxu0 0
      %1600 = vmatpush2.bf16.msra.mxu0 0
      %1601 = vmatprep.mubr.bf16.mxu0 0
      %1602 = vmatmul.mubr.bf16.gmra.mxu0 %v1564
      %v1603 = vpop.f32.mrf.mxu0
      %v1604 = vadd.f32 %v1551, %v1603
      %v1605 = vpop.f32.mrf.mxu0
      %v1606 = vpop.f32.mrf.mxu0
      %v1607 = vadd.f32 %v1556, %v1606
      %v1608 = vpop.f32.mrf.mxu0
      %1609 = vdwg.mxu0
      %v1610 = vmax.f32 %v1604, 0.0
      %v1611 = vmax.f32 %v1607, 0.0
      %1612 = vrot.lane.b32.xlu0 %v1610, 64
      %v1613 = vpop.permute.xlu0 %1612
      %v1614 = vsel %vm1483, %v1613, %v1610
      %1615 = vrot.lane.b32.xlu0 %v1611, 64
      %v1616 = vpop.permute.xlu0 %1615
      %v1617 = vsel %vm1483, %v1616, %v1611
      %1618 = vrot.lane.b32.xlu0 %v1614, 64
      %v1619 = vpop.permute.xlu0 %1618
      %1620 = vrot.lane.b32.xlu0 %v1617, 64
      %v1621 = vpop.permute.xlu0 %1620
      %v1622 = vsel %vm1483, %v1619, %v1610
      %v1623 = vsel %vm1483, %v1621, %v1611
      %1626 = vrot.lane.b32.xlu0 %v1622, 73
      %v1627 = vpop.permute.xlu0 %1626
      %1628 = vrot.lane.b32.xlu0 %v1623, 73
      %v1629 = vpop.permute.xlu0 %1628
      %v1632 = vsel %vm1491, %v1627, 0.0
      %v1633 = vsel %vm1491, %v1629, 0.0
      %1634 = vrot.lane.b32.xlu0 %v1622, 72
      %v1635 = vpop.permute.xlu0 %1634
      %1636 = vrot.lane.b32.xlu0 %v1623, 72
      %v1637 = vpop.permute.xlu0 %1636
      %v1640 = vsel %vm1498, %v1635, 0.0
      %v1641 = vsel %vm1498, %v1637, 0.0
      %1642 = vrot.lane.b32.xlu0 %v1622, 71
      %v1643 = vpop.permute.xlu0 %1642
      %1644 = vrot.lane.b32.xlu0 %v1623, 71
      %v1645 = vpop.permute.xlu0 %1644
      %v1648 = vsel %vm1504, %v1643, 0.0
      %v1649 = vsel %vm1504, %v1645, 0.0
      %1650 = vrot.lane.b32.xlu0 %v1622, 65
      %v1651 = vpop.permute.xlu0 %1650
      %1652 = vrot.lane.b32.xlu0 %v1623, 65
      %v1653 = vpop.permute.xlu0 %1652
      %v1656 = vsel %vm1510, %v1651, 0.0
      %v1657 = vsel %vm1510, %v1653, 0.0
      %1658 = vrot.lane.b32.xlu0 %v1622, 127
      %v1659 = vpop.permute.xlu0 %1658
      %1660 = vrot.lane.b32.xlu0 %v1623, 127
      %v1661 = vpop.permute.xlu0 %1660
      %v1664 = vsel %vm1516, %v1659, 0.0
      %v1665 = vsel %vm1516, %v1661, 0.0
      %1666 = vrot.lane.b32.xlu0 %v1622, 121
      %v1667 = vpop.permute.xlu0 %1666
      %1668 = vrot.lane.b32.xlu0 %v1623, 121
      %v1669 = vpop.permute.xlu0 %1668
      %v1672 = vsel %vm1522, %v1667, 0.0
      %v1673 = vsel %vm1522, %v1669, 0.0
      %1674 = vrot.lane.b32.xlu0 %v1622, 120
      %v1675 = vpop.permute.xlu0 %1674
      %1676 = vrot.lane.b32.xlu0 %v1623, 120
      %v1677 = vpop.permute.xlu0 %1676
      %v1680 = vsel %vm1528, %v1675, 0.0
      %v1681 = vsel %vm1528, %v1677, 0.0
      %1682 = vrot.lane.b32.xlu0 %v1622, 119
      %v1683 = vpop.permute.xlu0 %1682
      %1684 = vrot.lane.b32.xlu0 %v1623, 119
      %v1685 = vpop.permute.xlu0 %1684
      %v1688 = vsel %vm1534, %v1683, 0.0
      %v1689 = vsel %vm1534, %v1685, 0.0
      %v1690 = vpack.c.bf16 %v1633, %v1632
      %v1691 = vpack.c.bf16 %v1641, %v1640
      %v1692 = vpack.c.bf16 %v1649, %v1648
      %v1693 = vpack.c.bf16 %v1657, %v1656
      %v1694 = vpack.c.bf16 %v1611, %v1610
      %v1695 = vpack.c.bf16 %v1665, %v1664
      %v1696 = vpack.c.bf16 %v1673, %v1672
      %v1697 = vpack.c.bf16 %v1681, %v1680
      %v1698 = vpack.c.bf16 %v1689, %v1688
      %v1699 = vld [vmem:[%s15] sm:$0xff]
      %v1700 = vld [vmem:[%s15 + $0x8] sm:$0xff]
      %v1701 = vld [vmem:[%s17] sm:$0xff]
      %v1702 = vld [vmem:[%s17 + $0x8] sm:$0xff]
      %1704 = vset.pattern.permute.xlu0 0
      %1705 = vperm.xlu0 %1704, %v1701
      %v1706 = vpop.permute.xlu0 %1705
      %1709 = vset.pattern.permute.xlu0 0
      %1710 = vperm.xlu0 %1709, %v1702
      %v1711 = vpop.permute.xlu0 %1710
      %v1715 = vunpack.c.l.b16 %v1699
      %v1716 = vunpack.c.h.b16 %v1699
      %v1717 = vunpack.c.l.b16 %v1700
      %v1718 = vunpack.c.h.b16 %v1700
      %v1719 = vpack.c.b16 %v1717, %v1715
      %v1720 = vpack.c.b16 %v1718, %v1716
      %vm1722 = vcmask 130048
      %v1724 = vsel %vm1722, %v1720, 0
      %1726 = vmatprep.subr.bf16.mxu0 0
      %1727 = vmatpush1.bf16.msra.mxu0 %v1697
      %1728 = vmatprep.subr.bf16.mxu0 0
      %1729 = vmatpush1.bf16.msra.mxu0 %v1696
      %1730 = vmatprep.subr.bf16.mxu0 0
      %1731 = vmatpush1.bf16.msra.mxu0 %v1695
      %1732 = vmatprep.subr.bf16.mxu0 0
      %1733 = vmatpush1.bf16.msra.mxu0 %v1694
      %1734 = vmatprep.subr.bf16.mxu0 0
      %1735 = vmatpush1.bf16.msra.mxu0 %v1693
      %1736 = vmatprep.subr.bf16.mxu0 0
      %1737 = vmatpush1.bf16.msra.mxu0 %v1692
      %1738 = vmatprep.subr.bf16.mxu0 0
      %1739 = vmatpush1.bf16.msra.mxu0 %v1691
      %1740 = vmatprep.subr.bf16.mxu0 0
      %1741 = vmatpush1.bf16.msra.mxu0 %v1690
      %1742 = vmatprep.subr.bf16.mxu0 0
      %1743 = vmatpush2.bf16.msra.mxu0 0
      %1744 = vmatprep.subr.bf16.mxu0 0
      %1745 = vmatpush2.bf16.msra.mxu0 0
      %1746 = vmatprep.subr.bf16.mxu0 0
      %1747 = vmatpush2.bf16.msra.mxu0 0
      %1748 = vmatprep.subr.bf16.mxu0 0
      %1749 = vmatpush2.bf16.msra.mxu0 0
      %1750 = vmatprep.subr.bf16.mxu0 0
      %1751 = vmatpush2.bf16.msra.mxu0 0
      %1752 = vmatprep.subr.bf16.mxu0 0
      %1753 = vmatpush2.bf16.msra.mxu0 0
      %1754 = vmatprep.subr.bf16.mxu0 0
      %1755 = vmatpush2.bf16.msra.mxu0 0
      %1756 = vmatprep.subr.bf16.mxu0 0
      %1757 = vmatpush2.bf16.msra.mxu0 %v1698
      %1758 = vmatprep.mubr.bf16.mxu0 %v1724
      %1759 = vmatmul.mubr.bf16.gmra.mxu0 %v1719
      %v1760 = vpop.f32.mrf.mxu0
      %v1761 = vadd.f32 %v1706, %v1760
      %v1762 = vpop.f32.mrf.mxu0
      %v1763 = vpop.f32.mrf.mxu0
      %v1764 = vadd.f32 %v1711, %v1763
      %v1765 = vpop.f32.mrf.mxu0
      %1766 = vdwg.mxu0
      %v1767 = vmax.f32 %v1761, 0.0
      %v1768 = vmax.f32 %v1764, 0.0
      %1769 = vrot.lane.b32.xlu0 %v1767, 64
      %v1770 = vpop.permute.xlu0 %1769
      %v1771 = vsel %vm1483, %v1770, %v1767
      %1772 = vrot.lane.b32.xlu0 %v1768, 64
      %v1773 = vpop.permute.xlu0 %1772
      %v1774 = vsel %vm1483, %v1773, %v1768
      %1775 = vrot.lane.b32.xlu0 %v1771, 64
      %v1776 = vpop.permute.xlu0 %1775
      %1777 = vrot.lane.b32.xlu0 %v1774, 64
      %v1778 = vpop.permute.xlu0 %1777
      %v1779 = vsel %vm1483, %v1776, %v1767
      %v1780 = vsel %vm1483, %v1778, %v1768
      %1783 = vrot.lane.b32.xlu0 %v1779, 127
      %v1784 = vpop.permute.xlu0 %1783
      %1785 = vrot.lane.b32.xlu0 %v1780, 127
      %v1786 = vpop.permute.xlu0 %1785
      %v1789 = vmax.f32 %v1767, %v1784
      %v1790 = vmax.f32 %v1768, %v1786
      %1791 = vrot.lane.b32.xlu0 %v1789, 64
      %v1792 = vpop.permute.xlu0 %1791
      %v1793 = vsel %vm1483, %v1792, %v1789
      %1794 = vrot.lane.b32.xlu0 %v1790, 64
      %v1795 = vpop.permute.xlu0 %1794
      %v1796 = vsel %vm1483, %v1795, %v1790
      %1797 = vrot.lane.b32.xlu0 %v1793, 64
      %v1798 = vpop.permute.xlu0 %1797
      %1799 = vrot.lane.b32.xlu0 %v1796, 64
      %v1800 = vpop.permute.xlu0 %1799
      %v1801 = vsel %vm1483, %v1798, %v1789
      %v1802 = vsel %vm1483, %v1800, %v1790
      %1805 = vrot.lane.b32.xlu0 %v1801, 120
      %v1806 = vpop.permute.xlu0 %1805
      %1807 = vrot.lane.b32.xlu0 %v1802, 120
      %v1808 = vpop.permute.xlu0 %1807
      %v1811 = vmax.f32 %v1789, %v1806
      %v1812 = vmax.f32 %v1790, %v1808
      %v1813 = vpack.c.bf16 %v1812, %v1811
      %v1814 = vld [vmem:[%s53] sm:$0xf]
      %v1815 = vld [vmem:[%s53 + $0x4] sm:$0xf]
      %v1816 = vld [vmem:[%s53 + $0x8] sm:$0xf]
      %v1817 = vld [vmem:[%s53 + $0xc] sm:$0xf]
      %v1818 = vld [vmem:[%s53 + $0x10] sm:$0xf]
      %v1819 = vld [vmem:[%s53 + $0x14] sm:$0xf]
      %v1820 = vld [vmem:[%s53 + $0x18] sm:$0xf]
      %v1821 = vld [vmem:[%s53 + $0x1c] sm:$0xf]
      %v1830 = vunpack.c.l.b16 %v1814
      %v1831 = vunpack.c.l.b16 %v1815
      %v1832 = vunpack.c.l.b16 %v1816
      %v1833 = vunpack.c.l.b16 %v1817
      %v1834 = vunpack.c.l.b16 %v1818
      %v1835 = vunpack.c.l.b16 %v1819
      %v1836 = vunpack.c.l.b16 %v1820
      %v1837 = vunpack.c.l.b16 %v1821
      %v1838 = vpack.c.b16 %v1831, %v1830
      %v1839 = vpack.c.b16 %v1833, %v1832
      %v1840 = vpack.c.b16 %v1835, %v1834
      %v1841 = vpack.c.b16 %v1837, %v1836
      %vm1846 = vcmask 523264
      %v1848 = vsel %vm1846, %v1813, 0
      %1850 = vmatprep.subr.bf16.mxu0 0
      %1851 = vmatpush1.bf16.msra.mxu0 0
      %1852 = vmatprep.subr.bf16.mxu0 0
      %1853 = vmatpush1.bf16.msra.mxu0 0
      %1854 = vmatprep.subr.bf16.mxu0 0
      %1855 = vmatpush1.bf16.msra.mxu0 0
      %1856 = vmatprep.subr.bf16.mxu0 0
      %1857 = vmatpush1.bf16.msra.mxu0 0
      %1858 = vmatprep.subr.bf16.mxu0 0
      %1859 = vmatpush1.bf16.msra.mxu0 %v1841
      %1860 = vmatprep.subr.bf16.mxu0 0
      %1861 = vmatpush1.bf16.msra.mxu0 %v1840
      %1862 = vmatprep.subr.bf16.mxu0 0
      %1863 = vmatpush1.bf16.msra.mxu0 %v1839
      %1864 = vmatprep.subr.bf16.mxu0 0
      %1865 = vmatpush1.bf16.msra.mxu0 %v1838
      %1866 = vmatprep.subr.bf16.mxu0 0
      %1867 = vmatpush2.bf16.msra.mxu0 0
      %1868 = vmatprep.subr.bf16.mxu0 0
      %1869 = vmatpush2.bf16.msra.mxu0 0
      %1870 = vmatprep.subr.bf16.mxu0 0
      %1871 = vmatpush2.bf16.msra.mxu0 0
      %1872 = vmatprep.subr.bf16.mxu0 0
      %1873 = vmatpush2.bf16.msra.mxu0 0
      %1874 = vmatprep.subr.bf16.mxu0 0
      %1875 = vmatpush2.bf16.msra.mxu0 0
      %1876 = vmatprep.subr.bf16.mxu0 0
      %1877 = vmatpush2.bf16.msra.mxu0 0
      %1878 = vmatprep.subr.bf16.mxu0 0
      %1879 = vmatpush2.bf16.msra.mxu0 0
      %1880 = vmatprep.subr.bf16.mxu0 0
      %1881 = vmatpush2.bf16.msra.mxu0 0
      %1882 = vmatprep.mubr.bf16.mxu0 0
      %1883 = vmatmul.mubr.bf16.gmra.mxu0 %v1848
      %v1884 = vpop.f32.mrf.mxu0
      %v1885 = vadd.f32 0.0, %v1884
      %v1886 = vpop.f32.mrf.mxu0
      %v1887 = vpop.f32.mrf.mxu0
      %v1888 = vadd.f32 0.0, %v1887
      %v1889 = vpop.f32.mrf.mxu0
      %1890 = vdwg.mxu0
      %vm1891 = vcmask 1047680
      %1892 = vrot.lane.b32.xlu0 %v1885, 16
      %v1893 = vpop.permute.xlu0 %1892
      %v1894 = vsel %vm1891, %v1893, %v1885
      %1895 = vrot.lane.b32.xlu0 %v1888, 16
      %v1896 = vpop.permute.xlu0 %1895
      %v1897 = vsel %vm1891, %v1896, %v1888
      %1898 = vrot.lane.b32.xlu0 %v1894, 16
      %v1899 = vpop.permute.xlu0 %1898
      %1900 = vrot.lane.b32.xlu0 %v1897, 16
      %v1901 = vpop.permute.xlu0 %1900
      %v1902 = vsel %vm1891, %v1899, %v1885
      %v1903 = vsel %vm1891, %v1901, %v1888
      %v1904 = vsel %vm981, 1, 0
      %vm1905 = vcmp.eq.s32.totalorder %v1904, 1
      %1908 = vrot.lane.b32.xlu0 %v1902, 117
      %v1909 = vpop.permute.xlu0 %1908
      %1910 = vrot.lane.b32.xlu0 %v1903, 117
      %v1911 = vpop.permute.xlu0 %1910
      %v1914 = vsel %vm1905, %v1909, 0.0
      %v1915 = vsel %vm1905, %v1911, 0.0
      %v1916 = vsel %vm979, 1, 0
      %vm1917 = vcmp.eq.s32.totalorder %v1916, 1
      %1918 = vrot.lane.b32.xlu0 %v1902, 116
      %v1919 = vpop.permute.xlu0 %1918
      %1920 = vrot.lane.b32.xlu0 %v1903, 116
      %v1921 = vpop.permute.xlu0 %1920
      %v1924 = vsel %vm1917, %v1919, 0.0
      %v1925 = vsel %vm1917, %v1921, 0.0
      %v1926 = vsel %vm983, 1, 0
      %vm1927 = vcmp.eq.s32.totalorder %v1926, 1
      %1928 = vrot.lane.b32.xlu0 %v1902, 115
      %v1929 = vpop.permute.xlu0 %1928
      %1930 = vrot.lane.b32.xlu0 %v1903, 115
      %v1931 = vpop.permute.xlu0 %1930
      %v1934 = vsel %vm1927, %v1929, 0.0
      %v1935 = vsel %vm1927, %v1931, 0.0
      %v1936 = vsel %vm980, 1, 0
      %vm1937 = vcmp.eq.s32.totalorder %v1936, 1
      %1938 = vrot.lane.b32.xlu0 %v1902, 113
      %v1939 = vpop.permute.xlu0 %1938
      %1940 = vrot.lane.b32.xlu0 %v1903, 113
      %v1941 = vpop.permute.xlu0 %1940
      %v1944 = vsel %vm1937, %v1939, 0.0
      %v1945 = vsel %vm1937, %v1941, 0.0
      %v1946 = vsel %vm982, 1, 0
      %vm1947 = vcmp.eq.s32.totalorder %v1946, 1
      %1948 = vrot.lane.b32.xlu0 %v1902, 127
      %v1949 = vpop.permute.xlu0 %1948
      %1950 = vrot.lane.b32.xlu0 %v1903, 127
      %v1951 = vpop.permute.xlu0 %1950
      %v1954 = vsel %vm1947, %v1949, 0.0
      %v1955 = vsel %vm1947, %v1951, 0.0
      %v1956 = vsel %vm985, 1, 0
      %vm1957 = vcmp.eq.s32.totalorder %v1956, 1
      %1958 = vrot.lane.b32.xlu0 %v1902, 125
      %v1959 = vpop.permute.xlu0 %1958
      %1960 = vrot.lane.b32.xlu0 %v1903, 125
      %v1961 = vpop.permute.xlu0 %1960
      %v1964 = vsel %vm1957, %v1959, 0.0
      %v1965 = vsel %vm1957, %v1961, 0.0
      %v1966 = vsel %vm984, 1, 0
      %vm1967 = vcmp.eq.s32.totalorder %v1966, 1
      %1968 = vrot.lane.b32.xlu0 %v1902, 124
      %v1969 = vpop.permute.xlu0 %1968
      %1970 = vrot.lane.b32.xlu0 %v1903, 124
      %v1971 = vpop.permute.xlu0 %1970
      %v1974 = vsel %vm1967, %v1969, 0.0
      %v1975 = vsel %vm1967, %v1971, 0.0
      %v1976 = vsel %vm986, 1, 0
      %vm1977 = vcmp.eq.s32.totalorder %v1976, 1
      %1978 = vrot.lane.b32.xlu0 %v1902, 123
      %v1979 = vpop.permute.xlu0 %1978
      %1980 = vrot.lane.b32.xlu0 %v1903, 123
      %v1981 = vpop.permute.xlu0 %1980
      %v1984 = vsel %vm1977, %v1979, 0.0
      %v1985 = vsel %vm1977, %v1981, 0.0
      %v1986 = vpack.c.bf16 %v1915, %v1914
      %v1987 = vpack.c.bf16 %v1925, %v1924
      %v1988 = vpack.c.bf16 %v1935, %v1934
      %v1989 = vpack.c.bf16 %v1945, %v1944
      %v1990 = vpack.c.bf16 %v1888, %v1885
      %v1991 = vpack.c.bf16 %v1955, %v1954
      %v1992 = vpack.c.bf16 %v1965, %v1964
      %v1993 = vpack.c.bf16 %v1975, %v1974
      %v1994 = vpack.c.bf16 %v1985, %v1984
      %v1995 = vld [vmem:[%s19] sm:$0xff]
      %v1996 = vld [vmem:[%s19 + $0x8] sm:$0xff]
      %v1997 = vld [vmem:[%s19 + $0x10] sm:$0xff]
      %v1998 = vld [vmem:[%s19 + $0x18] sm:$0xff]
      %v1999 = vld [vmem:[%s21] sm:$0xff]
      %v2000 = vld [vmem:[%s21 + $0x8] sm:$0xff]
      %v2001 = vld [vmem:[%s21 + $0x10] sm:$0xff]
      %v2002 = vld [vmem:[%s21 + $0x18] sm:$0xff]
      %2004 = vset.pattern.permute.xlu0 0
      %2005 = vperm.xlu0 %2004, %v1999
      %v2006 = vpop.permute.xlu0 %2005
      %2009 = vset.pattern.permute.xlu0 0
      %2010 = vperm.xlu0 %2009, %v2000
      %v2011 = vpop.permute.xlu0 %2010
      %2014 = vset.pattern.permute.xlu0 0
      %2015 = vperm.xlu0 %2014, %v2001
      %v2016 = vpop.permute.xlu0 %2015
      %2019 = vset.pattern.permute.xlu0 0
      %2020 = vperm.xlu0 %2019, %v2002
      %v2021 = vpop.permute.xlu0 %2020
      %v2027 = vunpack.c.l.b16 %v1995
      %v2028 = vunpack.c.h.b16 %v1995
      %v2029 = vunpack.c.l.b16 %v1996
      %v2030 = vunpack.c.h.b16 %v1996
      %v2031 = vunpack.c.l.b16 %v1997
      %v2032 = vunpack.c.h.b16 %v1997
      %v2033 = vunpack.c.l.b16 %v1998
      %v2034 = vunpack.c.h.b16 %v1998
      %v2035 = vpack.c.b16 %v2029, %v2027
      %v2036 = vpack.c.b16 %v2030, %v2028
      %v2037 = vpack.c.b16 %v2033, %v2031
      %v2038 = vpack.c.b16 %v2034, %v2032
      %v2042 = vsel %vm1722, %v2036, 0
      %v2045 = vsel %vm1722, %v2038, 0
      %2047 = vmatprep.subr.bf16.mxu0 0
      %2048 = vmatpush1.bf16.msra.mxu0 %v1993
      %2049 = vmatprep.subr.bf16.mxu0 0
      %2050 = vmatpush1.bf16.msra.mxu0 %v1992
      %2051 = vmatprep.subr.bf16.mxu0 0
      %2052 = vmatpush1.bf16.msra.mxu0 %v1991
      %2053 = vmatprep.subr.bf16.mxu0 0
      %2054 = vmatpush1.bf16.msra.mxu0 %v1990
      %2055 = vmatprep.subr.bf16.mxu0 0
      %2056 = vmatpush1.bf16.msra.mxu0 %v1989
      %2057 = vmatprep.subr.bf16.mxu0 0
      %2058 = vmatpush1.bf16.msra.mxu0 %v1988
      %2059 = vmatprep.subr.bf16.mxu0 0
      %2060 = vmatpush1.bf16.msra.mxu0 %v1987
      %2061 = vmatprep.subr.bf16.mxu0 0
      %2062 = vmatpush1.bf16.msra.mxu0 %v1986
      %2063 = vmatprep.subr.bf16.mxu0 0
      %2064 = vmatpush2.bf16.msra.mxu0 0
      %2065 = vmatprep.subr.bf16.mxu0 0
      %2066 = vmatpush2.bf16.msra.mxu0 0
      %2067 = vmatprep.subr.bf16.mxu0 0
      %2068 = vmatpush2.bf16.msra.mxu0 0
      %2069 = vmatprep.subr.bf16.mxu0 0
      %2070 = vmatpush2.bf16.msra.mxu0 0
      %2071 = vmatprep.subr.bf16.mxu0 0
      %2072 = vmatpush2.bf16.msra.mxu0 0
      %2073 = vmatprep.subr.bf16.mxu0 0
      %2074 = vmatpush2.bf16.msra.mxu0 0
      %2075 = vmatprep.subr.bf16.mxu0 0
      %2076 = vmatpush2.bf16.msra.mxu0 0
      %2077 = vmatprep.subr.bf16.mxu0 0
      %2078 = vmatpush2.bf16.msra.mxu0 %v1994
      %2079 = vmatprep.mubr.bf16.mxu0 %v2042
      %2080 = vmatmul.mubr.bf16.gmra.mxu0 %v2035
      %v2081 = vpop.f32.mrf.mxu0
      %v2082 = vadd.f32 %v2006, %v2081
      %v2083 = vpop.f32.mrf.mxu0
      %v2084 = vpop.f32.mrf.mxu0
      %v2085 = vadd.f32 %v2011, %v2084
      %v2086 = vpop.f32.mrf.mxu0
      %2087 = vmatprep.mubr.bf16.mxu0 %v2045
      %2088 = vmatmul.mubr.bf16.gmra.mxu0 %v2037
      %v2089 = vpop.f32.mrf.mxu0
      %v2090 = vadd.f32 %v2016, %v2089
      %v2091 = vpop.f32.mrf.mxu0
      %v2092 = vpop.f32.mrf.mxu0
      %v2093 = vadd.f32 %v2021, %v2092
      %v2094 = vpop.f32.mrf.mxu0
      %2095 = vdwg.mxu0
      %v2096 = vmax.f32 %v2082, 0.0
      %v2097 = vmax.f32 %v2085, 0.0
      %v2098 = vmax.f32 %v2090, 0.0
      %v2099 = vmax.f32 %v2093, 0.0
      %2100 = vrot.lane.b32.xlu0 %v2096, 16
      %v2101 = vpop.permute.xlu0 %2100
      %v2102 = vsel %vm1891, %v2101, %v2096
      %2103 = vrot.lane.b32.xlu0 %v2097, 16
      %v2104 = vpop.permute.xlu0 %2103
      %v2105 = vsel %vm1891, %v2104, %v2097
      %2106 = vrot.lane.b32.xlu0 %v2098, 16
      %v2107 = vpop.permute.xlu0 %2106
      %v2108 = vsel %vm1891, %v2107, %v2098
      %2109 = vrot.lane.b32.xlu0 %v2099, 16
      %v2110 = vpop.permute.xlu0 %2109
      %v2111 = vsel %vm1891, %v2110, %v2099
      %2112 = vrot.lane.b32.xlu0 %v2102, 16
      %v2113 = vpop.permute.xlu0 %2112
      %2114 = vrot.lane.b32.xlu0 %v2105, 16
      %v2115 = vpop.permute.xlu0 %2114
      %2116 = vrot.lane.b32.xlu0 %v2108, 16
      %v2117 = vpop.permute.xlu0 %2116
      %2118 = vrot.lane.b32.xlu0 %v2111, 16
      %v2119 = vpop.permute.xlu0 %2118
      %v2120 = vsel %vm1891, %v2113, %v2096
      %v2121 = vsel %vm1891, %v2115, %v2097
      %v2122 = vsel %vm1891, %v2117, %v2098
      %v2123 = vsel %vm1891, %v2119, %v2099
      %2128 = vrot.lane.b32.xlu0 %v2120, 117
      %v2129 = vpop.permute.xlu0 %2128
      %2130 = vrot.lane.b32.xlu0 %v2121, 117
      %v2131 = vpop.permute.xlu0 %2130
      %2132 = vrot.lane.b32.xlu0 %v2122, 117
      %v2133 = vpop.permute.xlu0 %2132
      %2134 = vrot.lane.b32.xlu0 %v2123, 117
      %v2135 = vpop.permute.xlu0 %2134
      %v2140 = vsel %vm1905, %v2129, 0.0
      %v2141 = vsel %vm1905, %v2131, 0.0
      %v2142 = vsel %vm1905, %v2133, 0.0
      %v2143 = vsel %vm1905, %v2135, 0.0
      %2144 = vrot.lane.b32.xlu0 %v2120, 116
      %v2145 = vpop.permute.xlu0 %2144
      %2146 = vrot.lane.b32.xlu0 %v2121, 116
      %v2147 = vpop.permute.xlu0 %2146
      %2148 = vrot.lane.b32.xlu0 %v2122, 116
      %v2149 = vpop.permute.xlu0 %2148
      %2150 = vrot.lane.b32.xlu0 %v2123, 116
      %v2151 = vpop.permute.xlu0 %2150
      %v2156 = vsel %vm1917, %v2145, 0.0
      %v2157 = vsel %vm1917, %v2147, 0.0
      %v2158 = vsel %vm1917, %v2149, 0.0
      %v2159 = vsel %vm1917, %v2151, 0.0
      %2160 = vrot.lane.b32.xlu0 %v2120, 115
      %v2161 = vpop.permute.xlu0 %2160
      %2162 = vrot.lane.b32.xlu0 %v2121, 115
      %v2163 = vpop.permute.xlu0 %2162
      %2164 = vrot.lane.b32.xlu0 %v2122, 115
      %v2165 = vpop.permute.xlu0 %2164
      %2166 = vrot.lane.b32.xlu0 %v2123, 115
      %v2167 = vpop.permute.xlu0 %2166
      %v2172 = vsel %vm1927, %v2161, 0.0
      %v2173 = vsel %vm1927, %v2163, 0.0
      %v2174 = vsel %vm1927, %v2165, 0.0
      %v2175 = vsel %vm1927, %v2167, 0.0
      %2176 = vrot.lane.b32.xlu0 %v2120, 113
      %v2177 = vpop.permute.xlu0 %2176
      %2178 = vrot.lane.b32.xlu0 %v2121, 113
      %v2179 = vpop.permute.xlu0 %2178
      %2180 = vrot.lane.b32.xlu0 %v2122, 113
      %v2181 = vpop.permute.xlu0 %2180
      %2182 = vrot.lane.b32.xlu0 %v2123, 113
      %v2183 = vpop.permute.xlu0 %2182
      %v2188 = vsel %vm1937, %v2177, 0.0
      %v2189 = vsel %vm1937, %v2179, 0.0
      %v2190 = vsel %vm1937, %v2181, 0.0
      %v2191 = vsel %vm1937, %v2183, 0.0
      %2192 = vrot.lane.b32.xlu0 %v2120, 127
      %v2193 = vpop.permute.xlu0 %2192
      %2194 = vrot.lane.b32.xlu0 %v2121, 127
      %v2195 = vpop.permute.xlu0 %2194
      %2196 = vrot.lane.b32.xlu0 %v2122, 127
      %v2197 = vpop.permute.xlu0 %2196
      %2198 = vrot.lane.b32.xlu0 %v2123, 127
      %v2199 = vpop.permute.xlu0 %2198
      %v2204 = vsel %vm1947, %v2193, 0.0
      %v2205 = vsel %vm1947, %v2195, 0.0
      %v2206 = vsel %vm1947, %v2197, 0.0
      %v2207 = vsel %vm1947, %v2199, 0.0
      %2208 = vrot.lane.b32.xlu0 %v2120, 125
      %v2209 = vpop.permute.xlu0 %2208
      %2210 = vrot.lane.b32.xlu0 %v2121, 125
      %v2211 = vpop.permute.xlu0 %2210
      %2212 = vrot.lane.b32.xlu0 %v2122, 125
      %v2213 = vpop.permute.xlu0 %2212
      %2214 = vrot.lane.b32.xlu0 %v2123, 125
      %v2215 = vpop.permute.xlu0 %2214
      %v2220 = vsel %vm1957, %v2209, 0.0
      %v2221 = vsel %vm1957, %v2211, 0.0
      %v2222 = vsel %vm1957, %v2213, 0.0
      %v2223 = vsel %vm1957, %v2215, 0.0
      %2224 = vrot.lane.b32.xlu0 %v2120, 124
      %v2225 = vpop.permute.xlu0 %2224
      %2226 = vrot.lane.b32.xlu0 %v2121, 124
      %v2227 = vpop.permute.xlu0 %2226
      %2228 = vrot.lane.b32.xlu0 %v2122, 124
      %v2229 = vpop.permute.xlu0 %2228
      %2230 = vrot.lane.b32.xlu0 %v2123, 124
      %v2231 = vpop.permute.xlu0 %2230
      %v2236 = vsel %vm1967, %v2225, 0.0
      %v2237 = vsel %vm1967, %v2227, 0.0
      %v2238 = vsel %vm1967, %v2229, 0.0
      %v2239 = vsel %vm1967, %v2231, 0.0
      %2240 = vrot.lane.b32.xlu0 %v2120, 123
      %v2241 = vpop.permute.xlu0 %2240
      %2242 = vrot.lane.b32.xlu0 %v2121, 123
      %v2243 = vpop.permute.xlu0 %2242
      %2244 = vrot.lane.b32.xlu0 %v2122, 123
      %v2245 = vpop.permute.xlu0 %2244
      %2246 = vrot.lane.b32.xlu0 %v2123, 123
      %v2247 = vpop.permute.xlu0 %2246
      %v2252 = vsel %vm1977, %v2241, 0.0
      %v2253 = vsel %vm1977, %v2243, 0.0
      %v2254 = vsel %vm1977, %v2245, 0.0
      %v2255 = vsel %vm1977, %v2247, 0.0
      %v2256 = vpack.c.bf16 %v2141, %v2140
      %v2257 = vpack.c.bf16 %v2143, %v2142
      %v2258 = vpack.c.bf16 %v2157, %v2156
      %v2259 = vpack.c.bf16 %v2159, %v2158
      %v2260 = vpack.c.bf16 %v2173, %v2172
      %v2261 = vpack.c.bf16 %v2175, %v2174
      %v2262 = vpack.c.bf16 %v2189, %v2188
      %v2263 = vpack.c.bf16 %v2191, %v2190
      %v2264 = vpack.c.bf16 %v2097, %v2096
      %v2265 = vpack.c.bf16 %v2099, %v2098
      %v2266 = vpack.c.bf16 %v2205, %v2204
      %v2267 = vpack.c.bf16 %v2207, %v2206
      %v2268 = vpack.c.bf16 %v2221, %v2220
      %v2269 = vpack.c.bf16 %v2223, %v2222
      %v2270 = vpack.c.bf16 %v2237, %v2236
      %v2271 = vpack.c.bf16 %v2239, %v2238
      %v2272 = vpack.c.bf16 %v2253, %v2252
      %v2273 = vpack.c.bf16 %v2255, %v2254
      %v2274 = vld [vmem:[%s23] sm:$0xff]
      %v2275 = vld [vmem:[%s23 + $0x8] sm:$0xf]
      %v2276 = vld [vmem:[%s23 + $0xc] sm:$0xff]
      %v2277 = vld [vmem:[%s23 + $0x14] sm:$0xf]
      %v2278 = vld [vmem:[%s23 + $0x18] sm:$0xff]
      %v2279 = vld [vmem:[%s23 + $0x20] sm:$0xf]
      %v2280 = vld [vmem:[%s23 + $0x24] sm:$0xff]
      %v2281 = vld [vmem:[%s23 + $0x2c] sm:$0xf]
      %v2282 = vld [vmem:[%s25] sm:$0xff]
      %v2283 = vld [vmem:[%s25 + $0x8] sm:$0xff]
      %v2284 = vld [vmem:[%s25 + $0x10] sm:$0xff]
      %v2285 = vld [vmem:[%s25 + $0x18] sm:$0xff]
      %2287 = vset.pattern.permute.xlu0 0
      %2288 = vperm.xlu0 %2287, %v2282
      %v2289 = vpop.permute.xlu0 %2288
      %2292 = vset.pattern.permute.xlu0 0
      %2293 = vperm.xlu0 %2292, %v2283
      %v2294 = vpop.permute.xlu0 %2293
      %2297 = vset.pattern.permute.xlu0 0
      %2298 = vperm.xlu0 %2297, %v2284
      %v2299 = vpop.permute.xlu0 %2298
      %2302 = vset.pattern.permute.xlu0 0
      %2303 = vperm.xlu0 %2302, %v2285
      %v2304 = vpop.permute.xlu0 %2303
      %v2314 = vunpack.c.l.b16 %v2274
      %v2315 = vunpack.c.h.b16 %v2274
      %v2316 = vunpack.c.l.b16 %v2275
      %v2317 = vunpack.c.l.b16 %v2276
      %v2318 = vunpack.c.h.b16 %v2276
      %v2319 = vunpack.c.l.b16 %v2277
      %v2320 = vunpack.c.l.b16 %v2278
      %v2321 = vunpack.c.h.b16 %v2278
      %v2322 = vunpack.c.l.b16 %v2279
      %v2323 = vunpack.c.l.b16 %v2280
      %v2324 = vunpack.c.h.b16 %v2280
      %v2325 = vunpack.c.l.b16 %v2281
      %v2326 = vpack.c.b16 %v2317, %v2314
      %v2327 = vpack.c.b16 %v2318, %v2315
      %v2328 = vpack.c.b16 %v2319, %v2316
      %v2329 = vpack.c.b16 %v2323, %v2320
      %v2330 = vpack.c.b16 %v2324, %v2321
      %v2331 = vpack.c.b16 %v2325, %v2322
      %vm2336 = vcmask 261120
      %v2338 = vsel %vm2336, %v2328, 0
      %v2341 = vsel %vm2336, %v2331, 0
      %2343 = vmatprep.subr.bf16.mxu0 0
      %2344 = vmatpush1.bf16.msra.mxu0 %v2263
      %2345 = vmatprep.subr.bf16.mxu0 0
      %2346 = vmatpush1.bf16.msra.mxu0 %v2262
      %2347 = vmatprep.subr.bf16.mxu0 0
      %2348 = vmatpush1.bf16.msra.mxu0 %v2261
      %2349 = vmatprep.subr.bf16.mxu0 0
      %2350 = vmatpush1.bf16.msra.mxu0 %v2260
      %2351 = vmatprep.subr.bf16.mxu0 0
      %2352 = vmatpush1.bf16.msra.mxu0 %v2259
      %2353 = vmatprep.subr.bf16.mxu0 0
      %2354 = vmatpush1.bf16.msra.mxu0 %v2258
      %2355 = vmatprep.subr.bf16.mxu0 0
      %2356 = vmatpush1.bf16.msra.mxu0 %v2257
      %2357 = vmatprep.subr.bf16.mxu0 0
      %2358 = vmatpush1.bf16.msra.mxu0 %v2256
      %2359 = vmatprep.subr.bf16.mxu0 0
      %2360 = vmatpush2.bf16.msra.mxu0 %v2271
      %2361 = vmatprep.subr.bf16.mxu0 0
      %2362 = vmatpush2.bf16.msra.mxu0 %v2270
      %2363 = vmatprep.subr.bf16.mxu0 0
      %2364 = vmatpush2.bf16.msra.mxu0 %v2269
      %2365 = vmatprep.subr.bf16.mxu0 0
      %2366 = vmatpush2.bf16.msra.mxu0 %v2268
      %2367 = vmatprep.subr.bf16.mxu0 0
      %2368 = vmatpush2.bf16.msra.mxu0 %v2267
      %2369 = vmatprep.subr.bf16.mxu0 0
      %2370 = vmatpush2.bf16.msra.mxu0 %v2266
      %2371 = vmatprep.subr.bf16.mxu0 0
      %2372 = vmatpush2.bf16.msra.mxu0 %v2265
      %2373 = vmatprep.subr.bf16.mxu0 0
      %2374 = vmatpush2.bf16.msra.mxu0 %v2264
      %2375 = vmatprep.mubr.bf16.mxu0 %v2327
      %2376 = vmatmul.mubr.bf16.gmra.mxu0 %v2326
      %v2377 = vpop.f32.mrf.mxu0
      %v2378 = vadd.f32 %v2289, %v2377
      %v2379 = vpop.f32.mrf.mxu0
      %v2380 = vpop.f32.mrf.mxu0
      %v2381 = vadd.f32 %v2294, %v2380
      %v2382 = vpop.f32.mrf.mxu0
      %2383 = vmatprep.mubr.bf16.mxu0 %v2330
      %2384 = vmatmul.mubr.bf16.gmra.mxu0 %v2329
      %v2385 = vpop.f32.mrf.mxu0
      %v2386 = vadd.f32 %v2299, %v2385
      %v2387 = vpop.f32.mrf.mxu0
      %v2388 = vpop.f32.mrf.mxu0
      %v2389 = vadd.f32 %v2304, %v2388
      %v2390 = vpop.f32.mrf.mxu0
      %2391 = vdwg.mxu0
      %2392 = vmatprep.subr.bf16.mxu0 0
      %2393 = vmatpush1.bf16.msra.mxu0 0
      %2394 = vmatprep.subr.bf16.mxu0 0
      %2395 = vmatpush1.bf16.msra.mxu0 0
      %2396 = vmatprep.subr.bf16.mxu0 0
      %2397 = vmatpush1.bf16.msra.mxu0 0
      %2398 = vmatprep.subr.bf16.mxu0 0
      %2399 = vmatpush1.bf16.msra.mxu0 0
      %2400 = vmatprep.subr.bf16.mxu0 0
      %2401 = vmatpush1.bf16.msra.mxu0 0
      %2402 = vmatprep.subr.bf16.mxu0 0
      %2403 = vmatpush1.bf16.msra.mxu0 0
      %2404 = vmatprep.subr.bf16.mxu0 0
      %2405 = vmatpush1.bf16.msra.mxu0 %v2273
      %2406 = vmatprep.subr.bf16.mxu0 0
      %2407 = vmatpush1.bf16.msra.mxu0 %v2272
      %2408 = vmatprep.subr.bf16.mxu0 0
      %2409 = vmatpush2.bf16.msra.mxu0 0
      %2410 = vmatprep.subr.bf16.mxu0 0
      %2411 = vmatpush2.bf16.msra.mxu0 0
      %2412 = vmatprep.subr.bf16.mxu0 0
      %2413 = vmatpush2.bf16.msra.mxu0 0
      %2414 = vmatprep.subr.bf16.mxu0 0
      %2415 = vmatpush2.bf16.msra.mxu0 0
      %2416 = vmatprep.subr.bf16.mxu0 0
      %2417 = vmatpush2.bf16.msra.mxu0 0
      %2418 = vmatprep.subr.bf16.mxu0 0
      %2419 = vmatpush2.bf16.msra.mxu0 0
      %2420 = vmatprep.subr.bf16.mxu0 0
      %2421 = vmatpush2.bf16.msra.mxu0 0
      %2422 = vmatprep.subr.bf16.mxu0 0
      %2423 = vmatpush2.bf16.msra.mxu0 0
      %2424 = vmatprep.mubr.bf16.mxu0 0
      %2425 = vmatmul.mubr.bf16.gmra.mxu0 %v2338
      %v2426 = vpop.f32.mrf.mxu0
      %v2427 = vadd.f32 %v2378, %v2426
      %v2428 = vpop.f32.mrf.mxu0
      %v2429 = vpop.f32.mrf.mxu0
      %v2430 = vadd.f32 %v2381, %v2429
      %v2431 = vpop.f32.mrf.mxu0
      %2432 = vmatprep.mubr.bf16.mxu0 0
      %2433 = vmatmul.mubr.bf16.gmra.mxu0 %v2341
      %v2434 = vpop.f32.mrf.mxu0
      %v2435 = vadd.f32 %v2386, %v2434
      %v2436 = vpop.f32.mrf.mxu0
      %v2437 = vpop.f32.mrf.mxu0
      %v2438 = vadd.f32 %v2389, %v2437
      %v2439 = vpop.f32.mrf.mxu0
      %2440 = vdwg.mxu0
      %v2441 = vmax.f32 %v2427, 0.0
      %v2442 = vmax.f32 %v2430, 0.0
      %v2443 = vmax.f32 %v2435, 0.0
      %v2444 = vmax.f32 %v2438, 0.0
      %v2445 = vpack.c.bf16 %v2442, %v2441
      %v2446 = vpack.c.bf16 %v2444, %v2443
      %v2447 = vld [vmem:[%s55] sm:$0xf]
      %v2448 = vld [vmem:[%s55 + $0x4] sm:$0xf]
      %v2451 = vunpack.c.l.b16 %v2447
      %v2452 = vunpack.c.l.b16 %v2448
      %v2453 = vpack.c.b16 %v2452, %v2451
      %v2456 = vsel %vm1722, %v2445, 0
      %v2459 = vsel %vm1722, %v2446, 0
      %2461 = vmatprep.subr.bf16.mxu0 0
      %2462 = vmatpush1.bf16.msra.mxu0 0
      %2463 = vmatprep.subr.bf16.mxu0 0
      %2464 = vmatpush1.bf16.msra.mxu0 0
      %2465 = vmatprep.subr.bf16.mxu0 0
      %2466 = vmatpush1.bf16.msra.mxu0 0
      %2467 = vmatprep.subr.bf16.mxu0 0
      %2468 = vmatpush1.bf16.msra.mxu0 0
      %2469 = vmatprep.subr.bf16.mxu0 0
      %2470 = vmatpush1.bf16.msra.mxu0 0
      %2471 = vmatprep.subr.bf16.mxu0 0
      %2472 = vmatpush1.bf16.msra.mxu0 0
      %2473 = vmatprep.subr.bf16.mxu0 0
      %2474 = vmatpush1.bf16.msra.mxu0 0
      %2475 = vmatprep.subr.bf16.mxu0 0
      %2476 = vmatpush1.bf16.msra.mxu0 %v2453
      %2477 = vmatprep.subr.bf16.mxu0 0
      %2478 = vmatpush2.bf16.msra.mxu0 0
      %2479 = vmatprep.subr.bf16.mxu0 0
      %2480 = vmatpush2.bf16.msra.mxu0 0
      %2481 = vmatprep.subr.bf16.mxu0 0
      %2482 = vmatpush2.bf16.msra.mxu0 0
      %2483 = vmatprep.subr.bf16.mxu0 0
      %2484 = vmatpush2.bf16.msra.mxu0 0
      %2485 = vmatprep.subr.bf16.mxu0 0
      %2486 = vmatpush2.bf16.msra.mxu0 0
      %2487 = vmatprep.subr.bf16.mxu0 0
      %2488 = vmatpush2.bf16.msra.mxu0 0
      %2489 = vmatprep.subr.bf16.mxu0 0
      %2490 = vmatpush2.bf16.msra.mxu0 0
      %2491 = vmatprep.subr.bf16.mxu0 0
      %2492 = vmatpush2.bf16.msra.mxu0 0
      %2493 = vmatprep.mubr.bf16.mxu0 0
      %2494 = vmatmul.mubr.bf16.gmra.mxu0 %v2456
      %v2495 = vpop.f32.mrf.mxu0
      %v2496 = vadd.f32 0.0, %v2495
      %v2497 = vpop.f32.mrf.mxu0
      %v2498 = vpop.f32.mrf.mxu0
      %v2499 = vadd.f32 0.0, %v2498
      %v2500 = vpop.f32.mrf.mxu0
      %2501 = vmatprep.mubr.bf16.mxu0 0
      %2502 = vmatmul.mubr.bf16.gmra.mxu0 %v2459
      %v2503 = vpop.f32.mrf.mxu0
      %v2504 = vadd.f32 0.0, %v2503
      %v2505 = vpop.f32.mrf.mxu0
      %v2506 = vpop.f32.mrf.mxu0
      %v2507 = vadd.f32 0.0, %v2506
      %v2508 = vpop.f32.mrf.mxu0
      %2509 = vdwg.mxu0
      %2510 = vrot.lane.b32.xlu0 %v2496, 64
      %v2511 = vpop.permute.xlu0 %2510
      %v2512 = vsel %vm1483, %v2511, %v2496
      %2513 = vrot.lane.b32.xlu0 %v2499, 64
      %v2514 = vpop.permute.xlu0 %2513
      %v2515 = vsel %vm1483, %v2514, %v2499
      %2516 = vrot.lane.b32.xlu0 %v2504, 64
      %v2517 = vpop.permute.xlu0 %2516
      %v2518 = vsel %vm1483, %v2517, %v2504
      %2519 = vrot.lane.b32.xlu0 %v2507, 64
      %v2520 = vpop.permute.xlu0 %2519
      %v2521 = vsel %vm1483, %v2520, %v2507
      %2522 = vrot.lane.b32.xlu0 %v2512, 64
      %v2523 = vpop.permute.xlu0 %2522
      %2524 = vrot.lane.b32.xlu0 %v2515, 64
      %v2525 = vpop.permute.xlu0 %2524
      %2526 = vrot.lane.b32.xlu0 %v2518, 64
      %v2527 = vpop.permute.xlu0 %2526
      %2528 = vrot.lane.b32.xlu0 %v2521, 64
      %v2529 = vpop.permute.xlu0 %2528
      %v2530 = vsel %vm1483, %v2523, %v2496
      %v2531 = vsel %vm1483, %v2525, %v2499
      %v2532 = vsel %vm1483, %v2527, %v2504
      %v2533 = vsel %vm1483, %v2529, %v2507
      %2538 = vrot.lane.b32.xlu0 %v2530, 73
      %v2539 = vpop.permute.xlu0 %2538
      %2540 = vrot.lane.b32.xlu0 %v2531, 73
      %v2541 = vpop.permute.xlu0 %2540
      %2542 = vrot.lane.b32.xlu0 %v2532, 73
      %v2543 = vpop.permute.xlu0 %2542
      %2544 = vrot.lane.b32.xlu0 %v2533, 73
      %v2545 = vpop.permute.xlu0 %2544
      %v2550 = vsel %vm1491, %v2539, 0.0
      %v2551 = vsel %vm1491, %v2541, 0.0
      %v2552 = vsel %vm1491, %v2543, 0.0
      %v2553 = vsel %vm1491, %v2545, 0.0
      %2554 = vrot.lane.b32.xlu0 %v2530, 72
      %v2555 = vpop.permute.xlu0 %2554
      %2556 = vrot.lane.b32.xlu0 %v2531, 72
      %v2557 = vpop.permute.xlu0 %2556
      %2558 = vrot.lane.b32.xlu0 %v2532, 72
      %v2559 = vpop.permute.xlu0 %2558
      %2560 = vrot.lane.b32.xlu0 %v2533, 72
      %v2561 = vpop.permute.xlu0 %2560
      %v2566 = vsel %vm1498, %v2555, 0.0
      %v2567 = vsel %vm1498, %v2557, 0.0
      %v2568 = vsel %vm1498, %v2559, 0.0
      %v2569 = vsel %vm1498, %v2561, 0.0
      %2570 = vrot.lane.b32.xlu0 %v2530, 71
      %v2571 = vpop.permute.xlu0 %2570
      %2572 = vrot.lane.b32.xlu0 %v2531, 71
      %v2573 = vpop.permute.xlu0 %2572
      %2574 = vrot.lane.b32.xlu0 %v2532, 71
      %v2575 = vpop.permute.xlu0 %2574
      %2576 = vrot.lane.b32.xlu0 %v2533, 71
      %v2577 = vpop.permute.xlu0 %2576
      %v2582 = vsel %vm1504, %v2571, 0.0
      %v2583 = vsel %vm1504, %v2573, 0.0
      %v2584 = vsel %vm1504, %v2575, 0.0
      %v2585 = vsel %vm1504, %v2577, 0.0
      %2586 = vrot.lane.b32.xlu0 %v2530, 65
      %v2587 = vpop.permute.xlu0 %2586
      %2588 = vrot.lane.b32.xlu0 %v2531, 65
      %v2589 = vpop.permute.xlu0 %2588
      %2590 = vrot.lane.b32.xlu0 %v2532, 65
      %v2591 = vpop.permute.xlu0 %2590
      %2592 = vrot.lane.b32.xlu0 %v2533, 65
      %v2593 = vpop.permute.xlu0 %2592
      %v2598 = vsel %vm1510, %v2587, 0.0
      %v2599 = vsel %vm1510, %v2589, 0.0
      %v2600 = vsel %vm1510, %v2591, 0.0
      %v2601 = vsel %vm1510, %v2593, 0.0
      %2602 = vrot.lane.b32.xlu0 %v2530, 127
      %v2603 = vpop.permute.xlu0 %2602
      %2604 = vrot.lane.b32.xlu0 %v2531, 127
      %v2605 = vpop.permute.xlu0 %2604
      %2606 = vrot.lane.b32.xlu0 %v2532, 127
      %v2607 = vpop.permute.xlu0 %2606
      %2608 = vrot.lane.b32.xlu0 %v2533, 127
      %v2609 = vpop.permute.xlu0 %2608
      %v2614 = vsel %vm1516, %v2603, 0.0
      %v2615 = vsel %vm1516, %v2605, 0.0
      %v2616 = vsel %vm1516, %v2607, 0.0
      %v2617 = vsel %vm1516, %v2609, 0.0
      %2618 = vrot.lane.b32.xlu0 %v2530, 121
      %v2619 = vpop.permute.xlu0 %2618
      %2620 = vrot.lane.b32.xlu0 %v2531, 121
      %v2621 = vpop.permute.xlu0 %2620
      %2622 = vrot.lane.b32.xlu0 %v2532, 121
      %v2623 = vpop.permute.xlu0 %2622
      %2624 = vrot.lane.b32.xlu0 %v2533, 121
      %v2625 = vpop.permute.xlu0 %2624
      %v2630 = vsel %vm1522, %v2619, 0.0
      %v2631 = vsel %vm1522, %v2621, 0.0
      %v2632 = vsel %vm1522, %v2623, 0.0
      %v2633 = vsel %vm1522, %v2625, 0.0
      %2634 = vrot.lane.b32.xlu0 %v2530, 120
      %v2635 = vpop.permute.xlu0 %2634
      %2636 = vrot.lane.b32.xlu0 %v2531, 120
      %v2637 = vpop.permute.xlu0 %2636
      %2638 = vrot.lane.b32.xlu0 %v2532, 120
      %v2639 = vpop.permute.xlu0 %2638
      %2640 = vrot.lane.b32.xlu0 %v2533, 120
      %v2641 = vpop.permute.xlu0 %2640
      %v2646 = vsel %vm1528, %v2635, 0.0
      %v2647 = vsel %vm1528, %v2637, 0.0
      %v2648 = vsel %vm1528, %v2639, 0.0
      %v2649 = vsel %vm1528, %v2641, 0.0
      %2650 = vrot.lane.b32.xlu0 %v2530, 119
      %v2651 = vpop.permute.xlu0 %2650
      %2652 = vrot.lane.b32.xlu0 %v2531, 119
      %v2653 = vpop.permute.xlu0 %2652
      %2654 = vrot.lane.b32.xlu0 %v2532, 119
      %v2655 = vpop.permute.xlu0 %2654
      %2656 = vrot.lane.b32.xlu0 %v2533, 119
      %v2657 = vpop.permute.xlu0 %2656
      %v2662 = vsel %vm1534, %v2651, 0.0
      %v2663 = vsel %vm1534, %v2653, 0.0
      %v2664 = vsel %vm1534, %v2655, 0.0
      %v2665 = vsel %vm1534, %v2657, 0.0
      %v2666 = vpack.c.bf16 %v2551, %v2550
      %v2667 = vpack.c.bf16 %v2553, %v2552
      %v2668 = vpack.c.bf16 %v2567, %v2566
      %v2669 = vpack.c.bf16 %v2569, %v2568
      %v2670 = vpack.c.bf16 %v2583, %v2582
      %v2671 = vpack.c.bf16 %v2585, %v2584
      %v2672 = vpack.c.bf16 %v2599, %v2598
      %v2673 = vpack.c.bf16 %v2601, %v2600
      %v2674 = vpack.c.bf16 %v2499, %v2496
      %v2675 = vpack.c.bf16 %v2507, %v2504
      %v2676 = vpack.c.bf16 %v2615, %v2614
      %v2677 = vpack.c.bf16 %v2617, %v2616
      %v2678 = vpack.c.bf16 %v2631, %v2630
      %v2679 = vpack.c.bf16 %v2633, %v2632
      %v2680 = vpack.c.bf16 %v2647, %v2646
      %v2681 = vpack.c.bf16 %v2649, %v2648
      %v2682 = vpack.c.bf16 %v2663, %v2662
      %v2683 = vpack.c.bf16 %v2665, %v2664
      %v2684 = vld [vmem:[%s27] sm:$0xff]
      %v2685 = vld [vmem:[%s27 + $0x8] sm:$0xf]
      %v2686 = vld [vmem:[%s27 + $0xc] sm:$0xff]
      %v2687 = vld [vmem:[%s27 + $0x14] sm:$0xf]
      %2688 = vrot.lane.b32.xlu0 %v1779, 73
      %v2689 = vpop.permute.xlu0 %2688
      %2690 = vrot.lane.b32.xlu0 %v1780, 73
      %v2691 = vpop.permute.xlu0 %2690
      %v2694 = vsel %vm1491, %v2689, 0.0
      %v2695 = vsel %vm1491, %v2691, 0.0
      %2696 = vrot.lane.b32.xlu0 %v1779, 72
      %v2697 = vpop.permute.xlu0 %2696
      %2698 = vrot.lane.b32.xlu0 %v1780, 72
      %v2699 = vpop.permute.xlu0 %2698
      %v2702 = vsel %vm1498, %v2697, 0.0
      %v2703 = vsel %vm1498, %v2699, 0.0
      %2704 = vrot.lane.b32.xlu0 %v1779, 71
      %v2705 = vpop.permute.xlu0 %2704
      %2706 = vrot.lane.b32.xlu0 %v1780, 71
      %v2707 = vpop.permute.xlu0 %2706
      %v2710 = vsel %vm1504, %v2705, 0.0
      %v2711 = vsel %vm1504, %v2707, 0.0
      %2712 = vrot.lane.b32.xlu0 %v1779, 65
      %v2713 = vpop.permute.xlu0 %2712
      %2714 = vrot.lane.b32.xlu0 %v1780, 65
      %v2715 = vpop.permute.xlu0 %2714
      %v2718 = vsel %vm1510, %v2713, 0.0
      %v2719 = vsel %vm1510, %v2715, 0.0
      %v2720 = vsel %vm1516, %v1784, 0.0
      %v2721 = vsel %vm1516, %v1786, 0.0
      %2722 = vrot.lane.b32.xlu0 %v1779, 121
      %v2723 = vpop.permute.xlu0 %2722
      %2724 = vrot.lane.b32.xlu0 %v1780, 121
      %v2725 = vpop.permute.xlu0 %2724
      %v2728 = vsel %vm1522, %v2723, 0.0
      %v2729 = vsel %vm1522, %v2725, 0.0
      %2730 = vrot.lane.b32.xlu0 %v1779, 120
      %v2731 = vpop.permute.xlu0 %2730
      %2732 = vrot.lane.b32.xlu0 %v1780, 120
      %v2733 = vpop.permute.xlu0 %2732
      %v2736 = vsel %vm1528, %v2731, 0.0
      %v2737 = vsel %vm1528, %v2733, 0.0
      %2738 = vrot.lane.b32.xlu0 %v1779, 119
      %v2739 = vpop.permute.xlu0 %2738
      %2740 = vrot.lane.b32.xlu0 %v1780, 119
      %v2741 = vpop.permute.xlu0 %2740
      %v2744 = vsel %vm1534, %v2739, 0.0
      %v2745 = vsel %vm1534, %v2741, 0.0
      %v2746 = vpack.c.bf16 %v2695, %v2694
      %v2747 = vpack.c.bf16 %v2703, %v2702
      %v2748 = vpack.c.bf16 %v2711, %v2710
      %v2749 = vpack.c.bf16 %v2719, %v2718
      %v2750 = vpack.c.bf16 %v1768, %v1767
      %v2751 = vpack.c.bf16 %v2721, %v2720
      %v2752 = vpack.c.bf16 %v2729, %v2728
      %v2753 = vpack.c.bf16 %v2737, %v2736
      %v2754 = vpack.c.bf16 %v2745, %v2744
      %v2755 = vld [vmem:[%s29] sm:$0xff]
      %v2756 = vld [vmem:[%s29 + $0x8] sm:$0xff]
      %v2759 = vunpack.c.l.b16 %v2755
      %v2760 = vunpack.c.h.b16 %v2755
      %v2761 = vunpack.c.l.b16 %v2756
      %v2762 = vunpack.c.h.b16 %v2756
      %v2763 = vpack.c.b16 %v2761, %v2759
      %v2764 = vpack.c.b16 %v2762, %v2760
      %v2767 = vsel %vm1722, %v2764, 0
      %2769 = vmatprep.subr.bf16.mxu0 0
      %2770 = vmatpush1.bf16.msra.mxu0 %v2753
      %2771 = vmatprep.subr.bf16.mxu0 0
      %2772 = vmatpush1.bf16.msra.mxu0 %v2752
      %2773 = vmatprep.subr.bf16.mxu0 0
      %2774 = vmatpush1.bf16.msra.mxu0 %v2751
      %2775 = vmatprep.subr.bf16.mxu0 0
      %2776 = vmatpush1.bf16.msra.mxu0 %v2750
      %2777 = vmatprep.subr.bf16.mxu0 0
      %2778 = vmatpush1.bf16.msra.mxu0 %v2749
      %2779 = vmatprep.subr.bf16.mxu0 0
      %2780 = vmatpush1.bf16.msra.mxu0 %v2748
      %2781 = vmatprep.subr.bf16.mxu0 0
      %2782 = vmatpush1.bf16.msra.mxu0 %v2747
      %2783 = vmatprep.subr.bf16.mxu0 0
      %2784 = vmatpush1.bf16.msra.mxu0 %v2746
      %2785 = vmatprep.subr.bf16.mxu0 0
      %2786 = vmatpush2.bf16.msra.mxu0 0
      %2787 = vmatprep.subr.bf16.mxu0 0
      %2788 = vmatpush2.bf16.msra.mxu0 0
      %2789 = vmatprep.subr.bf16.mxu0 0
      %2790 = vmatpush2.bf16.msra.mxu0 0
      %2791 = vmatprep.subr.bf16.mxu0 0
      %2792 = vmatpush2.bf16.msra.mxu0 0
      %2793 = vmatprep.subr.bf16.mxu0 0
      %2794 = vmatpush2.bf16.msra.mxu0 0
      %2795 = vmatprep.subr.bf16.mxu0 0
      %2796 = vmatpush2.bf16.msra.mxu0 0
      %2797 = vmatprep.subr.bf16.mxu0 0
      %2798 = vmatpush2.bf16.msra.mxu0 0
      %2799 = vmatprep.subr.bf16.mxu0 0
      %2800 = vmatpush2.bf16.msra.mxu0 %v2754
      %2801 = vmatprep.mubr.bf16.mxu0 %v2767
      %2802 = vmatmul.mubr.bf16.gmra.mxu0 %v2763
      %v2803 = vpop.f32.mrf.mxu0
      %v2804 = vadd.f32 0.0, %v2803
      %v2805 = vpop.f32.mrf.mxu0
      %v2806 = vpop.f32.mrf.mxu0
      %v2807 = vadd.f32 0.0, %v2806
      %v2808 = vpop.f32.mrf.mxu0
      %2809 = vdwg.mxu0
      %v2814 = vunpack.c.l.b16 %v2684
      %v2815 = vunpack.c.h.b16 %v2684
      %v2816 = vunpack.c.l.b16 %v2685
      %v2817 = vunpack.c.l.b16 %v2686
      %v2818 = vunpack.c.h.b16 %v2686
      %v2819 = vunpack.c.l.b16 %v2687
      %v2820 = vpack.c.b16 %v2817, %v2814
      %v2821 = vpack.c.b16 %v2818, %v2815
      %v2822 = vpack.c.b16 %v2819, %v2816
      %v2826 = vsel %vm2336, %v2822, 0
      %2828 = vmatprep.subr.bf16.mxu0 0
      %2829 = vmatpush1.bf16.msra.mxu0 %v2673
      %2830 = vmatprep.subr.bf16.mxu0 0
      %2831 = vmatpush1.bf16.msra.mxu0 %v2672
      %2832 = vmatprep.subr.bf16.mxu0 0
      %2833 = vmatpush1.bf16.msra.mxu0 %v2671
      %2834 = vmatprep.subr.bf16.mxu0 0
      %2835 = vmatpush1.bf16.msra.mxu0 %v2670
      %2836 = vmatprep.subr.bf16.mxu0 0
      %2837 = vmatpush1.bf16.msra.mxu0 %v2669
      %2838 = vmatprep.subr.bf16.mxu0 0
      %2839 = vmatpush1.bf16.msra.mxu0 %v2668
      %2840 = vmatprep.subr.bf16.mxu0 0
      %2841 = vmatpush1.bf16.msra.mxu0 %v2667
      %2842 = vmatprep.subr.bf16.mxu0 0
      %2843 = vmatpush1.bf16.msra.mxu0 %v2666
      %2844 = vmatprep.subr.bf16.mxu0 0
      %2845 = vmatpush2.bf16.msra.mxu0 %v2681
      %2846 = vmatprep.subr.bf16.mxu0 0
      %2847 = vmatpush2.bf16.msra.mxu0 %v2680
      %2848 = vmatprep.subr.bf16.mxu0 0
      %2849 = vmatpush2.bf16.msra.mxu0 %v2679
      %2850 = vmatprep.subr.bf16.mxu0 0
      %2851 = vmatpush2.bf16.msra.mxu0 %v2678
      %2852 = vmatprep.subr.bf16.mxu0 0
      %2853 = vmatpush2.bf16.msra.mxu0 %v2677
      %2854 = vmatprep.subr.bf16.mxu0 0
      %2855 = vmatpush2.bf16.msra.mxu0 %v2676
      %2856 = vmatprep.subr.bf16.mxu0 0
      %2857 = vmatpush2.bf16.msra.mxu0 %v2675
      %2858 = vmatprep.subr.bf16.mxu0 0
      %2859 = vmatpush2.bf16.msra.mxu0 %v2674
      %2860 = vmatprep.mubr.bf16.mxu0 %v2821
      %2861 = vmatmul.mubr.bf16.gmra.mxu0 %v2820
      %v2862 = vpop.f32.mrf.mxu0
      %v2863 = vadd.f32 %v2804, %v2862
      %v2864 = vpop.f32.mrf.mxu0
      %v2865 = vpop.f32.mrf.mxu0
      %v2866 = vadd.f32 %v2807, %v2865
      %v2867 = vpop.f32.mrf.mxu0
      %2868 = vdwg.mxu0
      %2869 = vmatprep.subr.bf16.mxu0 0
      %2870 = vmatpush1.bf16.msra.mxu0 0
      %2871 = vmatprep.subr.bf16.mxu0 0
      %2872 = vmatpush1.bf16.msra.mxu0 0
      %2873 = vmatprep.subr.bf16.mxu0 0
      %2874 = vmatpush1.bf16.msra.mxu0 0
      %2875 = vmatprep.subr.bf16.mxu0 0
      %2876 = vmatpush1.bf16.msra.mxu0 0
      %2877 = vmatprep.subr.bf16.mxu0 0
      %2878 = vmatpush1.bf16.msra.mxu0 0
      %2879 = vmatprep.subr.bf16.mxu0 0
      %2880 = vmatpush1.bf16.msra.mxu0 0
      %2881 = vmatprep.subr.bf16.mxu0 0
      %2882 = vmatpush1.bf16.msra.mxu0 %v2683
      %2883 = vmatprep.subr.bf16.mxu0 0
      %2884 = vmatpush1.bf16.msra.mxu0 %v2682
      %2885 = vmatprep.subr.bf16.mxu0 0
      %2886 = vmatpush2.bf16.msra.mxu0 0
      %2887 = vmatprep.subr.bf16.mxu0 0
      %2888 = vmatpush2.bf16.msra.mxu0 0
      %2889 = vmatprep.subr.bf16.mxu0 0
      %2890 = vmatpush2.bf16.msra.mxu0 0
      %2891 = vmatprep.subr.bf16.mxu0 0
      %2892 = vmatpush2.bf16.msra.mxu0 0
      %2893 = vmatprep.subr.bf16.mxu0 0
      %2894 = vmatpush2.bf16.msra.mxu0 0
      %2895 = vmatprep.subr.bf16.mxu0 0
      %2896 = vmatpush2.bf16.msra.mxu0 0
      %2897 = vmatprep.subr.bf16.mxu0 0
      %2898 = vmatpush2.bf16.msra.mxu0 0
      %2899 = vmatprep.subr.bf16.mxu0 0
      %2900 = vmatpush2.bf16.msra.mxu0 0
      %2901 = vmatprep.mubr.bf16.mxu0 0
      %2902 = vmatmul.mubr.bf16.gmra.mxu0 %v2826
      %v2903 = vpop.f32.mrf.mxu0
      %v2904 = vadd.f32 %v2863, %v2903
      %v2905 = vpop.f32.mrf.mxu0
      %v2906 = vpop.f32.mrf.mxu0
      %v2907 = vadd.f32 %v2866, %v2906
      %v2908 = vpop.f32.mrf.mxu0
      %2909 = vdwg.mxu0
      %v2910 = vld [vmem:[%s31] sm:$0xff]
      %v2911 = vld [vmem:[%s31 + $0x8] sm:$0xff]
      %2913 = vset.pattern.permute.xlu0 0
      %2914 = vperm.xlu0 %2913, %v2910
      %v2915 = vpop.permute.xlu0 %2914
      %2918 = vset.pattern.permute.xlu0 0
      %2919 = vperm.xlu0 %2918, %v2911
      %v2920 = vpop.permute.xlu0 %2919
      %v2922 = vadd.f32 %v2904, %v2915
      %v2923 = vadd.f32 %v2907, %v2920
      %v2924 = vmax.f32 %v2922, 0.0
      %v2925 = vmax.f32 %v2923, 0.0
      %2926 = vrot.lane.b32.xlu0 %v2924, 64
      %v2927 = vpop.permute.xlu0 %2926
      %v2928 = vsel %vm1483, %v2927, %v2924
      %2929 = vrot.lane.b32.xlu0 %v2925, 64
      %v2930 = vpop.permute.xlu0 %2929
      %v2931 = vsel %vm1483, %v2930, %v2925
      %2932 = vrot.lane.b32.xlu0 %v2928, 64
      %v2933 = vpop.permute.xlu0 %2932
      %2934 = vrot.lane.b32.xlu0 %v2931, 64
      %v2935 = vpop.permute.xlu0 %2934
      %v2936 = vsel %vm1483, %v2933, %v2924
      %v2937 = vsel %vm1483, %v2935, %v2925
      %2940 = vrot.lane.b32.xlu0 %v2936, 73
      %v2941 = vpop.permute.xlu0 %2940
      %2942 = vrot.lane.b32.xlu0 %v2937, 73
      %v2943 = vpop.permute.xlu0 %2942
      %v2946 = vsel %vm1491, %v2941, 0.0
      %v2947 = vsel %vm1491, %v2943, 0.0
      %2948 = vrot.lane.b32.xlu0 %v2936, 72
      %v2949 = vpop.permute.xlu0 %2948
      %2950 = vrot.lane.b32.xlu0 %v2937, 72
      %v2951 = vpop.permute.xlu0 %2950
      %v2954 = vsel %vm1498, %v2949, 0.0
      %v2955 = vsel %vm1498, %v2951, 0.0
      %2956 = vrot.lane.b32.xlu0 %v2936, 71
      %v2957 = vpop.permute.xlu0 %2956
      %2958 = vrot.lane.b32.xlu0 %v2937, 71
      %v2959 = vpop.permute.xlu0 %2958
      %v2962 = vsel %vm1504, %v2957, 0.0
      %v2963 = vsel %vm1504, %v2959, 0.0
      %2964 = vrot.lane.b32.xlu0 %v2936, 65
      %v2965 = vpop.permute.xlu0 %2964
      %2966 = vrot.lane.b32.xlu0 %v2937, 65
      %v2967 = vpop.permute.xlu0 %2966
      %v2970 = vsel %vm1510, %v2965, 0.0
      %v2971 = vsel %vm1510, %v2967, 0.0
      %2972 = vrot.lane.b32.xlu0 %v2936, 127
      %v2973 = vpop.permute.xlu0 %2972
      %2974 = vrot.lane.b32.xlu0 %v2937, 127
      %v2975 = vpop.permute.xlu0 %2974
      %v2978 = vsel %vm1516, %v2973, 0.0
      %v2979 = vsel %vm1516, %v2975, 0.0
      %2980 = vrot.lane.b32.xlu0 %v2936, 121
      %v2981 = vpop.permute.xlu0 %2980
      %2982 = vrot.lane.b32.xlu0 %v2937, 121
      %v2983 = vpop.permute.xlu0 %2982
      %v2986 = vsel %vm1522, %v2981, 0.0
      %v2987 = vsel %vm1522, %v2983, 0.0
      %2988 = vrot.lane.b32.xlu0 %v2936, 120
      %v2989 = vpop.permute.xlu0 %2988
      %2990 = vrot.lane.b32.xlu0 %v2937, 120
      %v2991 = vpop.permute.xlu0 %2990
      %v2994 = vsel %vm1528, %v2989, 0.0
      %v2995 = vsel %vm1528, %v2991, 0.0
      %2996 = vrot.lane.b32.xlu0 %v2936, 119
      %v2997 = vpop.permute.xlu0 %2996
      %2998 = vrot.lane.b32.xlu0 %v2937, 119
      %v2999 = vpop.permute.xlu0 %2998
      %v3002 = vsel %vm1534, %v2997, 0.0
      %v3003 = vsel %vm1534, %v2999, 0.0
      %v3004 = vpack.c.bf16 %v2947, %v2946
      %v3005 = vpack.c.bf16 %v2955, %v2954
      %v3006 = vpack.c.bf16 %v2963, %v2962
      %v3007 = vpack.c.bf16 %v2971, %v2970
      %v3008 = vpack.c.bf16 %v2925, %v2924
      %v3009 = vpack.c.bf16 %v2979, %v2978
      %v3010 = vpack.c.bf16 %v2987, %v2986
      %v3011 = vpack.c.bf16 %v2995, %v2994
      %v3012 = vpack.c.bf16 %v3003, %v3002
      %v3013 = vld [vmem:[%s33] sm:$0xff]
      %v3014 = vld [vmem:[%s33 + $0x8] sm:$0xff]
      %v3015 = vld [vmem:[%s35] sm:$0xff]
      %v3016 = vld [vmem:[%s35 + $0x8] sm:$0xff]
      %3018 = vset.pattern.permute.xlu0 0
      %3019 = vperm.xlu0 %3018, %v3015
      %v3020 = vpop.permute.xlu0 %3019
      %3023 = vset.pattern.permute.xlu0 0
      %3024 = vperm.xlu0 %3023, %v3016
      %v3025 = vpop.permute.xlu0 %3024
      %v3029 = vunpack.c.l.b16 %v3013
      %v3030 = vunpack.c.h.b16 %v3013
      %v3031 = vunpack.c.l.b16 %v3014
      %v3032 = vunpack.c.h.b16 %v3014
      %v3033 = vpack.c.b16 %v3031, %v3029
      %v3034 = vpack.c.b16 %v3032, %v3030
      %v3037 = vsel %vm1722, %v3034, 0
      %3039 = vmatprep.subr.bf16.mxu0 0
      %3040 = vmatpush1.bf16.msra.mxu0 %v3011
      %3041 = vmatprep.subr.bf16.mxu0 0
      %3042 = vmatpush1.bf16.msra.mxu0 %v3010
      %3043 = vmatprep.subr.bf16.mxu0 0
      %3044 = vmatpush1.bf16.msra.mxu0 %v3009
      %3045 = vmatprep.subr.bf16.mxu0 0
      %3046 = vmatpush1.bf16.msra.mxu0 %v3008
      %3047 = vmatprep.subr.bf16.mxu0 0
      %3048 = vmatpush1.bf16.msra.mxu0 %v3007
      %3049 = vmatprep.subr.bf16.mxu0 0
      %3050 = vmatpush1.bf16.msra.mxu0 %v3006
      %3051 = vmatprep.subr.bf16.mxu0 0
      %3052 = vmatpush1.bf16.msra.mxu0 %v3005
      %3053 = vmatprep.subr.bf16.mxu0 0
      %3054 = vmatpush1.bf16.msra.mxu0 %v3004
      %3055 = vmatprep.subr.bf16.mxu0 0
      %3056 = vmatpush2.bf16.msra.mxu0 0
      %3057 = vmatprep.subr.bf16.mxu0 0
      %3058 = vmatpush2.bf16.msra.mxu0 0
      %3059 = vmatprep.subr.bf16.mxu0 0
      %3060 = vmatpush2.bf16.msra.mxu0 0
      %3061 = vmatprep.subr.bf16.mxu0 0
      %3062 = vmatpush2.bf16.msra.mxu0 0
      %3063 = vmatprep.subr.bf16.mxu0 0
      %3064 = vmatpush2.bf16.msra.mxu0 0
      %3065 = vmatprep.subr.bf16.mxu0 0
      %3066 = vmatpush2.bf16.msra.mxu0 0
      %3067 = vmatprep.subr.bf16.mxu0 0
      %3068 = vmatpush2.bf16.msra.mxu0 0
      %3069 = vmatprep.subr.bf16.mxu0 0
      %3070 = vmatpush2.bf16.msra.mxu0 %v3012
      %3071 = vmatprep.mubr.bf16.mxu0 %v3037
      %3072 = vmatmul.mubr.bf16.gmra.mxu0 %v3033
      %v3073 = vpop.f32.mrf.mxu0
      %v3074 = vadd.f32 %v3020, %v3073
      %v3075 = vpop.f32.mrf.mxu0
      %v3076 = vpop.f32.mrf.mxu0
      %v3077 = vadd.f32 %v3025, %v3076
      %v3078 = vpop.f32.mrf.mxu0
      %3079 = vdwg.mxu0
      %v3080 = vmax.f32 %v3074, 0.0
      %v3081 = vmax.f32 %v3077, 0.0
      %v3082 = vpack.c.bf16 %v3081, %v3080
      %v3083 = vld [vmem:[%s57] sm:$0xff]
      %v3084 = vld [vmem:[%s57 + $0x8] sm:$0xff]
      %v3085 = vld [vmem:[%s57 + $0x10] sm:$0xff]
      %v3086 = vld [vmem:[%s57 + $0x18] sm:$0xff]
      %v3087 = vld [vmem:[%s57 + $0x20] sm:$0xff]
      %v3088 = vld [vmem:[%s57 + $0x28] sm:$0xff]
      %v3089 = vld [vmem:[%s57 + $0x30] sm:$0xff]
      %v3090 = vld [vmem:[%s57 + $0x38] sm:$0xff]
      %v3099 = vunpack.c.l.b16 %v3083
      %v3100 = vunpack.c.h.b16 %v3083
      %v3101 = vunpack.c.l.b16 %v3084
      %v3102 = vunpack.c.h.b16 %v3084
      %v3103 = vunpack.c.l.b16 %v3085
      %v3104 = vunpack.c.h.b16 %v3085
      %v3105 = vunpack.c.l.b16 %v3086
      %v3106 = vunpack.c.h.b16 %v3086
      %v3107 = vunpack.c.l.b16 %v3087
      %v3108 = vunpack.c.h.b16 %v3087
      %v3109 = vunpack.c.l.b16 %v3088
      %v3110 = vunpack.c.h.b16 %v3088
      %v3111 = vunpack.c.l.b16 %v3089
      %v3112 = vunpack.c.h.b16 %v3089
      %v3113 = vunpack.c.l.b16 %v3090
      %v3114 = vunpack.c.h.b16 %v3090
      %v3115 = vpack.c.b16 %v3101, %v3099
      %v3116 = vpack.c.b16 %v3102, %v3100
      %v3117 = vpack.c.b16 %v3105, %v3103
      %v3118 = vpack.c.b16 %v3106, %v3104
      %v3119 = vpack.c.b16 %v3109, %v3107
      %v3120 = vpack.c.b16 %v3110, %v3108
      %v3121 = vpack.c.b16 %v3113, %v3111
      %v3122 = vpack.c.b16 %v3114, %v3112
      %v3132 = vsel %vm1846, %v3082, 0
      %3134 = vmatprep.subr.bf16.mxu0 0
      %3135 = vmatpush1.bf16.msra.mxu0 0
      %3136 = vmatprep.subr.bf16.mxu0 0
      %3137 = vmatpush1.bf16.msra.mxu0 0
      %3138 = vmatprep.subr.bf16.mxu0 0
      %3139 = vmatpush1.bf16.msra.mxu0 0
      %3140 = vmatprep.subr.bf16.mxu0 0
      %3141 = vmatpush1.bf16.msra.mxu0 0
      %3142 = vmatprep.subr.bf16.mxu0 %v3122
      %3143 = vmatpush1.bf16.msra.mxu0 %v3121
      %3144 = vmatprep.subr.bf16.mxu0 %v3120
      %3145 = vmatpush1.bf16.msra.mxu0 %v3119
      %3146 = vmatprep.subr.bf16.mxu0 %v3118
      %3147 = vmatpush1.bf16.msra.mxu0 %v3117
      %3148 = vmatprep.subr.bf16.mxu0 %v3116
      %3149 = vmatpush1.bf16.msra.mxu0 %v3115
      %3150 = vmatprep.subr.bf16.mxu0 0
      %3151 = vmatpush2.bf16.msra.mxu0 0
      %3152 = vmatprep.subr.bf16.mxu0 0
      %3153 = vmatpush2.bf16.msra.mxu0 0
      %3154 = vmatprep.subr.bf16.mxu0 0
      %3155 = vmatpush2.bf16.msra.mxu0 0
      %3156 = vmatprep.subr.bf16.mxu0 0
      %3157 = vmatpush2.bf16.msra.mxu0 0
      %3158 = vmatprep.subr.bf16.mxu0 0
      %3159 = vmatpush2.bf16.msra.mxu0 0
      %3160 = vmatprep.subr.bf16.mxu0 0
      %3161 = vmatpush2.bf16.msra.mxu0 0
      %3162 = vmatprep.subr.bf16.mxu0 0
      %3163 = vmatpush2.bf16.msra.mxu0 0
      %3164 = vmatprep.subr.bf16.mxu0 0
      %3165 = vmatpush2.bf16.msra.mxu0 0
      %3166 = vmatprep.mubr.bf16.mxu0 0
      %3167 = vmatmul.mubr.bf16.gmra.mxu0 %v3132
      %v3168 = vpop.f32.mrf.mxu0
      %v3169 = vadd.f32 0.0, %v3168
      %v3170 = vpop.f32.mrf.mxu0
      %v3171 = vadd.f32 0.0, %v3170
      %v3172 = vpop.f32.mrf.mxu0
      %v3173 = vadd.f32 0.0, %v3172
      %v3174 = vpop.f32.mrf.mxu0
      %v3175 = vadd.f32 0.0, %v3174
      %3176 = vdwg.mxu0
      %3177 = vrot.lane.b32.xlu0 %v3169, 17
      %v3178 = vpop.permute.xlu0 %3177
      %3179 = vrot.lane.b32.xlu0 %v3173, 17
      %v3180 = vpop.permute.xlu0 %3179
      %3181 = vrot.lane.b32.xlu0 %v3171, 17
      %v3182 = vpop.permute.xlu0 %3181
      %3183 = vrot.lane.b32.xlu0 %v3175, 17
      %v3184 = vpop.permute.xlu0 %3183
      %v3185 = vsel %vm993, %v3178, %v3182
      %v3186 = vsel %vm993, %v3180, %v3184
      %v3187 = vsel %vm993, %v3182, %v3178
      %v3188 = vsel %vm993, %v3184, %v3180
      %v3189 = vsel %vm998, %v3187, 0.0
      %v3190 = vsel %vm999, %v3185, 0.0
      %v3191 = vsel %vm998, %v3188, 0.0
      %v3192 = vsel %vm999, %v3186, 0.0
      %3193 = vrot.lane.b32.xlu0 %v3169, 16
      %v3194 = vpop.permute.xlu0 %3193
      %3195 = vrot.lane.b32.xlu0 %v3173, 16
      %v3196 = vpop.permute.xlu0 %3195
      %3197 = vrot.lane.b32.xlu0 %v3171, 16
      %v3198 = vpop.permute.xlu0 %3197
      %3199 = vrot.lane.b32.xlu0 %v3175, 16
      %v3200 = vpop.permute.xlu0 %3199
      %v3201 = vsel %vm1006, %v3194, %v3198
      %v3202 = vsel %vm1006, %v3196, %v3200
      %v3203 = vsel %vm1006, %v3198, %v3194
      %v3204 = vsel %vm1006, %v3200, %v3196
      %v3205 = vsel %vm1011, %v3203, 0.0
      %v3206 = vsel %vm1012, %v3201, 0.0
      %v3207 = vsel %vm1011, %v3204, 0.0
      %v3208 = vsel %vm1012, %v3202, 0.0
      %3209 = vrot.lane.b32.xlu0 %v3169, 15
      %v3210 = vpop.permute.xlu0 %3209
      %3211 = vrot.lane.b32.xlu0 %v3173, 15
      %v3212 = vpop.permute.xlu0 %3211
      %3213 = vrot.lane.b32.xlu0 %v3171, 15
      %v3214 = vpop.permute.xlu0 %3213
      %3215 = vrot.lane.b32.xlu0 %v3175, 15
      %v3216 = vpop.permute.xlu0 %3215
      %v3217 = vsel %vm1019, %v3210, %v3214
      %v3218 = vsel %vm1019, %v3212, %v3216
      %v3219 = vsel %vm1019, %v3214, %v3210
      %v3220 = vsel %vm1019, %v3216, %v3212
      %v3221 = vsel %vm1024, %v3219, 0.0
      %v3222 = vsel %vm1025, %v3217, 0.0
      %v3223 = vsel %vm1024, %v3220, 0.0
      %v3224 = vsel %vm1025, %v3218, 0.0
      %3225 = vrot.lane.b32.xlu0 %v3169, 1
      %v3226 = vpop.permute.xlu0 %3225
      %3227 = vrot.lane.b32.xlu0 %v3173, 1
      %v3228 = vpop.permute.xlu0 %3227
      %3229 = vrot.lane.b32.xlu0 %v3171, 1
      %v3230 = vpop.permute.xlu0 %3229
      %3231 = vrot.lane.b32.xlu0 %v3175, 1
      %v3232 = vpop.permute.xlu0 %3231
      %v3233 = vsel %vm1032, %v3226, %v3230
      %v3234 = vsel %vm1032, %v3228, %v3232
      %v3235 = vsel %vm1032, %v3230, %v3226
      %v3236 = vsel %vm1032, %v3232, %v3228
      %v3237 = vsel %vm1037, %v3235, 0.0
      %v3238 = vsel %vm1038, %v3233, 0.0
      %v3239 = vsel %vm1037, %v3236, 0.0
      %v3240 = vsel %vm1038, %v3234, 0.0
      %3241 = vrot.lane.b32.xlu0 %v3169, 127
      %v3242 = vpop.permute.xlu0 %3241
      %3243 = vrot.lane.b32.xlu0 %v3173, 127
      %v3244 = vpop.permute.xlu0 %3243
      %3245 = vrot.lane.b32.xlu0 %v3171, 127
      %v3246 = vpop.permute.xlu0 %3245
      %3247 = vrot.lane.b32.xlu0 %v3175, 127
      %v3248 = vpop.permute.xlu0 %3247
      %v3249 = vsel %vm1045, %v3242, %v3246
      %v3250 = vsel %vm1045, %v3244, %v3248
      %v3251 = vsel %vm1045, %v3246, %v3242
      %v3252 = vsel %vm1045, %v3248, %v3244
      %v3253 = vsel %vm1050, %v3249, 0.0
      %v3254 = vsel %vm1051, %v3251, 0.0
      %v3255 = vsel %vm1050, %v3250, 0.0
      %v3256 = vsel %vm1051, %v3252, 0.0
      %3257 = vrot.lane.b32.xlu0 %v3169, 113
      %v3258 = vpop.permute.xlu0 %3257
      %3259 = vrot.lane.b32.xlu0 %v3173, 113
      %v3260 = vpop.permute.xlu0 %3259
      %3261 = vrot.lane.b32.xlu0 %v3171, 113
      %v3262 = vpop.permute.xlu0 %3261
      %3263 = vrot.lane.b32.xlu0 %v3175, 113
      %v3264 = vpop.permute.xlu0 %3263
      %v3265 = vsel %vm1058, %v3258, %v3262
      %v3266 = vsel %vm1058, %v3260, %v3264
      %v3267 = vsel %vm1058, %v3262, %v3258
      %v3268 = vsel %vm1058, %v3264, %v3260
      %v3269 = vsel %vm1063, %v3265, 0.0
      %v3270 = vsel %vm1064, %v3267, 0.0
      %v3271 = vsel %vm1063, %v3266, 0.0
      %v3272 = vsel %vm1064, %v3268, 0.0
      %3273 = vrot.lane.b32.xlu0 %v3169, 112
      %v3274 = vpop.permute.xlu0 %3273
      %3275 = vrot.lane.b32.xlu0 %v3173, 112
      %v3276 = vpop.permute.xlu0 %3275
      %3277 = vrot.lane.b32.xlu0 %v3171, 112
      %v3278 = vpop.permute.xlu0 %3277
      %3279 = vrot.lane.b32.xlu0 %v3175, 112
      %v3280 = vpop.permute.xlu0 %3279
      %v3281 = vsel %vm1071, %v3274, %v3278
      %v3282 = vsel %vm1071, %v3276, %v3280
      %v3283 = vsel %vm1071, %v3278, %v3274
      %v3284 = vsel %vm1071, %v3280, %v3276
      %v3285 = vsel %vm1076, %v3281, 0.0
      %v3286 = vsel %vm1077, %v3283, 0.0
      %v3287 = vsel %vm1076, %v3282, 0.0
      %v3288 = vsel %vm1077, %v3284, 0.0
      %3289 = vrot.lane.b32.xlu0 %v3169, 111
      %v3290 = vpop.permute.xlu0 %3289
      %3291 = vrot.lane.b32.xlu0 %v3173, 111
      %v3292 = vpop.permute.xlu0 %3291
      %3293 = vrot.lane.b32.xlu0 %v3171, 111
      %v3294 = vpop.permute.xlu0 %3293
      %3295 = vrot.lane.b32.xlu0 %v3175, 111
      %v3296 = vpop.permute.xlu0 %3295
      %v3297 = vsel %vm1084, %v3290, %v3294
      %v3298 = vsel %vm1084, %v3292, %v3296
      %v3299 = vsel %vm1084, %v3294, %v3290
      %v3300 = vsel %vm1084, %v3296, %v3292
      %v3301 = vsel %vm1089, %v3297, 0.0
      %v3302 = vsel %vm1090, %v3299, 0.0
      %v3303 = vsel %vm1089, %v3298, 0.0
      %v3304 = vsel %vm1090, %v3300, 0.0
      %v3305 = vpack.c.bf16 %v3191, %v3189
      %v3306 = vpack.c.bf16 %v3192, %v3190
      %v3307 = vpack.c.bf16 %v3207, %v3205
      %v3308 = vpack.c.bf16 %v3208, %v3206
      %v3309 = vpack.c.bf16 %v3223, %v3221
      %v3310 = vpack.c.bf16 %v3224, %v3222
      %v3311 = vpack.c.bf16 %v3239, %v3237
      %v3312 = vpack.c.bf16 %v3240, %v3238
      %v3313 = vpack.c.bf16 %v3173, %v3169
      %v3314 = vpack.c.bf16 %v3175, %v3171
      %v3315 = vpack.c.bf16 %v3255, %v3253
      %v3316 = vpack.c.bf16 %v3256, %v3254
      %v3317 = vpack.c.bf16 %v3271, %v3269
      %v3318 = vpack.c.bf16 %v3272, %v3270
      %v3319 = vpack.c.bf16 %v3287, %v3285
      %v3320 = vpack.c.bf16 %v3288, %v3286
      %v3321 = vpack.c.bf16 %v3303, %v3301
      %v3322 = vpack.c.bf16 %v3304, %v3302
      %v3323 = vld [vmem:[%s37] sm:$0xff]
      %3324 = vrot.lane.b32.xlu0 %v1295, 17
      %v3325 = vpop.permute.xlu0 %3324
      %3326 = vrot.lane.b32.xlu0 %v1296, 17
      %v3327 = vpop.permute.xlu0 %3326
      %v3328 = vsel %vm993, %v3325, %v3327
      %v3329 = vsel %vm993, %v3327, %v3325
      %v3330 = vsel %vm998, %v3329, 0.0
      %v3331 = vsel %vm999, %v3328, 0.0
      %3332 = vrot.lane.b32.xlu0 %v1295, 16
      %v3333 = vpop.permute.xlu0 %3332
      %3334 = vrot.lane.b32.xlu0 %v1296, 16
      %v3335 = vpop.permute.xlu0 %3334
      %v3336 = vsel %vm1006, %v3333, %v3335
      %v3337 = vsel %vm1006, %v3335, %v3333
      %v3338 = vsel %vm1011, %v3337, 0.0
      %v3339 = vsel %vm1012, %v3336, 0.0
      %3340 = vrot.lane.b32.xlu0 %v1295, 15
      %v3341 = vpop.permute.xlu0 %3340
      %3342 = vrot.lane.b32.xlu0 %v1296, 15
      %v3343 = vpop.permute.xlu0 %3342
      %v3344 = vsel %vm1019, %v3341, %v3343
      %v3345 = vsel %vm1019, %v3343, %v3341
      %v3346 = vsel %vm1024, %v3345, 0.0
      %v3347 = vsel %vm1025, %v3344, 0.0
      %3348 = vrot.lane.b32.xlu0 %v1295, 1
      %v3349 = vpop.permute.xlu0 %3348
      %3350 = vrot.lane.b32.xlu0 %v1296, 1
      %v3351 = vpop.permute.xlu0 %3350
      %v3352 = vsel %vm1032, %v3349, %v3351
      %v3353 = vsel %vm1032, %v3351, %v3349
      %v3354 = vsel %vm1037, %v3353, 0.0
      %v3355 = vsel %vm1038, %v3352, 0.0
      %v3356 = vsel %vm1050, %v1301, 0.0
      %v3357 = vsel %vm1051, %v1302, 0.0
      %3358 = vrot.lane.b32.xlu0 %v1295, 113
      %v3359 = vpop.permute.xlu0 %3358
      %3360 = vrot.lane.b32.xlu0 %v1296, 113
      %v3361 = vpop.permute.xlu0 %3360
      %v3362 = vsel %vm1058, %v3359, %v3361
      %v3363 = vsel %vm1058, %v3361, %v3359
      %v3364 = vsel %vm1063, %v3362, 0.0
      %v3365 = vsel %vm1064, %v3363, 0.0
      %3366 = vrot.lane.b32.xlu0 %v1295, 112
      %v3367 = vpop.permute.xlu0 %3366
      %3368 = vrot.lane.b32.xlu0 %v1296, 112
      %v3369 = vpop.permute.xlu0 %3368
      %v3370 = vsel %vm1071, %v3367, %v3369
      %v3371 = vsel %vm1071, %v3369, %v3367
      %v3372 = vsel %vm1076, %v3370, 0.0
      %v3373 = vsel %vm1077, %v3371, 0.0
      %3374 = vrot.lane.b32.xlu0 %v1295, 111
      %v3375 = vpop.permute.xlu0 %3374
      %3376 = vrot.lane.b32.xlu0 %v1296, 111
      %v3377 = vpop.permute.xlu0 %3376
      %v3378 = vsel %vm1084, %v3375, %v3377
      %v3379 = vsel %vm1084, %v3377, %v3375
      %v3380 = vsel %vm1089, %v3378, 0.0
      %v3381 = vsel %vm1090, %v3379, 0.0
      %v3382 = vpack.c.bf16 %v3338, %v3330
      %v3383 = vpack.c.bf16 %v3339, %v3331
      %v3384 = vpack.c.bf16 %v3354, %v3346
      %v3385 = vpack.c.bf16 %v3355, %v3347
      %v3386 = vpack.c.bf16 %v3356, %v1295
      %v3387 = vpack.c.bf16 %v3357, %v1296
      %v3388 = vpack.c.bf16 %v3372, %v3364
      %v3389 = vpack.c.bf16 %v3373, %v3365
      %v3390 = vpack.c.bf16 %v3380, %v3380
      %v3391 = vpack.c.bf16 %v3381, %v3381
      %v3392 = vld [vmem:[%s39] sm:$0xf]
      %v3394 = vsel %vm1110, %v3392, 0
      %v3397 = vsel %vm1114, %v3390, 0
      %v3400 = vsel %vm1114, %v3391, 0
      %3402 = vmatprep.subr.bf16.mxu0 0
      %3403 = vmatpush1.bf16.msra.mxu0 0
      %3404 = vmatprep.subr.bf16.mxu0 0
      %3405 = vmatpush1.bf16.msra.mxu0 0
      %3406 = vmatprep.subr.bf16.mxu0 0
      %3407 = vmatpush1.bf16.msra.mxu0 0
      %3408 = vmatprep.subr.bf16.mxu0 %v3400
      %3409 = vmatpush1.bf16.msra.mxu0 %v3397
      %3410 = vmatprep.subr.bf16.mxu0 %v3389
      %3411 = vmatpush1.bf16.msra.mxu0 %v3388
      %3412 = vmatprep.subr.bf16.mxu0 %v3387
      %3413 = vmatpush1.bf16.msra.mxu0 %v3386
      %3414 = vmatprep.subr.bf16.mxu0 %v3385
      %3415 = vmatpush1.bf16.msra.mxu0 %v3384
      %3416 = vmatprep.subr.bf16.mxu0 %v3383
      %3417 = vmatpush1.bf16.msra.mxu0 %v3382
      %3418 = vmatprep.subr.bf16.mxu0 0
      %3419 = vmatpush2.bf16.msra.mxu0 0
      %3420 = vmatprep.subr.bf16.mxu0 0
      %3421 = vmatpush2.bf16.msra.mxu0 0
      %3422 = vmatprep.subr.bf16.mxu0 0
      %3423 = vmatpush2.bf16.msra.mxu0 0
      %3424 = vmatprep.subr.bf16.mxu0 0
      %3425 = vmatpush2.bf16.msra.mxu0 0
      %3426 = vmatprep.subr.bf16.mxu0 0
      %3427 = vmatpush2.bf16.msra.mxu0 0
      %3428 = vmatprep.subr.bf16.mxu0 0
      %3429 = vmatpush2.bf16.msra.mxu0 0
      %3430 = vmatprep.subr.bf16.mxu0 0
      %3431 = vmatpush2.bf16.msra.mxu0 0
      %3432 = vmatprep.subr.bf16.mxu0 0
      %3433 = vmatpush2.bf16.msra.mxu0 0
      %3434 = vmatprep.mubr.bf16.mxu0 0
      %3435 = vmatmul.mubr.bf16.gmra.mxu0 %v3394
      %v3436 = vpop.f32.mrf.mxu0
      %v3437 = vadd.f32 0.0, %v3436
      %v3438 = vpop.f32.mrf.mxu0
      %v3439 = vadd.f32 0.0, %v3438
      %v3440 = vpop.f32.mrf.mxu0
      %v3441 = vpop.f32.mrf.mxu0
      %3442 = vdwg.mxu0
      %v3444 = vunpack.c.l.b16 %v3323
      %v3445 = vunpack.c.h.b16 %v3323
      %v3446 = vpack.c.b16 %v3444, %v3444
      %v3447 = vpack.c.b16 %v3445, %v3445
      %v3450 = vsel %vm1722, %v3447, 0
      %3452 = vmatprep.subr.bf16.mxu0 %v3320
      %3453 = vmatpush1.bf16.msra.mxu0 %v3319
      %3454 = vmatprep.subr.bf16.mxu0 %v3318
      %3455 = vmatpush1.bf16.msra.mxu0 %v3317
      %3456 = vmatprep.subr.bf16.mxu0 %v3316
      %3457 = vmatpush1.bf16.msra.mxu0 %v3315
      %3458 = vmatprep.subr.bf16.mxu0 %v3314
      %3459 = vmatpush1.bf16.msra.mxu0 %v3313
      %3460 = vmatprep.subr.bf16.mxu0 %v3312
      %3461 = vmatpush1.bf16.msra.mxu0 %v3311
      %3462 = vmatprep.subr.bf16.mxu0 %v3310
      %3463 = vmatpush1.bf16.msra.mxu0 %v3309
      %3464 = vmatprep.subr.bf16.mxu0 %v3308
      %3465 = vmatpush1.bf16.msra.mxu0 %v3307
      %3466 = vmatprep.subr.bf16.mxu0 %v3306
      %3467 = vmatpush1.bf16.msra.mxu0 %v3305
      %3468 = vmatprep.subr.bf16.mxu0 0
      %3469 = vmatpush2.bf16.msra.mxu0 0
      %3470 = vmatprep.subr.bf16.mxu0 0
      %3471 = vmatpush2.bf16.msra.mxu0 0
      %3472 = vmatprep.subr.bf16.mxu0 0
      %3473 = vmatpush2.bf16.msra.mxu0 0
      %3474 = vmatprep.subr.bf16.mxu0 0
      %3475 = vmatpush2.bf16.msra.mxu0 0
      %3476 = vmatprep.subr.bf16.mxu0 0
      %3477 = vmatpush2.bf16.msra.mxu0 0
      %3478 = vmatprep.subr.bf16.mxu0 0
      %3479 = vmatpush2.bf16.msra.mxu0 0
      %3480 = vmatprep.subr.bf16.mxu0 0
      %3481 = vmatpush2.bf16.msra.mxu0 0
      %3482 = vmatprep.subr.bf16.mxu0 %v3322
      %3483 = vmatpush2.bf16.msra.mxu0 %v3321
      %3484 = vmatprep.mubr.bf16.mxu0 %v3450
      %3485 = vmatmul.mubr.bf16.gmra.mxu0 %v3446
      %v3486 = vpop.f32.mrf.mxu0
      %v3487 = vadd.f32 %v3437, %v3486
      %v3488 = vpop.f32.mrf.mxu0
      %v3489 = vadd.f32 %v3439, %v3488
      %v3490 = vpop.f32.mrf.mxu0
      %v3491 = vpop.f32.mrf.mxu0
      %3492 = vdwg.mxu0
      %v3493 = vld [vmem:[%s41] sm:$0xff]
      %3495 = vset.pattern.permute.xlu0 0
      %3496 = vperm.xlu0 %3495, %v3493
      %v3497 = vpop.permute.xlu0 %3496
      %v3499 = vadd.f32 %v3487, %v3497
      %v3500 = vadd.f32 %v3489, %v3497
      %v3501 = vmax.f32 %v3499, 0.0
      %v3502 = vmax.f32 %v3500, 0.0
      %3503 = vrot.lane.b32.xlu0 %v3501, 17
      %v3504 = vpop.permute.xlu0 %3503
      %3505 = vrot.lane.b32.xlu0 %v3502, 17
      %v3506 = vpop.permute.xlu0 %3505
      %v3507 = vsel %vm993, %v3504, %v3506
      %v3508 = vsel %vm993, %v3506, %v3504
      %v3509 = vsel %vm998, %v3508, 0.0
      %v3510 = vsel %vm999, %v3507, 0.0
      %3511 = vrot.lane.b32.xlu0 %v3501, 16
      %v3512 = vpop.permute.xlu0 %3511
      %3513 = vrot.lane.b32.xlu0 %v3502, 16
      %v3514 = vpop.permute.xlu0 %3513
      %v3515 = vsel %vm1006, %v3512, %v3514
      %v3516 = vsel %vm1006, %v3514, %v3512
      %v3517 = vsel %vm1011, %v3516, 0.0
      %v3518 = vsel %vm1012, %v3515, 0.0
      %3519 = vrot.lane.b32.xlu0 %v3501, 15
      %v3520 = vpop.permute.xlu0 %3519
      %3521 = vrot.lane.b32.xlu0 %v3502, 15
      %v3522 = vpop.permute.xlu0 %3521
      %v3523 = vsel %vm1019, %v3520, %v3522
      %v3524 = vsel %vm1019, %v3522, %v3520
      %v3525 = vsel %vm1024, %v3524, 0.0
      %v3526 = vsel %vm1025, %v3523, 0.0
      %3527 = vrot.lane.b32.xlu0 %v3501, 1
      %v3528 = vpop.permute.xlu0 %3527
      %3529 = vrot.lane.b32.xlu0 %v3502, 1
      %v3530 = vpop.permute.xlu0 %3529
      %v3531 = vsel %vm1032, %v3528, %v3530
      %v3532 = vsel %vm1032, %v3530, %v3528
      %v3533 = vsel %vm1037, %v3532, 0.0
      %v3534 = vsel %vm1038, %v3531, 0.0
      %3535 = vrot.lane.b32.xlu0 %v3501, 127
      %v3536 = vpop.permute.xlu0 %3535
      %3537 = vrot.lane.b32.xlu0 %v3502, 127
      %v3538 = vpop.permute.xlu0 %3537
      %v3539 = vsel %vm1045, %v3536, %v3538
      %v3540 = vsel %vm1045, %v3538, %v3536
      %v3541 = vsel %vm1050, %v3539, 0.0
      %v3542 = vsel %vm1051, %v3540, 0.0
      %3543 = vrot.lane.b32.xlu0 %v3501, 113
      %v3544 = vpop.permute.xlu0 %3543
      %3545 = vrot.lane.b32.xlu0 %v3502, 113
      %v3546 = vpop.permute.xlu0 %3545
      %v3547 = vsel %vm1058, %v3544, %v3546
      %v3548 = vsel %vm1058, %v3546, %v3544
      %v3549 = vsel %vm1063, %v3547, 0.0
      %v3550 = vsel %vm1064, %v3548, 0.0
      %3551 = vrot.lane.b32.xlu0 %v3501, 112
      %v3552 = vpop.permute.xlu0 %3551
      %3553 = vrot.lane.b32.xlu0 %v3502, 112
      %v3554 = vpop.permute.xlu0 %3553
      %v3555 = vsel %vm1071, %v3552, %v3554
      %v3556 = vsel %vm1071, %v3554, %v3552
      %v3557 = vsel %vm1076, %v3555, 0.0
      %v3558 = vsel %vm1077, %v3556, 0.0
      %3559 = vrot.lane.b32.xlu0 %v3501, 111
      %v3560 = vpop.permute.xlu0 %3559
      %3561 = vrot.lane.b32.xlu0 %v3502, 111
      %v3562 = vpop.permute.xlu0 %3561
      %v3563 = vsel %vm1084, %v3560, %v3562
      %v3564 = vsel %vm1084, %v3562, %v3560
      %v3565 = vsel %vm1089, %v3563, 0.0
      %v3566 = vsel %vm1090, %v3564, 0.0
      %v3567 = vpack.c.bf16 %v3517, %v3509
      %v3568 = vpack.c.bf16 %v3518, %v3510
      %v3569 = vpack.c.bf16 %v3533, %v3525
      %v3570 = vpack.c.bf16 %v3534, %v3526
      %v3571 = vpack.c.bf16 %v3541, %v3501
      %v3572 = vpack.c.bf16 %v3542, %v3502
      %v3573 = vpack.c.bf16 %v3557, %v3549
      %v3574 = vpack.c.bf16 %v3558, %v3550
      %v3575 = vpack.c.bf16 %v3565, %v3565
      %v3576 = vpack.c.bf16 %v3566, %v3566
      %v3577 = vld [vmem:[%s43] sm:$0xf]
      %v3578 = vld [vmem:[%s45] sm:$0xff]
      %3580 = vset.pattern.permute.xlu0 0
      %3581 = vperm.xlu0 %3580, %v3578
      %v3582 = vpop.permute.xlu0 %3581
      %v3585 = vsel %vm1110, %v3577, 0
      %v3588 = vsel %vm1114, %v3575, 0
      %v3591 = vsel %vm1114, %v3576, 0
      %3593 = vmatprep.subr.bf16.mxu0 0
      %3594 = vmatpush1.bf16.msra.mxu0 0
      %3595 = vmatprep.subr.bf16.mxu0 0
      %3596 = vmatpush1.bf16.msra.mxu0 0
      %3597 = vmatprep.subr.bf16.mxu0 0
      %3598 = vmatpush1.bf16.msra.mxu0 0
      %3599 = vmatprep.subr.bf16.mxu0 %v3591
      %3600 = vmatpush1.bf16.msra.mxu0 %v3588
      %3601 = vmatprep.subr.bf16.mxu0 %v3574
      %3602 = vmatpush1.bf16.msra.mxu0 %v3573
      %3603 = vmatprep.subr.bf16.mxu0 %v3572
      %3604 = vmatpush1.bf16.msra.mxu0 %v3571
      %3605 = vmatprep.subr.bf16.mxu0 %v3570
      %3606 = vmatpush1.bf16.msra.mxu0 %v3569
      %3607 = vmatprep.subr.bf16.mxu0 %v3568
      %3608 = vmatpush1.bf16.msra.mxu0 %v3567
      %3609 = vmatprep.subr.bf16.mxu0 0
      %3610 = vmatpush2.bf16.msra.mxu0 0
      %3611 = vmatprep.subr.bf16.mxu0 0
      %3612 = vmatpush2.bf16.msra.mxu0 0
      %3613 = vmatprep.subr.bf16.mxu0 0
      %3614 = vmatpush2.bf16.msra.mxu0 0
      %3615 = vmatprep.subr.bf16.mxu0 0
      %3616 = vmatpush2.bf16.msra.mxu0 0
      %3617 = vmatprep.subr.bf16.mxu0 0
      %3618 = vmatpush2.bf16.msra.mxu0 0
      %3619 = vmatprep.subr.bf16.mxu0 0
      %3620 = vmatpush2.bf16.msra.mxu0 0
      %3621 = vmatprep.subr.bf16.mxu0 0
      %3622 = vmatpush2.bf16.msra.mxu0 0
      %3623 = vmatprep.subr.bf16.mxu0 0
      %3624 = vmatpush2.bf16.msra.mxu0 0
      %3625 = vmatprep.mubr.bf16.mxu0 0
      %3626 = vmatmul.mubr.bf16.gmra.mxu0 %v3585
      %v3627 = vpop.f32.mrf.mxu0
      %v3628 = vadd.f32 %v3582, %v3627
      %v3629 = vpop.f32.mrf.mxu0
      %v3630 = vadd.f32 %v3582, %v3629
      %v3631 = vpop.f32.mrf.mxu0
      %v3632 = vpop.f32.mrf.mxu0
      %3633 = vdwg.mxu0
      %v3634 = vmax.f32 %v3628, 0.0
      %v3635 = vmax.f32 %v3630, 0.0
      %3636 = vrot.lane.b32.xlu0 %v3634, 17
      %v3637 = vpop.permute.xlu0 %3636
      %3638 = vrot.lane.b32.xlu0 %v3635, 17
      %v3639 = vpop.permute.xlu0 %3638
      %v3640 = vsel %vm993, %v3637, %v3639
      %v3641 = vsel %vm993, %v3639, %v3637
      %v3642 = vsel %vm998, %v3641, 0.0
      %v3643 = vsel %vm999, %v3640, 0.0
      %3644 = vrot.lane.b32.xlu0 %v3634, 16
      %v3645 = vpop.permute.xlu0 %3644
      %3646 = vrot.lane.b32.xlu0 %v3635, 16
      %v3647 = vpop.permute.xlu0 %3646
      %v3648 = vsel %vm1006, %v3645, %v3647
      %v3649 = vsel %vm1006, %v3647, %v3645
      %v3650 = vsel %vm1011, %v3649, 0.0
      %v3651 = vsel %vm1012, %v3648, 0.0
      %3652 = vrot.lane.b32.xlu0 %v3634, 15
      %v3653 = vpop.permute.xlu0 %3652
      %3654 = vrot.lane.b32.xlu0 %v3635, 15
      %v3655 = vpop.permute.xlu0 %3654
      %v3656 = vsel %vm1019, %v3653, %v3655
      %v3657 = vsel %vm1019, %v3655, %v3653
      %v3658 = vsel %vm1024, %v3657, 0.0
      %v3659 = vsel %vm1025, %v3656, 0.0
      %3660 = vrot.lane.b32.xlu0 %v3634, 1
      %v3661 = vpop.permute.xlu0 %3660
      %3662 = vrot.lane.b32.xlu0 %v3635, 1
      %v3663 = vpop.permute.xlu0 %3662
      %v3664 = vsel %vm1032, %v3661, %v3663
      %v3665 = vsel %vm1032, %v3663, %v3661
      %v3666 = vsel %vm1037, %v3665, 0.0
      %v3667 = vsel %vm1038, %v3664, 0.0
      %3668 = vrot.lane.b32.xlu0 %v3634, 127
      %v3669 = vpop.permute.xlu0 %3668
      %3670 = vrot.lane.b32.xlu0 %v3635, 127
      %v3671 = vpop.permute.xlu0 %3670
      %v3672 = vsel %vm1045, %v3669, %v3671
      %v3673 = vsel %vm1045, %v3671, %v3669
      %v3674 = vsel %vm1050, %v3672, 0.0
      %v3675 = vsel %vm1051, %v3673, 0.0
      %3676 = vrot.lane.b32.xlu0 %v3634, 113
      %v3677 = vpop.permute.xlu0 %3676
      %3678 = vrot.lane.b32.xlu0 %v3635, 113
      %v3679 = vpop.permute.xlu0 %3678
      %v3680 = vsel %vm1058, %v3677, %v3679
      %v3681 = vsel %vm1058, %v3679, %v3677
      %v3682 = vsel %vm1063, %v3680, 0.0
      %v3683 = vsel %vm1064, %v3681, 0.0
      %3684 = vrot.lane.b32.xlu0 %v3634, 112
      %v3685 = vpop.permute.xlu0 %3684
      %3686 = vrot.lane.b32.xlu0 %v3635, 112
      %v3687 = vpop.permute.xlu0 %3686
      %v3688 = vsel %vm1071, %v3685, %v3687
      %v3689 = vsel %vm1071, %v3687, %v3685
      %v3690 = vsel %vm1076, %v3688, 0.0
      %v3691 = vsel %vm1077, %v3689, 0.0
      %3692 = vrot.lane.b32.xlu0 %v3634, 111
      %v3693 = vpop.permute.xlu0 %3692
      %3694 = vrot.lane.b32.xlu0 %v3635, 111
      %v3695 = vpop.permute.xlu0 %3694
      %v3696 = vsel %vm1084, %v3693, %v3695
      %v3697 = vsel %vm1084, %v3695, %v3693
      %v3698 = vsel %vm1089, %v3696, 0.0
      %v3699 = vsel %vm1090, %v3697, 0.0
      %v3700 = vpack.c.bf16 %v3650, %v3642
      %v3701 = vpack.c.bf16 %v3651, %v3643
      %v3702 = vpack.c.bf16 %v3666, %v3658
      %v3703 = vpack.c.bf16 %v3667, %v3659
      %v3704 = vpack.c.bf16 %v3674, %v3634
      %v3705 = vpack.c.bf16 %v3675, %v3635
      %v3706 = vpack.c.bf16 %v3690, %v3682
      %v3707 = vpack.c.bf16 %v3691, %v3683
      %v3708 = vpack.c.bf16 %v3698, %v3698
      %v3709 = vpack.c.bf16 %v3699, %v3699
      %v3710 = vld [vmem:[%s47] sm:$0xf]
      %v3711 = vld [vmem:[%s49] sm:$0xff]
      %3713 = vset.pattern.permute.xlu0 0
      %3714 = vperm.xlu0 %3713, %v3711
      %v3715 = vpop.permute.xlu0 %3714
      %v3718 = vsel %vm1110, %v3710, 0
      %v3721 = vsel %vm1114, %v3708, 0
      %v3724 = vsel %vm1114, %v3709, 0
      %3726 = vmatprep.subr.bf16.mxu0 0
      %3727 = vmatpush1.bf16.msra.mxu0 0
      %3728 = vmatprep.subr.bf16.mxu0 0
      %3729 = vmatpush1.bf16.msra.mxu0 0
      %3730 = vmatprep.subr.bf16.mxu0 0
      %3731 = vmatpush1.bf16.msra.mxu0 0
      %3732 = vmatprep.subr.bf16.mxu0 %v3724
      %3733 = vmatpush1.bf16.msra.mxu0 %v3721
      %3734 = vmatprep.subr.bf16.mxu0 %v3707
      %3735 = vmatpush1.bf16.msra.mxu0 %v3706
      %3736 = vmatprep.subr.bf16.mxu0 %v3705
      %3737 = vmatpush1.bf16.msra.mxu0 %v3704
      %3738 = vmatprep.subr.bf16.mxu0 %v3703
      %3739 = vmatpush1.bf16.msra.mxu0 %v3702
      %3740 = vmatprep.subr.bf16.mxu0 %v3701
      %3741 = vmatpush1.bf16.msra.mxu0 %v3700
      %3742 = vmatprep.subr.bf16.mxu0 0
      %3743 = vmatpush2.bf16.msra.mxu0 0
      %3744 = vmatprep.subr.bf16.mxu0 0
      %3745 = vmatpush2.bf16.msra.mxu0 0
      %3746 = vmatprep.subr.bf16.mxu0 0
      %3747 = vmatpush2.bf16.msra.mxu0 0
      %3748 = vmatprep.subr.bf16.mxu0 0
      %3749 = vmatpush2.bf16.msra.mxu0 0
      %3750 = vmatprep.subr.bf16.mxu0 0
      %3751 = vmatpush2.bf16.msra.mxu0 0
      %3752 = vmatprep.subr.bf16.mxu0 0
      %3753 = vmatpush2.bf16.msra.mxu0 0
      %3754 = vmatprep.subr.bf16.mxu0 0
      %3755 = vmatpush2.bf16.msra.mxu0 0
      %3756 = vmatprep.subr.bf16.mxu0 0
      %3757 = vmatpush2.bf16.msra.mxu0 0
      %3758 = vmatprep.mubr.bf16.mxu0 0
      %3759 = vmatmul.mubr.bf16.gmra.mxu0 %v3718
      %v3760 = vpop.f32.mrf.mxu0
      %v3761 = vadd.f32 %v3715, %v3760
      %v3762 = vpop.f32.mrf.mxu0
      %v3763 = vadd.f32 %v3715, %v3762
      %v3764 = vpop.f32.mrf.mxu0
      %v3765 = vpop.f32.mrf.mxu0
      %3766 = vdwg.mxu0
      %3767 = vst [vmem:[%s902] sm:$0xff] %v3761
      %3768 = vst [vmem:[%s902 + $0x8] sm:$0xff] %v3763
      %p3769 = scmp.lt.s32.totalorder %s70, 1
      %s3770 = scalar_select %p3769, %s70, 1
      %s3771 = smul.addr %s3770, 2
      %s3772 = smul.addr %s3771, 8
      %s3773 = scalar_lea.vmem %s59, %s3772
      // Predicated region
      $region137: #{unet_forward.1} parent=135 // pred_check
        %p3774 = pneg %p702
      $region138: #{unet_forward.1} parent=135 // pred_check_branch
        %3776 = sbr.rel (%p3774) target = $region140
      $region139: #{unet_forward.1} parent=135 // pred_region
        _
      $region140: #{unet_forward.1} parent=135 // pred_fallthru
        _
    $region136: #{unet_forward.1} parent=5 // pred_fallthru
      _
    %p3777 = scmp.le.s32.totalorder 2, %s65
    // Predicated region
    $region141: #{unet_forward.1} parent=5 // pred_check
      %p3778 = pneg %p3777
    $region142: #{unet_forward.1} parent=5 // pred_check_branch
      %3780 = sbr.rel (%p3778) target = $region144
    $region143: #{unet_forward.1} parent=5 // pred_region
      %s3781 = ssub.s32 %s65, 2
      // Predicated region
      $region145: #{unet_forward.1} parent=143 // pred_check
        %p3782 = pneg %p708
      $region146: #{unet_forward.1} parent=143 // pred_check_branch
        %3784 = sbr.rel (%p3782) target = $region148
      $region147: #{unet_forward.1} parent=143 // pred_region
        %p3785 = scmp.lt.s32.totalorder %s71, 1
        %s3786 = scalar_select %p3785, %s71, 1
        %s3787 = smul.addr %s3786, 2
        %s3788 = smul.addr %s3787, 8
        %s3789 = scalar_lea.vmem %s59, %s3788
      $region148: #{unet_forward.1} parent=143 // pred_fallthru
        _
    $region144: #{unet_forward.1} parent=5 // pred_fallthru
      _
  $region6: #{unet_forward.1} parent=0 // loop_footer
    %s69 = sadd.s32 1, %s65
  $region7: #{unet_forward.1} parent=0 // loop_footer_branch
    %64 = sbr.rel target = $region3
  $region8: #{unet_forward.1} parent=0 // loop_exit
    _

</llo_original>
